<compile_context>
chip_gen: v7x
topology: tpu7x:2x2x1
jax: 0.10.0
libtpu: 0.0.40
codegen_flags: <defaults>
</compile_context>

<pallas_src>
import functools
import math

import numpy as np
import jax
import jax.numpy as jnp
from jax import lax
from jax.experimental import pallas as pl
from jax.experimental.pallas import tpu as pltpu


# ----------------------------------------------------------------------------
# Parameter / buffer construction (matches the PyTorch __init__ exactly)
# ----------------------------------------------------------------------------
def make_positional_encoding(max_len: int, d_model: int, dtype=jnp.float32) -> jnp.ndarray:
    """pe[pos, 2i]   = sin(pos * exp(2i * -ln(10000)/d_model))
       pe[pos, 2i+1] = cos(pos * exp(2i * -ln(10000)/d_model))"""
    position = jnp.arange(0, max_len, dtype=jnp.float32)[:, None]            # (L, 1)
    div_term = jnp.exp(
        jnp.arange(0, d_model, 2, dtype=jnp.float32)
        * (-math.log(10000.0) / d_model)
    )                                                                         # (D/2,)
    pe = jnp.zeros((max_len, d_model), dtype=jnp.float32)
    pe = pe.at[:, 0::2].set(jnp.sin(position * div_term))
    pe = pe.at[:, 1::2].set(jnp.cos(position * div_term))
    return pe.astype(dtype)                                                   # (L, D)


# ----------------------------------------------------------------------------
# Counter-based hash RNG: 6-VPU-op xorshift-multiply mixer (tiling invariant,
# plain integer jnp ops -> lowers on TPU and in interpret mode).
# ----------------------------------------------------------------------------
_GOLDEN = 0x9E3779B9
_MIX_A = 0x9E3779B1
_MIX_B = 0x85EBCA77

# Sizing knobs.
_TINY_BYTES = 1 << 20            # below this, skip pallas_call entirely
_FLAT_ROW_LIMIT = 256 << 10      # flatten (S, D) -> S*D lane-dense rows up to 256 KiB
_BLOCK_TARGET = 4 << 20          # ~4 MiB x blocks (overhead <~6% of step time)
_VMEM_LIMIT = 48 << 20           # <= v7x's 64 MiB physical VMEM, << v5e/v6e's 128 MiB


def _mix32(x):
    """Cheap 32-bit mixer (mul / xorshift / mul / xorshift)."""
    x = x * jnp.uint32(_MIX_A)
    x = x ^ (x >> jnp.uint32(16))
    x = x * jnp.uint32(_MIX_B)
    x = x ^ (x >> jnp.uint32(13))
    return x


def _hash_keep_mask(shape, threshold: int, seed32: int):
    """Pure-XLA keep mask identical to the in-kernel hash (global flat index)."""
    n = int(np.prod(shape))
    idx = jnp.arange(n, dtype=jnp.uint32).reshape(shape)
    bits = _mix32(idx + jnp.uint32(seed32) * jnp.uint32(_GOLDEN))
    return bits >= jnp.uint32(threshold)


# ----------------------------------------------------------------------------
# Pallas kernel: one 2-D tile of  y = dropout(x + pe)
# ----------------------------------------------------------------------------
def _pe_dropout_kernel(seed_ref, x_ref, pe_ref, o_ref, *,
                       threshold: int, inv_keep: float,
                       row_stride: int, base_fn):
    # x_ref : (rows, cols) tile; pe_ref : (rows, cols) or (1, cols) tile (broadcast add)
    y = x_ref[...] + pe_ref[...]

    if threshold > 0:                               # trace-time: dropout enabled
        rows, cols = x_ref.shape
        # One scalar salt per tile: global element offset of (0, 0) plus the seed
        # (all on the scalar unit -> free relative to the memory-bound stream).
        seed = seed_ref[0].astype(jnp.uint32)
        salt = base_fn().astype(jnp.uint32) + seed * jnp.uint32(_GOLDEN)
        r = lax.broadcasted_iota(jnp.int32, (rows, cols), 0).astype(jnp.uint32)
        c = lax.broadcasted_iota(jnp.int32, (rows, cols), 1).astype(jnp.uint32)
        # Global flat index (mod 2**32) of each element of the original (B, S, D)
        # tensor -> the dropout mask is independent of the tiling.
        bits = _mix32(r * jnp.uint32(row_stride) + c + salt)
        keep = bits >= jnp.uint32(threshold)        # P(drop) = threshold / 2^32
        y = jnp.where(keep, y * inv_keep, 0.0)

    o_ref[...] = y.astype(o_ref.dtype)


def _choose_seq_tile(S: int, D: int, itemsize: int, target_bytes: int):
    """Rows per sequence tile: multiple of 8 (partial last tile is masked by Pallas),
    sized to ~target_bytes, capped at S. Returns None when S < 8 (caller slices pe)."""
    max_rows = max(8, ((target_bytes // max(1, D * itemsize)) // 8) * 8)
    if S % 8 == 0:
        return min(S, max_rows)
    if S >= 8:
        return min((S // 8) * 8, max_rows)
    return None


# ----------------------------------------------------------------------------
# Wrapper: PositionalEncoding.forward
# ----------------------------------------------------------------------------
def positional_encoding_forward(
    x: jnp.ndarray,
    pe: jnp.ndarray,
    *,
    p_drop: float = 0.1,
    training: bool = True,
    seed: int = 0,
) -> jnp.ndarray:
    """y = dropout(x + pe[:S])   with x: (B, S, D), pe: (max_len, D)."""
    B, S, D = x.shape
    assert pe.ndim == 2 and pe.shape[0] >= S and pe.shape[1] == D

    # Eval mode / p == 0: plain XLA broadcast-add (HBM roofline, fuses with neighbours).
    if (not training) or p_drop <= 0.0:
        return (x + pe[:S][None, :, :]).astype(x.dtype)

    p = float(p_drop)
    if p >= 1.0:
        return jnp.zeros_like(x)

    # drop iff bits < threshold; clamp so p ~ 1.0 can't wrap uint32 to 0.
    threshold = min(int(round(p * (1 << 32))), (1 << 32) - 1)
    inv_keep = 1.0 / (1.0 - p)
    seed32 = int(seed) & 0xFFFFFFFF
    seed_i32 = seed32 - (1 << 32) if seed32 >= (1 << 31) else seed32
    seed_arr = jnp.asarray([seed_i32], dtype=jnp.int32)

    itemsize = jnp.dtype(x.dtype).itemsize
    total_bytes = B * S * D * itemsize
    row_bytes = S * D * itemsize

    # --- Tiny inputs: pallas_call setup cost dwarfs the work; identical hash in XLA. ---
    if total_bytes <= _TINY_BYTES:
        y = x + pe[:S][None, :, :]
        keep = _hash_keep_mask((B, S, D), threshold, seed32)
        return jnp.where(keep, y * inv_keep, 0.0).astype(x.dtype)

    cparams = pltpu.CompilerParams(
        dimension_semantics=("parallel", "parallel"),
        vmem_limit_bytes=_VMEM_LIMIT)

    if row_bytes <= _FLAT_ROW_LIMIT:
        # ---- lane-dense "flat" path: one row per batch element, last dim = S*D ----
        # (avoids masked partial stores when d_model < 128)
        W = S * D
        x2 = x.reshape(B, W)
        # pe must be presented lane-dense as (1, S*D). Free reshape when S == max_len;
        # otherwise a <=256 KiB slice copy (small relative to the x stream here).
        pe2 = (pe if S == pe.shape[0] else pe[:S]).reshape(1, W)

        rows_target = max(1, _BLOCK_TARGET // row_bytes)
        if B <= rows_target:
            tB, nB = B, 1
        else:
            tB = max(8, (rows_target // 8) * 8)
            nB = pl.cdiv(B, tB)
        # v7x has 2 TensorCores sharded over parallel grid axes: make sure the grid
        # has >= 2 steps when we can split the lane axis into 128-multiples.
        if nB == 1 and W % 256 == 0:
            nW, tW = 2, W // 2
        else:
            nW, tW = 1, W

        base_fn = lambda tB=tB, W=W, tW=tW: (
            pl.program_id(0) * (tB * W) + pl.program_id(1) * tW)
        kernel = functools.partial(
            _pe_dropout_kernel, threshold=threshold, inv_keep=inv_keep,
            row_stride=W, base_fn=base_fn)

        out2 = pl.pallas_call(
            kernel,
            out_shape=jax.ShapeDtypeStruct((B, W), x.dtype),
            grid_spec=pltpu.PrefetchScalarGridSpec(
                num_scalar_prefetch=1,                              # seed -> SMEM
                grid=(nB, nW),
                in_specs=[
                    pl.BlockSpec((tB, tW), lambda i, j, _s: (i, j)),   # x rows
                    pl.BlockSpec((1, tW), lambda i, j, _s: (0, j)),    # pe row (resident)
                ],
                out_specs=pl.BlockSpec((tB, tW), lambda i, j, _s: (i, j)),
            ),
            compiler_params=cparams,
        )(seed_arr, x2, pe2)
        return out2.reshape(B, S, D)

    # ---- sequence-tiled path: x stays 3-D; full pe passed through (no pe[:S] copy) ----
    tS = _choose_seq_tile(S, D, itemsize, _BLOCK_TARGET)
    pe_in = pe
    if tS is None:
        # S < 8 with a huge d_model: fall back to a tiny pe slice so blocks equal full dims.
        pe_in = pe[:S]
        tS = S
    elif B == 1 and tS >= S and S >= 16:
        # v7x: guarantee >= 2 parallel grid steps so both TensorCores get work.
        tS = max(8, ((S // 2 + 7) // 8) * 8)
    n_s = pl.cdiv(S, tS)

    base_fn = lambda S=S, tS=tS, D=D: (
        (pl.program_id(1) * S + pl.program_id(0) * tS) * D)
    kernel = functools.partial(
        _pe_dropout_kernel, threshold=threshold, inv_keep=inv_keep,
        row_stride=D, base_fn=base_fn)

    out = pl.pallas_call(
        kernel,
        out_shape=jax.ShapeDtypeStruct((B, S, D), x.dtype),
        grid_spec=pltpu.PrefetchScalarGridSpec(
            num_scalar_prefetch=1,
            grid=(n_s, B),        # s OUTER, b inner -> pe tile stays resident per s-tile
            in_specs=[
                pl.BlockSpec((None, tS, D), lambda s, b, _sd: (b, s, 0)),  # x (batch squeezed)
                pl.BlockSpec((tS, D), lambda s, b, _sd: (s, 0)),           # full pe, row-indexed
            ],
            out_specs=pl.BlockSpec((None, tS, D), lambda s, b, _sd: (b, s, 0)),
        ),
        compiler_params=cparams,
    )(seed_arr, x, pe_in)
    return out


# ----------------------------------------------------------------------------
# Pure-JAX reference reproducing the kernel's hash-based dropout exactly
# ----------------------------------------------------------------------------
def _reference_forward(x, pe, p, seed):
    B, S, D = x.shape
    y = x.astype(jnp.float32) + pe[:S].astype(jnp.float32)[None, :, :]
    threshold = min(int(round(p * (1 << 32))), (1 << 32) - 1)
    keep = _hash_keep_mask((B, S, D), threshold, int(seed) & 0xFFFFFFFF)
    return jnp.where(keep, y * (1.0 / (1.0 - p)), 0.0).astype(x.dtype)


# ----------------------------------------------------------------------------
if __name__ == "__main__":
    P_DROP = 0.1

    # 1) Canonical small shape from the module (batch=2, seq=8, d_model=32):
    #    exercises the tiny-input XLA fallback + eval mode.
    B, S, D = 2, 8, 32
    pe_small = make_positional_encoding(64, D)
    x_small = jax.random.normal(jax.random.PRNGKey(0), (B, S, D), dtype=jnp.float32)

    y_train = positional_encoding_forward(x_small, pe_small, p_drop=P_DROP, training=True, seed=0)
    jax.block_until_ready(y_train)
    assert y_train.shape == x_small.shape and y_train.dtype == x_small.dtype
    assert jnp.allclose(y_train, _reference_forward(x_small, pe_small, P_DROP, 0),
                        atol=1e-5, rtol=1e-5), "tiny-path mismatch"

    y_eval = positional_encoding_forward(x_small, pe_small, p_drop=P_DROP, training=False)
    jax.block_until_ready(y_eval)
    assert jnp.allclose(y_eval, x_small + pe_small[:S][None], atol=1e-5, rtol=1e-5), \
        "eval-mode mismatch"

    # 2) Flat (lane-dense) Pallas path: small d_model, many batch rows; exercises the
    #    lane split that keeps both v7x TensorCores busy.
    Bf, Sf, Df = 96, 64, 64
    pe_f = make_positional_encoding(80, Df)
    x_f = jax.random.normal(jax.random.PRNGKey(1), (Bf, Sf, Df), dtype=jnp.float32)
    y_f = positional_encoding_forward(x_f, pe_f, p_drop=P_DROP, training=True, seed=3)
    jax.block_until_ready(y_f)
    assert jnp.allclose(y_f, _reference_forward(x_f, pe_f, P_DROP, 3),
                        atol=1e-5, rtol=1e-5), "flat-path mismatch"

    # 3) Sequence-tiled Pallas path: large rows, S NOT a multiple of the tile ->
    #    partial (masked) last blocks, full pe buffer passed without slicing (max_len > S).
    Bs, Ss, Ds = 2, 1545, 1024
    pe_s = make_positional_encoding(1600, Ds)
    x_s = jax.random.normal(jax.random.PRNGKey(2), (Bs, Ss, Ds), dtype=jnp.float32)
    y_s = positional_encoding_forward(x_s, pe_s, p_drop=P_DROP, training=True, seed=7)
    jax.block_until_ready(y_s)
    assert jnp.allclose(y_s, _reference_forward(x_s, pe_s, P_DROP, 7),
                        atol=1e-5, rtol=1e-5), "seq-tiled-path mismatch"

    print("KERNEL_OK")
</pallas_src>

<mosaic_0001>
module attributes {stable_mosaic.version = 11 : i64} {
  func.func @_pe_dropout_kernel(%arg0: i32, %arg1: i32, %arg2: memref<1xi32, #tpu.memory_space<smem>>, %arg3: memref<96x2048xf32, #tpu.memory_space<vmem>>, %arg4: memref<1x2048xf32, #tpu.memory_space<vmem>>, %arg5: memref<96x2048xf32, #tpu.memory_space<vmem>>) attributes {dimension_semantics = [#tpu.dimension_semantics<parallel>, #tpu.dimension_semantics<parallel>], iteration_bounds = array<i64: 1, 2>, scalar_prefetch = 1 : i64, scratch_operands = 0 : i64, tpu.core_type = #tpu.core_type<tc>, window_params = [{transform_indices = @transform_0, window_bounds = array<i64: 96, 2048>}, {transform_indices = @transform_1, window_bounds = array<i64: 1, 2048>}, {transform_indices = @transform_2, window_bounds = array<i64: 96, 2048>}]} {
    %c0 = arith.constant 0 : index
    %c0_0 = arith.constant 0 : index
    %0 = vector.load %arg3[%c0, %c0_0] : memref<96x2048xf32, #tpu.memory_space<vmem>>, vector<96x2048xf32>
    %c0_1 = arith.constant 0 : index
    %c0_2 = arith.constant 0 : index
    %1 = vector.load %arg4[%c0_1, %c0_2] : memref<1x2048xf32, #tpu.memory_space<vmem>>, vector<1x2048xf32>
    %2 = vector.broadcast %1 : vector<1x2048xf32> to vector<96x2048xf32>
    %3 = arith.addf %0, %2 : vector<96x2048xf32>
    %c0_3 = arith.constant 0 : index
    %4 = memref.load %arg2[%c0_3] : memref<1xi32, #tpu.memory_space<smem>>
    %c393216_i32 = arith.constant 393216 : i32
    %5 = arith.muli %arg0, %c393216_i32 : i32
    %c2048_i32 = arith.constant 2048 : i32
    %6 = arith.muli %arg1, %c2048_i32 : i32
    %7 = arith.addi %5, %6 : i32
    %c-1640531527_i32 = arith.constant -1640531527 : i32
    %8 = arith.muli %4, %c-1640531527_i32 : i32
    %9 = arith.addi %7, %8 : i32
    %10 = tpu.iota {dimensions = array<i32: 0>} : vector<96x2048xi32>
    %11 = tpu.iota {dimensions = array<i32: 1>} : vector<96x2048xi32>
    %c4096_i32 = arith.constant 4096 : i32
    %12 = vector.broadcast %c4096_i32 : i32 to vector<96x2048xi32>
    %13 = arith.muli %10, %12 : vector<96x2048xi32>
    %14 = arith.addi %13, %11 : vector<96x2048xi32>
    %15 = vector.broadcast %9 : i32 to vector<96x2048xi32>
    %16 = arith.addi %14, %15 : vector<96x2048xi32>
    %c-1640531535_i32 = arith.constant -1640531535 : i32
    %17 = vector.broadcast %c-1640531535_i32 : i32 to vector<96x2048xi32>
    %18 = arith.muli %16, %17 : vector<96x2048xi32>
    %c16_i32 = arith.constant 16 : i32
    %19 = vector.broadcast %c16_i32 : i32 to vector<96x2048xi32>
    %20 = arith.shrui %18, %19 : vector<96x2048xi32>
    %21 = arith.xori %18, %20 : vector<96x2048xi32>
    %c-2048144777_i32 = arith.constant -2048144777 : i32
    %22 = vector.broadcast %c-2048144777_i32 : i32 to vector<96x2048xi32>
    %23 = arith.muli %21, %22 : vector<96x2048xi32>
    %c13_i32 = arith.constant 13 : i32
    %24 = vector.broadcast %c13_i32 : i32 to vector<96x2048xi32>
    %25 = arith.shrui %23, %24 : vector<96x2048xi32>
    %26 = arith.xori %23, %25 : vector<96x2048xi32>
    %c429496730_i32 = arith.constant 429496730 : i32
    %27 = vector.broadcast %c429496730_i32 : i32 to vector<96x2048xi32>
    %28 = arith.cmpi uge, %26, %27 : vector<96x2048xi32>
    %cst = arith.constant 1.11111116 : f32
    %29 = vector.broadcast %cst : f32 to vector<96x2048xf32>
    %30 = arith.mulf %3, %29 : vector<96x2048xf32>
    %cst_4 = arith.constant 0.000000e+00 : f32
    %31 = vector.broadcast %cst_4 : f32 to vector<96x2048xf32>
    %32 = arith.select %28, %30, %31 : vector<96x2048xi1>, vector<96x2048xf32>
    %c0_5 = arith.constant 0 : index
    %c0_6 = arith.constant 0 : index
    %33 = vector.load %arg5[%c0_5, %c0_6] : memref<96x2048xf32, #tpu.memory_space<vmem>>, vector<96x2048xf32>
    tpu.vector_store %arg5[%c0_5, %c0_6], %32 {strides = array<i32>} : memref<96x2048xf32, #tpu.memory_space<vmem>>, vector<96x2048xf32>,
    return
  }
  func.func @transform_0(%arg0: i32, %arg1: i32, %arg2: memref<1xi32, #tpu.memory_space<smem>>) -> (i32, i32) {
    %c0_i32 = arith.constant 0 : i32
    return %arg0, %arg1 : i32, i32
  }
  func.func @transform_1(%arg0: i32, %arg1: i32, %arg2: memref<1xi32, #tpu.memory_space<smem>>) -> (i32, i32) {
    %c0_i32 = arith.constant 0 : i32
    %c0_i32_0 = arith.constant 0 : i32
    return %c0_i32, %arg1 : i32, i32
  }
  func.func @transform_2(%arg0: i32, %arg1: i32, %arg2: memref<1xi32, #tpu.memory_space<smem>>) -> (i32, i32) {
    %c0_i32 = arith.constant 0 : i32
    return %arg0, %arg1 : i32, i32
  }
}

</mosaic_0001>

<llo_original>
// kernel: tpu_custom_call.1
$region0: #{tpu_custom_call.1}
  #allocation0 [shape = 'u32[]', space=smem, size = 0x4, offset = 0x4, fixed_abs, tag = 'smem constant byte address 0x4 - core index']
  #allocation1 [shape = 'u32[144,128]{1,0:T(1,128)}', space=vmem, size = 0x12000, scoped, tag = 'internal scratch']
  #allocation2 [shape = 's32[1]{0}', space=sflag, size = 0x4, scoped, tag = 'scoped memory for tpu_custom_call.1']
  #allocation3 [shape = 's32[1]{0:T(128)S(6)}', space=smem, size = 0x200, scoped, tag = 'prefetched SMEM operand 0']
  %s0 = inlined_call_operand.<no memory space> [shape: s32[1], index: 0, kind: input, shape index: {}]
  %s1 = inlined_call_operand.hbm [shape: f32[96,4096], index: 1, kind: input, shape index: {}]
  %s2 = inlined_call_operand.hbm [shape: f32[1,4096], index: 2, kind: input, shape index: {}]
  %s3 = inlined_call_operand.hbm [shape: f32[96,4096], index: 3, kind: output, shape index: {}]
  %s4 = sld [smem:[#allocation0]]
  $region49: #{tpu_custom_call.1} parent=0
    _
  %s6 = ssub.s32 1, %s4
  %s7 = scalar_select 0, %s6, %s4
  %8 = sst [smem:[#allocation3]] %s0
  $region1: #{tpu_custom_call.1} parent=0
    #allocation4 [shape = 'u8[1572864]{0}', space=vmem, size = 0x180000, scoped, tag = 'input window, operand 1']
    #allocation5 [shape = 's32[2]{0}', space=sflag, size = 0x8, scoped, tag = 'scoped memory for tpu_custom_call.1']
    #allocation6 [shape = 's32[2]{0}', space=sflag, size = 0x8, scoped, tag = 'scoped memory for tpu_custom_call.1']
    #allocation7 [shape = 'u8[16384]{0}', space=vmem, size = 0x4000, scoped, tag = 'input window, operand 2']
    #allocation8 [shape = 's32[2]{0}', space=sflag, size = 0x8, scoped, tag = 'scoped memory for tpu_custom_call.1']
    #allocation9 [shape = 'u8[1572864]{0}', space=vmem, size = 0x180000, scoped, tag = 'output window, operand 0']
    %9 = vsyncpa [#allocation5], 0
    %s10 = scalar_lea.sflag [#allocation5], 1
    %11 = vsyncpa %s10, 0
    %12 = vsyncpa [#allocation8], 0
    %s13 = scalar_lea.sflag [#allocation8], 1
    %14 = vsyncpa %s13, 0
    %15 = vsyncpa [#allocation6], 0
    %s16 = scalar_lea.sflag [#allocation6], 1
    %17 = vsyncpa %s16, 0
    loop: start=0, step=1, limit=4
    $region2: #{tpu_custom_call.1} parent=1 // loop_pre_header
      _
    $region3: #{tpu_custom_call.1} parent=1 // loop_header
      %s19 = sphi 0, %s23
      %p20 = scmp.ge.s32.totalorder %s19, 4
      %s26 = sphi 0, %s38
      %s27 = sphi 0, %s34
      %s28 = sphi 0, %s26
      %s29 = sphi 0, %s27
      %s30 = sphi 0, %s28
      %s31 = sphi 0, %s29
      %s43 = sphi 0, %s45
      %s46 = sphi 0, %s43
      %s47 = sphi 0, %s46
      %s63 = sphi 0, %s47
      %s69 = sphi 0, %s71
      %s72 = sphi 0, %s69
      %s73 = sphi 0, %s72
      %s89 = sphi 0, %s73
      %s97 = sphi 0, %s99
      %s100 = sphi 0, %s97
      %s101 = sphi 0, %s100
      %s117 = sphi 0, %s101
    $region4: #{tpu_custom_call.1} parent=1 // loop_header_branch
      %22 = sbr.rel (%p20) target = $region8
    $region5: #{tpu_custom_call.1} parent=1 // loop_body
      %s24 = ssub.s32 %s19, 1
      %s25 = ssub.s32 %s19, 2
      %s32 = sadd.s32 1, %s27
      %p33 = scmp.ge.s32.totalorder %s32, 2
      %s34 = scalar_select %p33, 0, %s32
      %s35 = sadd.s32 1, %s26
      %s36 = scalar_select %p33, %s35, %s26
      %p37 = scmp.ge.s32.totalorder %s36, 1
      %s38 = scalar_select %p37, 0, %s36
      %s39 = ssub.s32 %s26, %s38
      %s40 = ssub.s32 %s27, %s34
      %s41 = sor.u32 %s39, %s40
      %p42 = scmp.eq.s32.totalorder %s41, 0
      %s44 = sadd.s32 %s43, 1
      %s45 = scalar_select %p42, %s43, %s44
      %p48 = pneg %p42
      %p49 = scmp.eq.s32.totalorder %s19, 1
      %p50 = por %p48, %p49
      %p51 = scmp.ne.s32.totalorder %s43, %s46
      %p52 = scmp.eq.s32.totalorder %s19, 0
      %p53 = por %p51, %p52
      %p54 = scmp.ne.s32.totalorder %s43, %s46
      %p55 = scmp.eq.s32.totalorder %s24, 1
      %p56 = por %p54, %p55
      %p57 = scmp.ne.s32.totalorder %s46, %s47
      %p58 = scmp.eq.s32.totalorder %s24, 0
      %p59 = por %p57, %p58
      %p60 = scmp.ne.s32.totalorder %s46, %s47
      %p61 = scmp.eq.s32.totalorder %s25, 1
      %p62 = por %p60, %p61
      %p64 = scmp.ne.s32.totalorder %s47, %s63
      %p65 = scmp.eq.s32.totalorder %s25, 0
      %p66 = por %p64, %p65
      %s67 = ssub.s32 %s27, %s34
      %p68 = scmp.eq.s32.totalorder %s67, 0
      %s70 = sadd.s32 %s69, 1
      %s71 = scalar_select %p68, %s69, %s70
      %p74 = pneg %p68
      %p75 = scmp.eq.s32.totalorder %s19, 1
      %p76 = por %p74, %p75
      %p77 = scmp.ne.s32.totalorder %s69, %s72
      %p78 = scmp.eq.s32.totalorder %s19, 0
      %p79 = por %p77, %p78
      %p80 = scmp.ne.s32.totalorder %s69, %s72
      %p81 = scmp.eq.s32.totalorder %s24, 1
      %p82 = por %p80, %p81
      %p83 = scmp.ne.s32.totalorder %s72, %s73
      %p84 = scmp.eq.s32.totalorder %s24, 0
      %p85 = por %p83, %p84
      %p86 = scmp.ne.s32.totalorder %s72, %s73
      %p87 = scmp.eq.s32.totalorder %s25, 1
      %p88 = por %p86, %p87
      %p90 = scmp.ne.s32.totalorder %s73, %s89
      %p91 = scmp.eq.s32.totalorder %s25, 0
      %p92 = por %p90, %p91
      %s93 = ssub.s32 %s26, %s38
      %s94 = ssub.s32 %s27, %s34
      %s95 = sor.u32 %s93, %s94
      %p96 = scmp.eq.s32.totalorder %s95, 0
      %s98 = sadd.s32 %s97, 1
      %s99 = scalar_select %p96, %s97, %s98
      %p102 = pneg %p96
      %p103 = scmp.eq.s32.totalorder %s19, 1
      %p104 = por %p102, %p103
      %p105 = scmp.ne.s32.totalorder %s97, %s100
      %p106 = scmp.eq.s32.totalorder %s19, 0
      %p107 = por %p105, %p106
      %p108 = scmp.ne.s32.totalorder %s97, %s100
      %p109 = scmp.eq.s32.totalorder %s24, 1
      %p110 = por %p108, %p109
      %p111 = scmp.ne.s32.totalorder %s100, %s101
      %p112 = scmp.eq.s32.totalorder %s24, 0
      %p113 = por %p111, %p112
      %p114 = scmp.ne.s32.totalorder %s100, %s101
      %p115 = scmp.eq.s32.totalorder %s25, 1
      %p116 = por %p114, %p115
      %p118 = scmp.ne.s32.totalorder %s101, %s117
      %p119 = scmp.eq.s32.totalorder %s25, 0
      %p120 = por %p118, %p119
      %p121 = scmp.le.s32.totalorder 1, %s19
      %p122 = scmp.lt.s32.totalorder %s19, 3
      %p123 = pnand %p121, %p122
      %p124 = pneg %p123
      // Predicated region
      $region9: #{tpu_custom_call.1} parent=5 // pred_check
        _
      $region10: #{tpu_custom_call.1} parent=5 // pred_check_branch
        %126 = sbr.rel (%p123) target = $region12
      $region11: #{tpu_custom_call.1} parent=5 // pred_region
        %s127 = ssub.s32 %s19, 1
      $region12: #{tpu_custom_call.1} parent=5 // pred_fallthru
        _
      %p128 = scmp.lt.s32.totalorder %s19, 2
      // Predicated region
      $region13: #{tpu_custom_call.1} parent=5 // pred_check
        %p129 = pneg %p128
      $region14: #{tpu_custom_call.1} parent=5 // pred_check_branch
        %131 = sbr.rel (%p129) target = $region16
      $region15: #{tpu_custom_call.1} parent=5 // pred_region
        // Predicated region
        $region17: #{tpu_custom_call.1} parent=15 // pred_check
          %p132 = pneg %p53
        $region18: #{tpu_custom_call.1} parent=15 // pred_check_branch
          %134 = sbr.rel (%p132) target = $region20
        $region19: #{tpu_custom_call.1} parent=15 // pred_region
          %s135 = sand.u32 %s43, 1
          %s136 = scalar_lea.sflag [#allocation5], %s135
          %s137 = sand.u32 %s43, 1
          %s138 = smul.addr %s137, 1536
          %s139 = scalar_lea.vmem [#allocation4], %s138
          %s140 = smul.u32 12, %s26
          %s141 = smul.u32 16, %s27
          %s143 = ssub.s32 24576, 24576
          %144 = vsyncadd %s136, %s143
          %s145 = smul.addr %s140, 32
          %s146 = sadd.s32 %s141, %s145
          %s147 = smul.addr %s146, 128
          %s148 = scalar_lea.hbm %s1, %s147
          %s149 = sshll.u32 %s139, 4
          %s150 = int_to_ptr.vmem [resolvable:$true] %s149
          %155 = dma.hbm_to_vmem [thread:$0]  %s148, 24576, %s150, %s136, 4096, 2048, 128
        $region20: #{tpu_custom_call.1} parent=15 // pred_fallthru
          _
        // Predicated region
        $region21: #{tpu_custom_call.1} parent=15 // pred_check
          %p156 = pneg %p79
        $region22: #{tpu_custom_call.1} parent=15 // pred_check_branch
          %158 = sbr.rel (%p156) target = $region24
        $region23: #{tpu_custom_call.1} parent=15 // pred_region
          %s159 = sand.u32 %s69, 1
          %s160 = scalar_lea.sflag [#allocation8], %s159
          %s161 = sand.u32 %s69, 1
          %s162 = smul.addr %s161, 16
          %s163 = scalar_lea.vmem [#allocation7], %s162
          %s164 = smul.u32 16, %s27
          %s166 = ssub.s32 256, 256
          %167 = vsyncadd %s160, %s166
          %s168 = smul.addr %s164, 16
          %s169 = scalar_lea.hbm %s2, %s168
          %s171 = sshll.u32 %s163, 4
          %s172 = int_to_ptr.vmem [resolvable:$true] %s171
          %174 = dma.hbm_to_vmem [thread:$0]  %s169, 256, %s172, %s160
        $region24: #{tpu_custom_call.1} parent=15 // pred_fallthru
          _
      $region16: #{tpu_custom_call.1} parent=5 // pred_fallthru
        _
      %p175 = scmp.le.s32.totalorder 1, %s19
      %p176 = scmp.lt.s32.totalorder %s19, 3
      %p177 = pnand %p175, %p176
      %p178 = pneg %p177
      // Predicated region
      $region25: #{tpu_custom_call.1} parent=5 // pred_check
        _
      $region26: #{tpu_custom_call.1} parent=5 // pred_check_branch
        %180 = sbr.rel (%p177) target = $region28
      $region27: #{tpu_custom_call.1} parent=5 // pred_region
        %s181 = ssub.s32 %s19, 1
        %s182 = sand.u32 %s46, 1
        %s183 = scalar_lea.sflag [#allocation5], %s182
        %s184 = sand.u32 %s46, 1
        %s185 = smul.addr %s184, 1536
        %s186 = scalar_lea.vmem [#allocation4], %s185
        // Predicated region
        $region29: #{tpu_custom_call.1} parent=27 // pred_check
          %p187 = pneg %p59
        $region30: #{tpu_custom_call.1} parent=27 // pred_check_branch
          %189 = sbr.rel (%p187) target = $region32
        $region31: #{tpu_custom_call.1} parent=27 // pred_region
          %190 = dma.done %s183, 24576
        $region32: #{tpu_custom_call.1} parent=27 // pred_fallthru
          _
        %s191 = sand.u32 %s72, 1
        %s192 = scalar_lea.sflag [#allocation8], %s191
        %s193 = sand.u32 %s72, 1
        %s194 = smul.addr %s193, 16
        %s195 = scalar_lea.vmem [#allocation7], %s194
        // Predicated region
        $region33: #{tpu_custom_call.1} parent=27 // pred_check
          %p196 = pneg %p85
        $region34: #{tpu_custom_call.1} parent=27 // pred_check_branch
          %198 = sbr.rel (%p196) target = $region36
        $region35: #{tpu_custom_call.1} parent=27 // pred_region
          %199 = dma.done %s192, 256
        $region36: #{tpu_custom_call.1} parent=27 // pred_fallthru
          _
        %s200 = sand.u32 %s46, 1
        %s201 = scalar_lea.sflag [#allocation5], %s200
        %s202 = sand.u32 %s46, 1
        %s203 = smul.addr %s202, 1536
        %s204 = scalar_lea.vmem [#allocation4], %s203
        %p205 = pneg %p59
        %p206 = pneg %p56
        %s207 = sand.u32 %s72, 1
        %s208 = scalar_lea.sflag [#allocation8], %s207
        %s209 = sand.u32 %s72, 1
        %s210 = smul.addr %s209, 16
        %s211 = scalar_lea.vmem [#allocation7], %s210
        %p212 = pneg %p85
        %p213 = pneg %p82
        %p214 = pneg %p113
        %p215 = pneg %p110
        %s216 = sand.u32 %s100, 1
        %s217 = scalar_lea.sflag [#allocation6], %s216
        %s218 = sand.u32 %s100, 1
        %s219 = smul.addr %s218, 1536
        %s220 = scalar_lea.vmem [#allocation9], %s219
        %s221 = smul.u32 12, %s28
        %s222 = smul.u32 16, %s29
        %s223 = smul.u32 16, %s29
        %s224 = smul.u32 12, %s28
        %s225 = smul.u32 16, %s29
        %v226 = vld [vmem:[%s186] sm:$0xff]
        %v227 = vld [vmem:[%s186 + $0x8] sm:$0xff]
        %v228 = vld [vmem:[%s186 + $0x10] sm:$0xff]
        %v229 = vld [vmem:[%s186 + $0x18] sm:$0xff]
        %v230 = vld [vmem:[%s186 + $0x20] sm:$0xff]
        %v231 = vld [vmem:[%s186 + $0x28] sm:$0xff]
        %v232 = vld [vmem:[%s186 + $0x30] sm:$0xff]
        %v233 = vld [vmem:[%s186 + $0x38] sm:$0xff]
        %v234 = vld [vmem:[%s186 + $0x40] sm:$0xff]
        %v235 = vld [vmem:[%s186 + $0x48] sm:$0xff]
        %v236 = vld [vmem:[%s186 + $0x50] sm:$0xff]
        %v237 = vld [vmem:[%s186 + $0x58] sm:$0xff]
        %v238 = vld [vmem:[%s186 + $0x60] sm:$0xff]
        %v239 = vld [vmem:[%s186 + $0x68] sm:$0xff]
        %v240 = vld [vmem:[%s186 + $0x70] sm:$0xff]
        %v241 = vld [vmem:[%s186 + $0x78] sm:$0xff]
        %v242 = vld [vmem:[%s186 + $0x80] sm:$0xff]
        %v243 = vld [vmem:[%s186 + $0x88] sm:$0xff]
        %v244 = vld [vmem:[%s186 + $0x90] sm:$0xff]
        %v245 = vld [vmem:[%s186 + $0x98] sm:$0xff]
        %v246 = vld [vmem:[%s186 + $0xa0] sm:$0xff]
        %v247 = vld [vmem:[%s186 + $0xa8] sm:$0xff]
        %v248 = vld [vmem:[%s186 + $0xb0] sm:$0xff]
        %v249 = vld [vmem:[%s186 + $0xb8] sm:$0xff]
        %v250 = vld [vmem:[%s186 + $0xc0] sm:$0xff]
        %v251 = vld [vmem:[%s186 + $0xc8] sm:$0xff]
        %v252 = vld [vmem:[%s186 + $0xd0] sm:$0xff]
        %v253 = vld [vmem:[%s186 + $0xd8] sm:$0xff]
        %v254 = vld [vmem:[%s186 + $0xe0] sm:$0xff]
        %v255 = vld [vmem:[%s186 + $0xe8] sm:$0xff]
        %v256 = vld [vmem:[%s186 + $0xf0] sm:$0xff]
        %v257 = vld [vmem:[%s186 + $0xf8] sm:$0xff]
        %v258 = vld [vmem:[%s186 + $0x100] sm:$0xff]
        %v259 = vld [vmem:[%s186 + $0x108] sm:$0xff]
        %v260 = vld [vmem:[%s186 + $0x110] sm:$0xff]
        %v261 = vld [vmem:[%s186 + $0x118] sm:$0xff]
        %v262 = vld [vmem:[%s186 + $0x120] sm:$0xff]
        %v263 = vld [vmem:[%s186 + $0x128] sm:$0xff]
        %v264 = vld [vmem:[%s186 + $0x130] sm:$0xff]
        %v265 = vld [vmem:[%s186 + $0x138] sm:$0xff]
        %v266 = vld [vmem:[%s186 + $0x140] sm:$0xff]
        %v267 = vld [vmem:[%s186 + $0x148] sm:$0xff]
        %v268 = vld [vmem:[%s186 + $0x150] sm:$0xff]
        %v269 = vld [vmem:[%s186 + $0x158] sm:$0xff]
        %v270 = vld [vmem:[%s186 + $0x160] sm:$0xff]
        %v271 = vld [vmem:[%s186 + $0x168] sm:$0xff]
        %v272 = vld [vmem:[%s186 + $0x170] sm:$0xff]
        %v273 = vld [vmem:[%s186 + $0x178] sm:$0xff]
        %v274 = vld [vmem:[%s186 + $0x180] sm:$0xff]
        %v275 = vld [vmem:[%s186 + $0x188] sm:$0xff]
        %v276 = vld [vmem:[%s186 + $0x190] sm:$0xff]
        %v277 = vld [vmem:[%s186 + $0x198] sm:$0xff]
        %v278 = vld [vmem:[%s186 + $0x1a0] sm:$0xff]
        %v279 = vld [vmem:[%s186 + $0x1a8] sm:$0xff]
        %v280 = vld [vmem:[%s186 + $0x1b0] sm:$0xff]
        %v281 = vld [vmem:[%s186 + $0x1b8] sm:$0xff]
        %v282 = vld [vmem:[%s186 + $0x1c0] sm:$0xff]
        %v283 = vld [vmem:[%s186 + $0x1c8] sm:$0xff]
        %v284 = vld [vmem:[%s186 + $0x1d0] sm:$0xff]
        %v285 = vld [vmem:[%s186 + $0x1d8] sm:$0xff]
        %v286 = vld [vmem:[%s186 + $0x1e0] sm:$0xff]
        %v287 = vld [vmem:[%s186 + $0x1e8] sm:$0xff]
        %v288 = vld [vmem:[%s186 + $0x1f0] sm:$0xff]
        %v289 = vld [vmem:[%s186 + $0x1f8] sm:$0xff]
        %v290 = vld [vmem:[%s186 + $0x200] sm:$0xff]
        %v291 = vld [vmem:[%s186 + $0x208] sm:$0xff]
        %v292 = vld [vmem:[%s186 + $0x210] sm:$0xff]
        %v293 = vld [vmem:[%s186 + $0x218] sm:$0xff]
        %v294 = vld [vmem:[%s186 + $0x220] sm:$0xff]
        %v295 = vld [vmem:[%s186 + $0x228] sm:$0xff]
        %v296 = vld [vmem:[%s186 + $0x230] sm:$0xff]
        %v297 = vld [vmem:[%s186 + $0x238] sm:$0xff]
        %v298 = vld [vmem:[%s186 + $0x240] sm:$0xff]
        %v299 = vld [vmem:[%s186 + $0x248] sm:$0xff]
        %v300 = vld [vmem:[%s186 + $0x250] sm:$0xff]
        %v301 = vld [vmem:[%s186 + $0x258] sm:$0xff]
        %v302 = vld [vmem:[%s186 + $0x260] sm:$0xff]
        %v303 = vld [vmem:[%s186 + $0x268] sm:$0xff]
        %v304 = vld [vmem:[%s186 + $0x270] sm:$0xff]
        %v305 = vld [vmem:[%s186 + $0x278] sm:$0xff]
        %v306 = vld [vmem:[%s186 + $0x280] sm:$0xff]
        %v307 = vld [vmem:[%s186 + $0x288] sm:$0xff]
        %v308 = vld [vmem:[%s186 + $0x290] sm:$0xff]
        %v309 = vld [vmem:[%s186 + $0x298] sm:$0xff]
        %v310 = vld [vmem:[%s186 + $0x2a0] sm:$0xff]
        %v311 = vld [vmem:[%s186 + $0x2a8] sm:$0xff]
        %v312 = vld [vmem:[%s186 + $0x2b0] sm:$0xff]
        %v313 = vld [vmem:[%s186 + $0x2b8] sm:$0xff]
        %v314 = vld [vmem:[%s186 + $0x2c0] sm:$0xff]
        %v315 = vld [vmem:[%s186 + $0x2c8] sm:$0xff]
        %v316 = vld [vmem:[%s186 + $0x2d0] sm:$0xff]
        %v317 = vld [vmem:[%s186 + $0x2d8] sm:$0xff]
        %v318 = vld [vmem:[%s186 + $0x2e0] sm:$0xff]
        %v319 = vld [vmem:[%s186 + $0x2e8] sm:$0xff]
        %v320 = vld [vmem:[%s186 + $0x2f0] sm:$0xff]
        %v321 = vld [vmem:[%s186 + $0x2f8] sm:$0xff]
        %v322 = vld [vmem:[%s186 + $0x300] sm:$0xff]
        %v323 = vld [vmem:[%s186 + $0x308] sm:$0xff]
        %v324 = vld [vmem:[%s186 + $0x310] sm:$0xff]
        %v325 = vld [vmem:[%s186 + $0x318] sm:$0xff]
        %v326 = vld [vmem:[%s186 + $0x320] sm:$0xff]
        %v327 = vld [vmem:[%s186 + $0x328] sm:$0xff]
        %v328 = vld [vmem:[%s186 + $0x330] sm:$0xff]
        %v329 = vld [vmem:[%s186 + $0x338] sm:$0xff]
        %v330 = vld [vmem:[%s186 + $0x340] sm:$0xff]
        %v331 = vld [vmem:[%s186 + $0x348] sm:$0xff]
        %v332 = vld [vmem:[%s186 + $0x350] sm:$0xff]
        %v333 = vld [vmem:[%s186 + $0x358] sm:$0xff]
        %v334 = vld [vmem:[%s186 + $0x360] sm:$0xff]
        %v335 = vld [vmem:[%s186 + $0x368] sm:$0xff]
        %v336 = vld [vmem:[%s186 + $0x370] sm:$0xff]
        %v337 = vld [vmem:[%s186 + $0x378] sm:$0xff]
        %v338 = vld [vmem:[%s186 + $0x380] sm:$0xff]
        %v339 = vld [vmem:[%s186 + $0x388] sm:$0xff]
        %v340 = vld [vmem:[%s186 + $0x390] sm:$0xff]
        %v341 = vld [vmem:[%s186 + $0x398] sm:$0xff]
        %v342 = vld [vmem:[%s186 + $0x3a0] sm:$0xff]
        %v343 = vld [vmem:[%s186 + $0x3a8] sm:$0xff]
        %v344 = vld [vmem:[%s186 + $0x3b0] sm:$0xff]
        %v345 = vld [vmem:[%s186 + $0x3b8] sm:$0xff]
        %v346 = vld [vmem:[%s186 + $0x3c0] sm:$0xff]
        %v347 = vld [vmem:[%s186 + $0x3c8] sm:$0xff]
        %v348 = vld [vmem:[%s186 + $0x3d0] sm:$0xff]
        %v349 = vld [vmem:[%s186 + $0x3d8] sm:$0xff]
        %v350 = vld [vmem:[%s186 + $0x3e0] sm:$0xff]
        %v351 = vld [vmem:[%s186 + $0x3e8] sm:$0xff]
        %v352 = vld [vmem:[%s186 + $0x3f0] sm:$0xff]
        %v353 = vld [vmem:[%s186 + $0x3f8] sm:$0xff]
        %v354 = vld [vmem:[%s186 + $0x400] sm:$0xff]
        %v355 = vld [vmem:[%s186 + $0x408] sm:$0xff]
        %v356 = vld [vmem:[%s186 + $0x410] sm:$0xff]
        %v357 = vld [vmem:[%s186 + $0x418] sm:$0xff]
        %v358 = vld [vmem:[%s186 + $0x420] sm:$0xff]
        %v359 = vld [vmem:[%s186 + $0x428] sm:$0xff]
        %v360 = vld [vmem:[%s186 + $0x430] sm:$0xff]
        %v361 = vld [vmem:[%s186 + $0x438] sm:$0xff]
        %v362 = vld [vmem:[%s186 + $0x440] sm:$0xff]
        %v363 = vld [vmem:[%s186 + $0x448] sm:$0xff]
        %v364 = vld [vmem:[%s186 + $0x450] sm:$0xff]
        %v365 = vld [vmem:[%s186 + $0x458] sm:$0xff]
        %v366 = vld [vmem:[%s186 + $0x460] sm:$0xff]
        %v367 = vld [vmem:[%s186 + $0x468] sm:$0xff]
        %v368 = vld [vmem:[%s186 + $0x470] sm:$0xff]
        %v369 = vld [vmem:[%s186 + $0x478] sm:$0xff]
        %v370 = vld [vmem:[%s186 + $0x480] sm:$0xff]
        %v371 = vld [vmem:[%s186 + $0x488] sm:$0xff]
        %v372 = vld [vmem:[%s186 + $0x490] sm:$0xff]
        %v373 = vld [vmem:[%s186 + $0x498] sm:$0xff]
        %v374 = vld [vmem:[%s186 + $0x4a0] sm:$0xff]
        %v375 = vld [vmem:[%s186 + $0x4a8] sm:$0xff]
        %v376 = vld [vmem:[%s186 + $0x4b0] sm:$0xff]
        %v377 = vld [vmem:[%s186 + $0x4b8] sm:$0xff]
        %v378 = vld [vmem:[%s186 + $0x4c0] sm:$0xff]
        %v379 = vld [vmem:[%s186 + $0x4c8] sm:$0xff]
        %v380 = vld [vmem:[%s186 + $0x4d0] sm:$0xff]
        %v381 = vld [vmem:[%s186 + $0x4d8] sm:$0xff]
        %v382 = vld [vmem:[%s186 + $0x4e0] sm:$0xff]
        %v383 = vld [vmem:[%s186 + $0x4e8] sm:$0xff]
        %v384 = vld [vmem:[%s186 + $0x4f0] sm:$0xff]
        %v385 = vld [vmem:[%s186 + $0x4f8] sm:$0xff]
        %v386 = vld [vmem:[%s186 + $0x500] sm:$0xff]
        %v387 = vld [vmem:[%s186 + $0x508] sm:$0xff]
        %v388 = vld [vmem:[%s186 + $0x510] sm:$0xff]
        %v389 = vld [vmem:[%s186 + $0x518] sm:$0xff]
        %v390 = vld [vmem:[%s186 + $0x520] sm:$0xff]
        %v391 = vld [vmem:[%s186 + $0x528] sm:$0xff]
        %v392 = vld [vmem:[%s186 + $0x530] sm:$0xff]
        %v393 = vld [vmem:[%s186 + $0x538] sm:$0xff]
        %v394 = vld [vmem:[%s186 + $0x540] sm:$0xff]
        %v395 = vld [vmem:[%s186 + $0x548] sm:$0xff]
        %v396 = vld [vmem:[%s186 + $0x550] sm:$0xff]
        %v397 = vld [vmem:[%s186 + $0x558] sm:$0xff]
        %v398 = vld [vmem:[%s186 + $0x560] sm:$0xff]
        %v399 = vld [vmem:[%s186 + $0x568] sm:$0xff]
        %v400 = vld [vmem:[%s186 + $0x570] sm:$0xff]
        %v401 = vld [vmem:[%s186 + $0x578] sm:$0xff]
        %v402 = vld [vmem:[%s186 + $0x580] sm:$0xff]
        %v403 = vld [vmem:[%s186 + $0x588] sm:$0xff]
        %v404 = vld [vmem:[%s186 + $0x590] sm:$0xff]
        %v405 = vld [vmem:[%s186 + $0x598] sm:$0xff]
        %v406 = vld [vmem:[%s186 + $0x5a0] sm:$0xff]
        %v407 = vld [vmem:[%s186 + $0x5a8] sm:$0xff]
        %v408 = vld [vmem:[%s186 + $0x5b0] sm:$0xff]
        %v409 = vld [vmem:[%s186 + $0x5b8] sm:$0xff]
        %v410 = vld [vmem:[%s186 + $0x5c0] sm:$0xff]
        %v411 = vld [vmem:[%s186 + $0x5c8] sm:$0xff]
        %v412 = vld [vmem:[%s186 + $0x5d0] sm:$0xff]
        %v413 = vld [vmem:[%s186 + $0x5d8] sm:$0xff]
        %v414 = vld [vmem:[%s186 + $0x5e0] sm:$0xff]
        %v415 = vld [vmem:[%s186 + $0x5e8] sm:$0xff]
        %v416 = vld [vmem:[%s186 + $0x5f0] sm:$0xff]
        %v417 = vld [vmem:[%s186 + $0x5f8] sm:$0xff]
        %v418 = vld [vmem:[%s195] sm:$0xff]
        %v419 = vld [vmem:[%s195 + $0x8] sm:$0xff]
        %v422 = vlaneseq
        %v423 = vshrl.u32 %v422, 7
        %v424 = vsub.s32 0, %v423
        %v425 = vrot.slane %v418, %v424
        %v426 = vlaneseq
        %v427 = vshrl.u32 %v426, 7
        %v428 = vsub.s32 1, %v427
        %v429 = vrot.slane %v418, %v428
        %v430 = vlaneseq
        %v431 = vshrl.u32 %v430, 7
        %v432 = vsub.s32 2, %v431
        %v433 = vrot.slane %v418, %v432
        %v434 = vlaneseq
        %v435 = vshrl.u32 %v434, 7
        %v436 = vsub.s32 3, %v435
        %v437 = vrot.slane %v418, %v436
        %v438 = vlaneseq
        %v439 = vshrl.u32 %v438, 7
        %v440 = vsub.s32 4, %v439
        %v441 = vrot.slane %v418, %v440
        %v442 = vlaneseq
        %v443 = vshrl.u32 %v442, 7
        %v444 = vsub.s32 5, %v443
        %v445 = vrot.slane %v418, %v444
        %v446 = vlaneseq
        %v447 = vshrl.u32 %v446, 7
        %v448 = vsub.s32 6, %v447
        %v449 = vrot.slane %v418, %v448
        %v450 = vlaneseq
        %v451 = vshrl.u32 %v450, 7
        %v452 = vsub.s32 7, %v451
        %v453 = vrot.slane %v418, %v452
        %v454 = vlaneseq
        %v455 = vshrl.u32 %v454, 7
        %v456 = vsub.s32 0, %v455
        %v457 = vrot.slane %v419, %v456
        %v458 = vlaneseq
        %v459 = vshrl.u32 %v458, 7
        %v460 = vsub.s32 1, %v459
        %v461 = vrot.slane %v419, %v460
        %v462 = vlaneseq
        %v463 = vshrl.u32 %v462, 7
        %v464 = vsub.s32 2, %v463
        %v465 = vrot.slane %v419, %v464
        %v466 = vlaneseq
        %v467 = vshrl.u32 %v466, 7
        %v468 = vsub.s32 3, %v467
        %v469 = vrot.slane %v419, %v468
        %v470 = vlaneseq
        %v471 = vshrl.u32 %v470, 7
        %v472 = vsub.s32 4, %v471
        %v473 = vrot.slane %v419, %v472
        %v474 = vlaneseq
        %v475 = vshrl.u32 %v474, 7
        %v476 = vsub.s32 5, %v475
        %v477 = vrot.slane %v419, %v476
        %v478 = vlaneseq
        %v479 = vshrl.u32 %v478, 7
        %v480 = vsub.s32 6, %v479
        %v481 = vrot.slane %v419, %v480
        %v482 = vlaneseq
        %v483 = vshrl.u32 %v482, 7
        %v484 = vsub.s32 7, %v483
        %v485 = vrot.slane %v419, %v484
        %v502 = vadd.f32 %v226, %v425
        %v503 = vadd.f32 %v227, %v429
        %v504 = vadd.f32 %v228, %v433
        %v505 = vadd.f32 %v229, %v437
        %v506 = vadd.f32 %v230, %v441
        %v507 = vadd.f32 %v231, %v445
        %v508 = vadd.f32 %v232, %v449
        %v509 = vadd.f32 %v233, %v453
        %v510 = vadd.f32 %v234, %v457
        %v511 = vadd.f32 %v235, %v461
        %v512 = vadd.f32 %v236, %v465
        %v513 = vadd.f32 %v237, %v469
        %v514 = vadd.f32 %v238, %v473
        %v515 = vadd.f32 %v239, %v477
        %v516 = vadd.f32 %v240, %v481
        %v517 = vadd.f32 %v241, %v485
        %v518 = vadd.f32 %v242, %v425
        %v519 = vadd.f32 %v243, %v429
        %v520 = vadd.f32 %v244, %v433
        %v521 = vadd.f32 %v245, %v437
        %v522 = vadd.f32 %v246, %v441
        %v523 = vadd.f32 %v247, %v445
        %v524 = vadd.f32 %v248, %v449
        %v525 = vadd.f32 %v249, %v453
        %v526 = vadd.f32 %v250, %v457
        %v527 = vadd.f32 %v251, %v461
        %v528 = vadd.f32 %v252, %v465
        %v529 = vadd.f32 %v253, %v469
        %v530 = vadd.f32 %v254, %v473
        %v531 = vadd.f32 %v255, %v477
        %v532 = vadd.f32 %v256, %v481
        %v533 = vadd.f32 %v257, %v485
        %v534 = vadd.f32 %v258, %v425
        %v535 = vadd.f32 %v259, %v429
        %v536 = vadd.f32 %v260, %v433
        %v537 = vadd.f32 %v261, %v437
        %v538 = vadd.f32 %v262, %v441
        %v539 = vadd.f32 %v263, %v445
        %v540 = vadd.f32 %v264, %v449
        %v541 = vadd.f32 %v265, %v453
        %v542 = vadd.f32 %v266, %v457
        %v543 = vadd.f32 %v267, %v461
        %v544 = vadd.f32 %v268, %v465
        %v545 = vadd.f32 %v269, %v469
        %v546 = vadd.f32 %v270, %v473
        %v547 = vadd.f32 %v271, %v477
        %v548 = vadd.f32 %v272, %v481
        %v549 = vadd.f32 %v273, %v485
        %v550 = vadd.f32 %v274, %v425
        %v551 = vadd.f32 %v275, %v429
        %v552 = vadd.f32 %v276, %v433
        %v553 = vadd.f32 %v277, %v437
        %v554 = vadd.f32 %v278, %v441
        %v555 = vadd.f32 %v279, %v445
        %v556 = vadd.f32 %v280, %v449
        %v557 = vadd.f32 %v281, %v453
        %v558 = vadd.f32 %v282, %v457
        %v559 = vadd.f32 %v283, %v461
        %v560 = vadd.f32 %v284, %v465
        %v561 = vadd.f32 %v285, %v469
        %v562 = vadd.f32 %v286, %v473
        %v563 = vadd.f32 %v287, %v477
        %v564 = vadd.f32 %v288, %v481
        %v565 = vadd.f32 %v289, %v485
        %v566 = vadd.f32 %v290, %v425
        %v567 = vadd.f32 %v291, %v429
        %v568 = vadd.f32 %v292, %v433
        %v569 = vadd.f32 %v293, %v437
        %v570 = vadd.f32 %v294, %v441
        %v571 = vadd.f32 %v295, %v445
        %v572 = vadd.f32 %v296, %v449
        %v573 = vadd.f32 %v297, %v453
        %v574 = vadd.f32 %v298, %v457
        %v575 = vadd.f32 %v299, %v461
        %v576 = vadd.f32 %v300, %v465
        %v577 = vadd.f32 %v301, %v469
        %v578 = vadd.f32 %v302, %v473
        %v579 = vadd.f32 %v303, %v477
        %v580 = vadd.f32 %v304, %v481
        %v581 = vadd.f32 %v305, %v485
        %v582 = vadd.f32 %v306, %v425
        %v583 = vadd.f32 %v307, %v429
        %v584 = vadd.f32 %v308, %v433
        %v585 = vadd.f32 %v309, %v437
        %v586 = vadd.f32 %v310, %v441
        %v587 = vadd.f32 %v311, %v445
        %v588 = vadd.f32 %v312, %v449
        %v589 = vadd.f32 %v313, %v453
        %v590 = vadd.f32 %v314, %v457
        %v591 = vadd.f32 %v315, %v461
        %v592 = vadd.f32 %v316, %v465
        %v593 = vadd.f32 %v317, %v469
        %v594 = vadd.f32 %v318, %v473
        %v595 = vadd.f32 %v319, %v477
        %v596 = vadd.f32 %v320, %v481
        %v597 = vadd.f32 %v321, %v485
        %v598 = vadd.f32 %v322, %v425
        %v599 = vadd.f32 %v323, %v429
        %v600 = vadd.f32 %v324, %v433
        %v601 = vadd.f32 %v325, %v437
        %v602 = vadd.f32 %v326, %v441
        %v603 = vadd.f32 %v327, %v445
        %v604 = vadd.f32 %v328, %v449
        %v605 = vadd.f32 %v329, %v453
        %v606 = vadd.f32 %v330, %v457
        %v607 = vadd.f32 %v331, %v461
        %v608 = vadd.f32 %v332, %v465
        %v609 = vadd.f32 %v333, %v469
        %v610 = vadd.f32 %v334, %v473
        %v611 = vadd.f32 %v335, %v477
        %v612 = vadd.f32 %v336, %v481
        %v613 = vadd.f32 %v337, %v485
        %v614 = vadd.f32 %v338, %v425
        %v615 = vadd.f32 %v339, %v429
        %v616 = vadd.f32 %v340, %v433
        %v617 = vadd.f32 %v341, %v437
        %v618 = vadd.f32 %v342, %v441
        %v619 = vadd.f32 %v343, %v445
        %v620 = vadd.f32 %v344, %v449
        %v621 = vadd.f32 %v345, %v453
        %v622 = vadd.f32 %v346, %v457
        %v623 = vadd.f32 %v347, %v461
        %v624 = vadd.f32 %v348, %v465
        %v625 = vadd.f32 %v349, %v469
        %v626 = vadd.f32 %v350, %v473
        %v627 = vadd.f32 %v351, %v477
        %v628 = vadd.f32 %v352, %v481
        %v629 = vadd.f32 %v353, %v485
        %v630 = vadd.f32 %v354, %v425
        %v631 = vadd.f32 %v355, %v429
        %v632 = vadd.f32 %v356, %v433
        %v633 = vadd.f32 %v357, %v437
        %v634 = vadd.f32 %v358, %v441
        %v635 = vadd.f32 %v359, %v445
        %v636 = vadd.f32 %v360, %v449
        %v637 = vadd.f32 %v361, %v453
        %v638 = vadd.f32 %v362, %v457
        %v639 = vadd.f32 %v363, %v461
        %v640 = vadd.f32 %v364, %v465
        %v641 = vadd.f32 %v365, %v469
        %v642 = vadd.f32 %v366, %v473
        %v643 = vadd.f32 %v367, %v477
        %v644 = vadd.f32 %v368, %v481
        %v645 = vadd.f32 %v369, %v485
        %v646 = vadd.f32 %v370, %v425
        %v647 = vadd.f32 %v371, %v429
        %v648 = vadd.f32 %v372, %v433
        %v649 = vadd.f32 %v373, %v437
        %v650 = vadd.f32 %v374, %v441
        %v651 = vadd.f32 %v375, %v445
        %v652 = vadd.f32 %v376, %v449
        %v653 = vadd.f32 %v377, %v453
        %v654 = vadd.f32 %v378, %v457
        %v655 = vadd.f32 %v379, %v461
        %v656 = vadd.f32 %v380, %v465
        %v657 = vadd.f32 %v381, %v469
        %v658 = vadd.f32 %v382, %v473
        %v659 = vadd.f32 %v383, %v477
        %v660 = vadd.f32 %v384, %v481
        %v661 = vadd.f32 %v385, %v485
        %v662 = vadd.f32 %v386, %v425
        %v663 = vadd.f32 %v387, %v429
        %v664 = vadd.f32 %v388, %v433
        %v665 = vadd.f32 %v389, %v437
        %v666 = vadd.f32 %v390, %v441
        %v667 = vadd.f32 %v391, %v445
        %v668 = vadd.f32 %v392, %v449
        %v669 = vadd.f32 %v393, %v453
        %v670 = vadd.f32 %v394, %v457
        %v671 = vadd.f32 %v395, %v461
        %v672 = vadd.f32 %v396, %v465
        %v673 = vadd.f32 %v397, %v469
        %v674 = vadd.f32 %v398, %v473
        %v675 = vadd.f32 %v399, %v477
        %v676 = vadd.f32 %v400, %v481
        %v677 = vadd.f32 %v401, %v485
        %v678 = vadd.f32 %v402, %v425
        %v679 = vadd.f32 %v403, %v429
        %v680 = vadd.f32 %v404, %v433
        %v681 = vadd.f32 %v405, %v437
        %v682 = vadd.f32 %v406, %v441
        %v683 = vadd.f32 %v407, %v445
        %v684 = vadd.f32 %v408, %v449
        %v685 = vadd.f32 %v409, %v453
        %v686 = vadd.f32 %v410, %v457
        %v687 = vadd.f32 %v411, %v461
        %v688 = vadd.f32 %v412, %v465
        %v689 = vadd.f32 %v413, %v469
        %v690 = vadd.f32 %v414, %v473
        %v691 = vadd.f32 %v415, %v477
        %v692 = vadd.f32 %v416, %v481
        %v693 = vadd.f32 %v417, %v485
        %s694 = sld [smem:[#allocation3]]
        %s695 = smul.u32 %s28, 393216
        %s696 = smul.u32 %s29, 2048
        %s697 = sadd.s32 %s695, %s696
        %s698 = smul.u32 %s694, 2654435769
        %s699 = sadd.s32 %s697, %s698
        %v700 = vlaneseq
        %v701 = vshrl.u32 %v700, 7
        %v702 = vadd.s32 %v701, 8
        %v703 = vadd.s32 %v701, 16
        %v704 = vadd.s32 %v701, 24
        %v705 = vadd.s32 %v701, 32
        %v706 = vadd.s32 %v701, 40
        %v707 = vadd.s32 %v701, 48
        %v708 = vadd.s32 %v701, 56
        %v709 = vadd.s32 %v701, 64
        %v710 = vadd.s32 %v701, 72
        %v711 = vadd.s32 %v701, 80
        %v712 = vadd.s32 %v701, 88
        %v713 = vlaneseq
        %v714 = vand.u32 %v713, 127
        %v715 = vadd.s32 %v714, 128
        %v716 = vadd.s32 %v714, 256
        %v717 = vadd.s32 %v714, 384
        %v718 = vadd.s32 %v714, 512
        %v719 = vadd.s32 %v714, 640
        %v720 = vadd.s32 %v714, 768
        %v721 = vadd.s32 %v714, 896
        %v722 = vadd.s32 %v714, 1024
        %v723 = vadd.s32 %v714, 1152
        %v724 = vadd.s32 %v714, 1280
        %v725 = vadd.s32 %v714, 1408
        %v726 = vadd.s32 %v714, 1536
        %v727 = vadd.s32 %v714, 1664
        %v728 = vadd.s32 %v714, 1792
        %v729 = vadd.s32 %v714, 1920
        %v730 = vmul.u32 %v701, 4096
        %v731 = vmul.u32 %v702, 4096
        %v732 = vmul.u32 %v703, 4096
        %v733 = vmul.u32 %v704, 4096
        %v734 = vmul.u32 %v705, 4096
        %v735 = vmul.u32 %v706, 4096
        %v736 = vmul.u32 %v707, 4096
        %v737 = vmul.u32 %v708, 4096
        %v738 = vmul.u32 %v709, 4096
        %v739 = vmul.u32 %v710, 4096
        %v740 = vmul.u32 %v711, 4096
        %v741 = vmul.u32 %v712, 4096
        %v742 = vadd.s32 %v730, %v714
        %v743 = vadd.s32 %v730, %v715
        %v744 = vadd.s32 %v730, %v716
        %v745 = vadd.s32 %v730, %v717
        %v746 = vadd.s32 %v730, %v718
        %v747 = vadd.s32 %v730, %v719
        %v748 = vadd.s32 %v730, %v720
        %v749 = vadd.s32 %v730, %v721
        %v750 = vadd.s32 %v730, %v722
        %v751 = vadd.s32 %v730, %v723
        %v752 = vadd.s32 %v730, %v724
        %v753 = vadd.s32 %v730, %v725
        %v754 = vadd.s32 %v730, %v726
        %v755 = vadd.s32 %v730, %v727
        %v756 = vadd.s32 %v730, %v728
        %v757 = vadd.s32 %v730, %v729
        %v758 = vadd.s32 %v731, %v714
        %v759 = vadd.s32 %v731, %v715
        %v760 = vadd.s32 %v731, %v716
        %v761 = vadd.s32 %v731, %v717
        %v762 = vadd.s32 %v731, %v718
        %v763 = vadd.s32 %v731, %v719
        %v764 = vadd.s32 %v731, %v720
        %v765 = vadd.s32 %v731, %v721
        %v766 = vadd.s32 %v731, %v722
        %v767 = vadd.s32 %v731, %v723
        %v768 = vadd.s32 %v731, %v724
        %v769 = vadd.s32 %v731, %v725
        %v770 = vadd.s32 %v731, %v726
        %v771 = vadd.s32 %v731, %v727
        %v772 = vadd.s32 %v731, %v728
        %v773 = vadd.s32 %v731, %v729
        %v774 = vadd.s32 %v732, %v714
        %v775 = vadd.s32 %v732, %v715
        %v776 = vadd.s32 %v732, %v716
        %v777 = vadd.s32 %v732, %v717
        %v778 = vadd.s32 %v732, %v718
        %v779 = vadd.s32 %v732, %v719
        %v780 = vadd.s32 %v732, %v720
        %v781 = vadd.s32 %v732, %v721
        %v782 = vadd.s32 %v732, %v722
        %v783 = vadd.s32 %v732, %v723
        %v784 = vadd.s32 %v732, %v724
        %v785 = vadd.s32 %v732, %v725
        %v786 = vadd.s32 %v732, %v726
        %v787 = vadd.s32 %v732, %v727
        %v788 = vadd.s32 %v732, %v728
        %v789 = vadd.s32 %v732, %v729
        %v790 = vadd.s32 %v733, %v714
        %v791 = vadd.s32 %v733, %v715
        %v792 = vadd.s32 %v733, %v716
        %v793 = vadd.s32 %v733, %v717
        %v794 = vadd.s32 %v733, %v718
        %v795 = vadd.s32 %v733, %v719
        %v796 = vadd.s32 %v733, %v720
        %v797 = vadd.s32 %v733, %v721
        %v798 = vadd.s32 %v733, %v722
        %v799 = vadd.s32 %v733, %v723
        %v800 = vadd.s32 %v733, %v724
        %v801 = vadd.s32 %v733, %v725
        %v802 = vadd.s32 %v733, %v726
        %v803 = vadd.s32 %v733, %v727
        %v804 = vadd.s32 %v733, %v728
        %v805 = vadd.s32 %v733, %v729
        %v806 = vadd.s32 %v734, %v714
        %v807 = vadd.s32 %v734, %v715
        %v808 = vadd.s32 %v734, %v716
        %v809 = vadd.s32 %v734, %v717
        %v810 = vadd.s32 %v734, %v718
        %v811 = vadd.s32 %v734, %v719
        %v812 = vadd.s32 %v734, %v720
        %v813 = vadd.s32 %v734, %v721
        %v814 = vadd.s32 %v734, %v722
        %v815 = vadd.s32 %v734, %v723
        %v816 = vadd.s32 %v734, %v724
        %v817 = vadd.s32 %v734, %v725
        %v818 = vadd.s32 %v734, %v726
        %v819 = vadd.s32 %v734, %v727
        %v820 = vadd.s32 %v734, %v728
        %v821 = vadd.s32 %v734, %v729
        %v822 = vadd.s32 %v735, %v714
        %v823 = vadd.s32 %v735, %v715
        %v824 = vadd.s32 %v735, %v716
        %v825 = vadd.s32 %v735, %v717
        %v826 = vadd.s32 %v735, %v718
        %v827 = vadd.s32 %v735, %v719
        %v828 = vadd.s32 %v735, %v720
        %v829 = vadd.s32 %v735, %v721
        %v830 = vadd.s32 %v735, %v722
        %v831 = vadd.s32 %v735, %v723
        %v832 = vadd.s32 %v735, %v724
        %v833 = vadd.s32 %v735, %v725
        %v834 = vadd.s32 %v735, %v726
        %v835 = vadd.s32 %v735, %v727
        %v836 = vadd.s32 %v735, %v728
        %v837 = vadd.s32 %v735, %v729
        %v838 = vadd.s32 %v736, %v714
        %v839 = vadd.s32 %v736, %v715
        %v840 = vadd.s32 %v736, %v716
        %v841 = vadd.s32 %v736, %v717
        %v842 = vadd.s32 %v736, %v718
        %v843 = vadd.s32 %v736, %v719
        %v844 = vadd.s32 %v736, %v720
        %v845 = vadd.s32 %v736, %v721
        %v846 = vadd.s32 %v736, %v722
        %v847 = vadd.s32 %v736, %v723
        %v848 = vadd.s32 %v736, %v724
        %v849 = vadd.s32 %v736, %v725
        %v850 = vadd.s32 %v736, %v726
        %v851 = vadd.s32 %v736, %v727
        %v852 = vadd.s32 %v736, %v728
        %v853 = vadd.s32 %v736, %v729
        %v854 = vadd.s32 %v737, %v714
        %v855 = vadd.s32 %v737, %v715
        %v856 = vadd.s32 %v737, %v716
        %v857 = vadd.s32 %v737, %v717
        %v858 = vadd.s32 %v737, %v718
        %v859 = vadd.s32 %v737, %v719
        %v860 = vadd.s32 %v737, %v720
        %v861 = vadd.s32 %v737, %v721
        %v862 = vadd.s32 %v737, %v722
        %v863 = vadd.s32 %v737, %v723
        %v864 = vadd.s32 %v737, %v724
        %v865 = vadd.s32 %v737, %v725
        %v866 = vadd.s32 %v737, %v726
        %v867 = vadd.s32 %v737, %v727
        %v868 = vadd.s32 %v737, %v728
        %v869 = vadd.s32 %v737, %v729
        %v870 = vadd.s32 %v738, %v714
        %v871 = vadd.s32 %v738, %v715
        %v872 = vadd.s32 %v738, %v716
        %v873 = vadd.s32 %v738, %v717
        %v874 = vadd.s32 %v738, %v718
        %v875 = vadd.s32 %v738, %v719
        %v876 = vadd.s32 %v738, %v720
        %v877 = vadd.s32 %v738, %v721
        %v878 = vadd.s32 %v738, %v722
        %v879 = vadd.s32 %v738, %v723
        %v880 = vadd.s32 %v738, %v724
        %v881 = vadd.s32 %v738, %v725
        %v882 = vadd.s32 %v738, %v726
        %v883 = vadd.s32 %v738, %v727
        %v884 = vadd.s32 %v738, %v728
        %v885 = vadd.s32 %v738, %v729
        %v886 = vadd.s32 %v739, %v714
        %v887 = vadd.s32 %v739, %v715
        %v888 = vadd.s32 %v739, %v716
        %v889 = vadd.s32 %v739, %v717
        %v890 = vadd.s32 %v739, %v718
        %v891 = vadd.s32 %v739, %v719
        %v892 = vadd.s32 %v739, %v720
        %v893 = vadd.s32 %v739, %v721
        %v894 = vadd.s32 %v739, %v722
        %v895 = vadd.s32 %v739, %v723
        %v896 = vadd.s32 %v739, %v724
        %v897 = vadd.s32 %v739, %v725
        %v898 = vadd.s32 %v739, %v726
        %v899 = vadd.s32 %v739, %v727
        %v900 = vadd.s32 %v739, %v728
        %v901 = vadd.s32 %v739, %v729
        %v902 = vadd.s32 %v740, %v714
        %v903 = vadd.s32 %v740, %v715
        %v904 = vadd.s32 %v740, %v716
        %v905 = vadd.s32 %v740, %v717
        %v906 = vadd.s32 %v740, %v718
        %v907 = vadd.s32 %v740, %v719
        %v908 = vadd.s32 %v740, %v720
        %v909 = vadd.s32 %v740, %v721
        %v910 = vadd.s32 %v740, %v722
        %v911 = vadd.s32 %v740, %v723
        %v912 = vadd.s32 %v740, %v724
        %v913 = vadd.s32 %v740, %v725
        %v914 = vadd.s32 %v740, %v726
        %v915 = vadd.s32 %v740, %v727
        %v916 = vadd.s32 %v740, %v728
        %v917 = vadd.s32 %v740, %v729
        %v918 = vadd.s32 %v741, %v714
        %v919 = vadd.s32 %v741, %v715
        %v920 = vadd.s32 %v741, %v716
        %v921 = vadd.s32 %v741, %v717
        %v922 = vadd.s32 %v741, %v718
        %v923 = vadd.s32 %v741, %v719
        %v924 = vadd.s32 %v741, %v720
        %v925 = vadd.s32 %v741, %v721
        %v926 = vadd.s32 %v741, %v722
        %v927 = vadd.s32 %v741, %v723
        %v928 = vadd.s32 %v741, %v724
        %v929 = vadd.s32 %v741, %v725
        %v930 = vadd.s32 %v741, %v726
        %v931 = vadd.s32 %v741, %v727
        %v932 = vadd.s32 %v741, %v728
        %v933 = vadd.s32 %v741, %v729
        %v934 = vstv %s699
        %v935 = vadd.s32 %v742, %v934
        %v936 = vadd.s32 %v743, %v934
        %v937 = vadd.s32 %v744, %v934
        %v938 = vadd.s32 %v745, %v934
        %v939 = vadd.s32 %v746, %v934
        %v940 = vadd.s32 %v747, %v934
        %v941 = vadd.s32 %v748, %v934
        %v942 = vadd.s32 %v749, %v934
        %v943 = vadd.s32 %v750, %v934
        %v944 = vadd.s32 %v751, %v934
        %v945 = vadd.s32 %v752, %v934
        %v946 = vadd.s32 %v753, %v934
        %v947 = vadd.s32 %v754, %v934
        %v948 = vadd.s32 %v755, %v934
        %v949 = vadd.s32 %v756, %v934
        %v950 = vadd.s32 %v757, %v934
        %v951 = vadd.s32 %v758, %v934
        %v952 = vadd.s32 %v759, %v934
        %v953 = vadd.s32 %v760, %v934
        %v954 = vadd.s32 %v761, %v934
        %v955 = vadd.s32 %v762, %v934
        %v956 = vadd.s32 %v763, %v934
        %v957 = vadd.s32 %v764, %v934
        %v958 = vadd.s32 %v765, %v934
        %v959 = vadd.s32 %v766, %v934
        %v960 = vadd.s32 %v767, %v934
        %v961 = vadd.s32 %v768, %v934
        %v962 = vadd.s32 %v769, %v934
        %v963 = vadd.s32 %v770, %v934
        %v964 = vadd.s32 %v771, %v934
        %v965 = vadd.s32 %v772, %v934
        %v966 = vadd.s32 %v773, %v934
        %v967 = vadd.s32 %v774, %v934
        %v968 = vadd.s32 %v775, %v934
        %v969 = vadd.s32 %v776, %v934
        %v970 = vadd.s32 %v777, %v934
        %v971 = vadd.s32 %v778, %v934
        %v972 = vadd.s32 %v779, %v934
        %v973 = vadd.s32 %v780, %v934
        %v974 = vadd.s32 %v781, %v934
        %v975 = vadd.s32 %v782, %v934
        %v976 = vadd.s32 %v783, %v934
        %v977 = vadd.s32 %v784, %v934
        %v978 = vadd.s32 %v785, %v934
        %v979 = vadd.s32 %v786, %v934
        %v980 = vadd.s32 %v787, %v934
        %v981 = vadd.s32 %v788, %v934
        %v982 = vadd.s32 %v789, %v934
        %v983 = vadd.s32 %v790, %v934
        %v984 = vadd.s32 %v791, %v934
        %v985 = vadd.s32 %v792, %v934
        %v986 = vadd.s32 %v793, %v934
        %v987 = vadd.s32 %v794, %v934
        %v988 = vadd.s32 %v795, %v934
        %v989 = vadd.s32 %v796, %v934
        %v990 = vadd.s32 %v797, %v934
        %v991 = vadd.s32 %v798, %v934
        %v992 = vadd.s32 %v799, %v934
        %v993 = vadd.s32 %v800, %v934
        %v994 = vadd.s32 %v801, %v934
        %v995 = vadd.s32 %v802, %v934
        %v996 = vadd.s32 %v803, %v934
        %v997 = vadd.s32 %v804, %v934
        %v998 = vadd.s32 %v805, %v934
        %v999 = vadd.s32 %v806, %v934
        %v1000 = vadd.s32 %v807, %v934
        %v1001 = vadd.s32 %v808, %v934
        %v1002 = vadd.s32 %v809, %v934
        %v1003 = vadd.s32 %v810, %v934
        %v1004 = vadd.s32 %v811, %v934
        %v1005 = vadd.s32 %v812, %v934
        %v1006 = vadd.s32 %v813, %v934
        %v1007 = vadd.s32 %v814, %v934
        %v1008 = vadd.s32 %v815, %v934
        %v1009 = vadd.s32 %v816, %v934
        %v1010 = vadd.s32 %v817, %v934
        %v1011 = vadd.s32 %v818, %v934
        %v1012 = vadd.s32 %v819, %v934
        %v1013 = vadd.s32 %v820, %v934
        %v1014 = vadd.s32 %v821, %v934
        %v1015 = vadd.s32 %v822, %v934
        %v1016 = vadd.s32 %v823, %v934
        %v1017 = vadd.s32 %v824, %v934
        %v1018 = vadd.s32 %v825, %v934
        %v1019 = vadd.s32 %v826, %v934
        %v1020 = vadd.s32 %v827, %v934
        %v1021 = vadd.s32 %v828, %v934
        %v1022 = vadd.s32 %v829, %v934
        %v1023 = vadd.s32 %v830, %v934
        %v1024 = vadd.s32 %v831, %v934
        %v1025 = vadd.s32 %v832, %v934
        %v1026 = vadd.s32 %v833, %v934
        %v1027 = vadd.s32 %v834, %v934
        %v1028 = vadd.s32 %v835, %v934
        %v1029 = vadd.s32 %v836, %v934
        %v1030 = vadd.s32 %v837, %v934
        %v1031 = vadd.s32 %v838, %v934
        %v1032 = vadd.s32 %v839, %v934
        %v1033 = vadd.s32 %v840, %v934
        %v1034 = vadd.s32 %v841, %v934
        %v1035 = vadd.s32 %v842, %v934
        %v1036 = vadd.s32 %v843, %v934
        %v1037 = vadd.s32 %v844, %v934
        %v1038 = vadd.s32 %v845, %v934
        %v1039 = vadd.s32 %v846, %v934
        %v1040 = vadd.s32 %v847, %v934
        %v1041 = vadd.s32 %v848, %v934
        %v1042 = vadd.s32 %v849, %v934
        %v1043 = vadd.s32 %v850, %v934
        %v1044 = vadd.s32 %v851, %v934
        %v1045 = vadd.s32 %v852, %v934
        %v1046 = vadd.s32 %v853, %v934
        %v1047 = vadd.s32 %v854, %v934
        %v1048 = vadd.s32 %v855, %v934
        %v1049 = vadd.s32 %v856, %v934
        %v1050 = vadd.s32 %v857, %v934
        %v1051 = vadd.s32 %v858, %v934
        %v1052 = vadd.s32 %v859, %v934
        %v1053 = vadd.s32 %v860, %v934
        %v1054 = vadd.s32 %v861, %v934
        %v1055 = vadd.s32 %v862, %v934
        %v1056 = vadd.s32 %v863, %v934
        %v1057 = vadd.s32 %v864, %v934
        %v1058 = vadd.s32 %v865, %v934
        %v1059 = vadd.s32 %v866, %v934
        %v1060 = vadd.s32 %v867, %v934
        %v1061 = vadd.s32 %v868, %v934
        %v1062 = vadd.s32 %v869, %v934
        %v1063 = vadd.s32 %v870, %v934
        %v1064 = vadd.s32 %v871, %v934
        %v1065 = vadd.s32 %v872, %v934
        %v1066 = vadd.s32 %v873, %v934
        %v1067 = vadd.s32 %v874, %v934
        %v1068 = vadd.s32 %v875, %v934
        %v1069 = vadd.s32 %v876, %v934
        %v1070 = vadd.s32 %v877, %v934
        %v1071 = vadd.s32 %v878, %v934
        %v1072 = vadd.s32 %v879, %v934
        %v1073 = vadd.s32 %v880, %v934
        %v1074 = vadd.s32 %v881, %v934
        %v1075 = vadd.s32 %v882, %v934
        %v1076 = vadd.s32 %v883, %v934
        %v1077 = vadd.s32 %v884, %v934
        %v1078 = vadd.s32 %v885, %v934
        %v1079 = vadd.s32 %v886, %v934
        %v1080 = vadd.s32 %v887, %v934
        %v1081 = vadd.s32 %v888, %v934
        %v1082 = vadd.s32 %v889, %v934
        %v1083 = vadd.s32 %v890, %v934
        %v1084 = vadd.s32 %v891, %v934
        %v1085 = vadd.s32 %v892, %v934
        %v1086 = vadd.s32 %v893, %v934
        %v1087 = vadd.s32 %v894, %v934
        %v1088 = vadd.s32 %v895, %v934
        %v1089 = vadd.s32 %v896, %v934
        %v1090 = vadd.s32 %v897, %v934
        %v1091 = vadd.s32 %v898, %v934
        %v1092 = vadd.s32 %v899, %v934
        %v1093 = vadd.s32 %v900, %v934
        %v1094 = vadd.s32 %v901, %v934
        %v1095 = vadd.s32 %v902, %v934
        %v1096 = vadd.s32 %v903, %v934
        %v1097 = vadd.s32 %v904, %v934
        %v1098 = vadd.s32 %v905, %v934
        %v1099 = vadd.s32 %v906, %v934
        %v1100 = vadd.s32 %v907, %v934
        %v1101 = vadd.s32 %v908, %v934
        %v1102 = vadd.s32 %v909, %v934
        %v1103 = vadd.s32 %v910, %v934
        %v1104 = vadd.s32 %v911, %v934
        %v1105 = vadd.s32 %v912, %v934
        %v1106 = vadd.s32 %v913, %v934
        %v1107 = vadd.s32 %v914, %v934
        %v1108 = vadd.s32 %v915, %v934
        %v1109 = vadd.s32 %v916, %v934
        %v1110 = vadd.s32 %v917, %v934
        %v1111 = vadd.s32 %v918, %v934
        %v1112 = vadd.s32 %v919, %v934
        %v1113 = vadd.s32 %v920, %v934
        %v1114 = vadd.s32 %v921, %v934
        %v1115 = vadd.s32 %v922, %v934
        %v1116 = vadd.s32 %v923, %v934
        %v1117 = vadd.s32 %v924, %v934
        %v1118 = vadd.s32 %v925, %v934
        %v1119 = vadd.s32 %v926, %v934
        %v1120 = vadd.s32 %v927, %v934
        %v1121 = vadd.s32 %v928, %v934
        %v1122 = vadd.s32 %v929, %v934
        %v1123 = vadd.s32 %v930, %v934
        %v1124 = vadd.s32 %v931, %v934
        %v1125 = vadd.s32 %v932, %v934
        %v1126 = vadd.s32 %v933, %v934
        %v1127 = vmul.u32 %v935, 2654435761
        %v1128 = vmul.u32 %v936, 2654435761
        %v1129 = vmul.u32 %v937, 2654435761
        %v1130 = vmul.u32 %v938, 2654435761
        %v1131 = vmul.u32 %v939, 2654435761
        %v1132 = vmul.u32 %v940, 2654435761
        %v1133 = vmul.u32 %v941, 2654435761
        %v1134 = vmul.u32 %v942, 2654435761
        %v1135 = vmul.u32 %v943, 2654435761
        %v1136 = vmul.u32 %v944, 2654435761
        %v1137 = vmul.u32 %v945, 2654435761
        %v1138 = vmul.u32 %v946, 2654435761
        %v1139 = vmul.u32 %v947, 2654435761
        %v1140 = vmul.u32 %v948, 2654435761
        %v1141 = vmul.u32 %v949, 2654435761
        %v1142 = vmul.u32 %v950, 2654435761
        %v1143 = vmul.u32 %v951, 2654435761
        %v1144 = vmul.u32 %v952, 2654435761
        %v1145 = vmul.u32 %v953, 2654435761
        %v1146 = vmul.u32 %v954, 2654435761
        %v1147 = vmul.u32 %v955, 2654435761
        %v1148 = vmul.u32 %v956, 2654435761
        %v1149 = vmul.u32 %v957, 2654435761
        %v1150 = vmul.u32 %v958, 2654435761
        %v1151 = vmul.u32 %v959, 2654435761
        %v1152 = vmul.u32 %v960, 2654435761
        %v1153 = vmul.u32 %v961, 2654435761
        %v1154 = vmul.u32 %v962, 2654435761
        %v1155 = vmul.u32 %v963, 2654435761
        %v1156 = vmul.u32 %v964, 2654435761
        %v1157 = vmul.u32 %v965, 2654435761
        %v1158 = vmul.u32 %v966, 2654435761
        %v1159 = vmul.u32 %v967, 2654435761
        %v1160 = vmul.u32 %v968, 2654435761
        %v1161 = vmul.u32 %v969, 2654435761
        %v1162 = vmul.u32 %v970, 2654435761
        %v1163 = vmul.u32 %v971, 2654435761
        %v1164 = vmul.u32 %v972, 2654435761
        %v1165 = vmul.u32 %v973, 2654435761
        %v1166 = vmul.u32 %v974, 2654435761
        %v1167 = vmul.u32 %v975, 2654435761
        %v1168 = vmul.u32 %v976, 2654435761
        %v1169 = vmul.u32 %v977, 2654435761
        %v1170 = vmul.u32 %v978, 2654435761
        %v1171 = vmul.u32 %v979, 2654435761
        %v1172 = vmul.u32 %v980, 2654435761
        %v1173 = vmul.u32 %v981, 2654435761
        %v1174 = vmul.u32 %v982, 2654435761
        %v1175 = vmul.u32 %v983, 2654435761
        %v1176 = vmul.u32 %v984, 2654435761
        %v1177 = vmul.u32 %v985, 2654435761
        %v1178 = vmul.u32 %v986, 2654435761
        %v1179 = vmul.u32 %v987, 2654435761
        %v1180 = vmul.u32 %v988, 2654435761
        %v1181 = vmul.u32 %v989, 2654435761
        %v1182 = vmul.u32 %v990, 2654435761
        %v1183 = vmul.u32 %v991, 2654435761
        %v1184 = vmul.u32 %v992, 2654435761
        %v1185 = vmul.u32 %v993, 2654435761
        %v1186 = vmul.u32 %v994, 2654435761
        %v1187 = vmul.u32 %v995, 2654435761
        %v1188 = vmul.u32 %v996, 2654435761
        %v1189 = vmul.u32 %v997, 2654435761
        %v1190 = vmul.u32 %v998, 2654435761
        %v1191 = vmul.u32 %v999, 2654435761
        %v1192 = vmul.u32 %v1000, 2654435761
        %v1193 = vmul.u32 %v1001, 2654435761
        %v1194 = vmul.u32 %v1002, 2654435761
        %v1195 = vmul.u32 %v1003, 2654435761
        %v1196 = vmul.u32 %v1004, 2654435761
        %v1197 = vmul.u32 %v1005, 2654435761
        %v1198 = vmul.u32 %v1006, 2654435761
        %v1199 = vmul.u32 %v1007, 2654435761
        %v1200 = vmul.u32 %v1008, 2654435761
        %v1201 = vmul.u32 %v1009, 2654435761
        %v1202 = vmul.u32 %v1010, 2654435761
        %v1203 = vmul.u32 %v1011, 2654435761
        %v1204 = vmul.u32 %v1012, 2654435761
        %v1205 = vmul.u32 %v1013, 2654435761
        %v1206 = vmul.u32 %v1014, 2654435761
        %v1207 = vmul.u32 %v1015, 2654435761
        %v1208 = vmul.u32 %v1016, 2654435761
        %v1209 = vmul.u32 %v1017, 2654435761
        %v1210 = vmul.u32 %v1018, 2654435761
        %v1211 = vmul.u32 %v1019, 2654435761
        %v1212 = vmul.u32 %v1020, 2654435761
        %v1213 = vmul.u32 %v1021, 2654435761
        %v1214 = vmul.u32 %v1022, 2654435761
        %v1215 = vmul.u32 %v1023, 2654435761
        %v1216 = vmul.u32 %v1024, 2654435761
        %v1217 = vmul.u32 %v1025, 2654435761
        %v1218 = vmul.u32 %v1026, 2654435761
        %v1219 = vmul.u32 %v1027, 2654435761
        %v1220 = vmul.u32 %v1028, 2654435761
        %v1221 = vmul.u32 %v1029, 2654435761
        %v1222 = vmul.u32 %v1030, 2654435761
        %v1223 = vmul.u32 %v1031, 2654435761
        %v1224 = vmul.u32 %v1032, 2654435761
        %v1225 = vmul.u32 %v1033, 2654435761
        %v1226 = vmul.u32 %v1034, 2654435761
        %v1227 = vmul.u32 %v1035, 2654435761
        %v1228 = vmul.u32 %v1036, 2654435761
        %v1229 = vmul.u32 %v1037, 2654435761
        %v1230 = vmul.u32 %v1038, 2654435761
        %v1231 = vmul.u32 %v1039, 2654435761
        %v1232 = vmul.u32 %v1040, 2654435761
        %v1233 = vmul.u32 %v1041, 2654435761
        %v1234 = vmul.u32 %v1042, 2654435761
        %v1235 = vmul.u32 %v1043, 2654435761
        %v1236 = vmul.u32 %v1044, 2654435761
        %v1237 = vmul.u32 %v1045, 2654435761
        %v1238 = vmul.u32 %v1046, 2654435761
        %v1239 = vmul.u32 %v1047, 2654435761
        %v1240 = vmul.u32 %v1048, 2654435761
        %v1241 = vmul.u32 %v1049, 2654435761
        %v1242 = vmul.u32 %v1050, 2654435761
        %v1243 = vmul.u32 %v1051, 2654435761
        %v1244 = vmul.u32 %v1052, 2654435761
        %v1245 = vmul.u32 %v1053, 2654435761
        %v1246 = vmul.u32 %v1054, 2654435761
        %v1247 = vmul.u32 %v1055, 2654435761
        %v1248 = vmul.u32 %v1056, 2654435761
        %v1249 = vmul.u32 %v1057, 2654435761
        %v1250 = vmul.u32 %v1058, 2654435761
        %v1251 = vmul.u32 %v1059, 2654435761
        %v1252 = vmul.u32 %v1060, 2654435761
        %v1253 = vmul.u32 %v1061, 2654435761
        %v1254 = vmul.u32 %v1062, 2654435761
        %v1255 = vmul.u32 %v1063, 2654435761
        %v1256 = vmul.u32 %v1064, 2654435761
        %v1257 = vmul.u32 %v1065, 2654435761
        %v1258 = vmul.u32 %v1066, 2654435761
        %v1259 = vmul.u32 %v1067, 2654435761
        %v1260 = vmul.u32 %v1068, 2654435761
        %v1261 = vmul.u32 %v1069, 2654435761
        %v1262 = vmul.u32 %v1070, 2654435761
        %v1263 = vmul.u32 %v1071, 2654435761
        %v1264 = vmul.u32 %v1072, 2654435761
        %v1265 = vmul.u32 %v1073, 2654435761
        %v1266 = vmul.u32 %v1074, 2654435761
        %v1267 = vmul.u32 %v1075, 2654435761
        %v1268 = vmul.u32 %v1076, 2654435761
        %v1269 = vmul.u32 %v1077, 2654435761
        %v1270 = vmul.u32 %v1078, 2654435761
        %v1271 = vmul.u32 %v1079, 2654435761
        %v1272 = vmul.u32 %v1080, 2654435761
        %v1273 = vmul.u32 %v1081, 2654435761
        %v1274 = vmul.u32 %v1082, 2654435761
        %v1275 = vmul.u32 %v1083, 2654435761
        %v1276 = vmul.u32 %v1084, 2654435761
        %v1277 = vmul.u32 %v1085, 2654435761
        %v1278 = vmul.u32 %v1086, 2654435761
        %v1279 = vmul.u32 %v1087, 2654435761
        %v1280 = vmul.u32 %v1088, 2654435761
        %v1281 = vmul.u32 %v1089, 2654435761
        %v1282 = vmul.u32 %v1090, 2654435761
        %v1283 = vmul.u32 %v1091, 2654435761
        %v1284 = vmul.u32 %v1092, 2654435761
        %v1285 = vmul.u32 %v1093, 2654435761
        %v1286 = vmul.u32 %v1094, 2654435761
        %v1287 = vmul.u32 %v1095, 2654435761
        %v1288 = vmul.u32 %v1096, 2654435761
        %v1289 = vmul.u32 %v1097, 2654435761
        %v1290 = vmul.u32 %v1098, 2654435761
        %v1291 = vmul.u32 %v1099, 2654435761
        %v1292 = vmul.u32 %v1100, 2654435761
        %v1293 = vmul.u32 %v1101, 2654435761
        %v1294 = vmul.u32 %v1102, 2654435761
        %v1295 = vmul.u32 %v1103, 2654435761
        %v1296 = vmul.u32 %v1104, 2654435761
        %v1297 = vmul.u32 %v1105, 2654435761
        %v1298 = vmul.u32 %v1106, 2654435761
        %v1299 = vmul.u32 %v1107, 2654435761
        %v1300 = vmul.u32 %v1108, 2654435761
        %v1301 = vmul.u32 %v1109, 2654435761
        %v1302 = vmul.u32 %v1110, 2654435761
        %v1303 = vmul.u32 %v1111, 2654435761
        %v1304 = vmul.u32 %v1112, 2654435761
        %v1305 = vmul.u32 %v1113, 2654435761
        %v1306 = vmul.u32 %v1114, 2654435761
        %v1307 = vmul.u32 %v1115, 2654435761
        %v1308 = vmul.u32 %v1116, 2654435761
        %v1309 = vmul.u32 %v1117, 2654435761
        %v1310 = vmul.u32 %v1118, 2654435761
        %v1311 = vmul.u32 %v1119, 2654435761
        %v1312 = vmul.u32 %v1120, 2654435761
        %v1313 = vmul.u32 %v1121, 2654435761
        %v1314 = vmul.u32 %v1122, 2654435761
        %v1315 = vmul.u32 %v1123, 2654435761
        %v1316 = vmul.u32 %v1124, 2654435761
        %v1317 = vmul.u32 %v1125, 2654435761
        %v1318 = vmul.u32 %v1126, 2654435761
        %v1319 = vshrl.u32 %v1127, 16
        %v1320 = vshrl.u32 %v1128, 16
        %v1321 = vshrl.u32 %v1129, 16
        %v1322 = vshrl.u32 %v1130, 16
        %v1323 = vshrl.u32 %v1131, 16
        %v1324 = vshrl.u32 %v1132, 16
        %v1325 = vshrl.u32 %v1133, 16
        %v1326 = vshrl.u32 %v1134, 16
        %v1327 = vshrl.u32 %v1135, 16
        %v1328 = vshrl.u32 %v1136, 16
        %v1329 = vshrl.u32 %v1137, 16
        %v1330 = vshrl.u32 %v1138, 16
        %v1331 = vshrl.u32 %v1139, 16
        %v1332 = vshrl.u32 %v1140, 16
        %v1333 = vshrl.u32 %v1141, 16
        %v1334 = vshrl.u32 %v1142, 16
        %v1335 = vshrl.u32 %v1143, 16
        %v1336 = vshrl.u32 %v1144, 16
        %v1337 = vshrl.u32 %v1145, 16
        %v1338 = vshrl.u32 %v1146, 16
        %v1339 = vshrl.u32 %v1147, 16
        %v1340 = vshrl.u32 %v1148, 16
        %v1341 = vshrl.u32 %v1149, 16
        %v1342 = vshrl.u32 %v1150, 16
        %v1343 = vshrl.u32 %v1151, 16
        %v1344 = vshrl.u32 %v1152, 16
        %v1345 = vshrl.u32 %v1153, 16
        %v1346 = vshrl.u32 %v1154, 16
        %v1347 = vshrl.u32 %v1155, 16
        %v1348 = vshrl.u32 %v1156, 16
        %v1349 = vshrl.u32 %v1157, 16
        %v1350 = vshrl.u32 %v1158, 16
        %v1351 = vshrl.u32 %v1159, 16
        %v1352 = vshrl.u32 %v1160, 16
        %v1353 = vshrl.u32 %v1161, 16
        %v1354 = vshrl.u32 %v1162, 16
        %v1355 = vshrl.u32 %v1163, 16
        %v1356 = vshrl.u32 %v1164, 16
        %v1357 = vshrl.u32 %v1165, 16
        %v1358 = vshrl.u32 %v1166, 16
        %v1359 = vshrl.u32 %v1167, 16
        %v1360 = vshrl.u32 %v1168, 16
        %v1361 = vshrl.u32 %v1169, 16
        %v1362 = vshrl.u32 %v1170, 16
        %v1363 = vshrl.u32 %v1171, 16
        %v1364 = vshrl.u32 %v1172, 16
        %v1365 = vshrl.u32 %v1173, 16
        %v1366 = vshrl.u32 %v1174, 16
        %v1367 = vshrl.u32 %v1175, 16
        %v1368 = vshrl.u32 %v1176, 16
        %v1369 = vshrl.u32 %v1177, 16
        %v1370 = vshrl.u32 %v1178, 16
        %v1371 = vshrl.u32 %v1179, 16
        %v1372 = vshrl.u32 %v1180, 16
        %v1373 = vshrl.u32 %v1181, 16
        %v1374 = vshrl.u32 %v1182, 16
        %v1375 = vshrl.u32 %v1183, 16
        %v1376 = vshrl.u32 %v1184, 16
        %v1377 = vshrl.u32 %v1185, 16
        %v1378 = vshrl.u32 %v1186, 16
        %v1379 = vshrl.u32 %v1187, 16
        %v1380 = vshrl.u32 %v1188, 16
        %v1381 = vshrl.u32 %v1189, 16
        %v1382 = vshrl.u32 %v1190, 16
        %v1383 = vshrl.u32 %v1191, 16
        %v1384 = vshrl.u32 %v1192, 16
        %v1385 = vshrl.u32 %v1193, 16
        %v1386 = vshrl.u32 %v1194, 16
        %v1387 = vshrl.u32 %v1195, 16
        %v1388 = vshrl.u32 %v1196, 16
        %v1389 = vshrl.u32 %v1197, 16
        %v1390 = vshrl.u32 %v1198, 16
        %v1391 = vshrl.u32 %v1199, 16
        %v1392 = vshrl.u32 %v1200, 16
        %v1393 = vshrl.u32 %v1201, 16
        %v1394 = vshrl.u32 %v1202, 16
        %v1395 = vshrl.u32 %v1203, 16
        %v1396 = vshrl.u32 %v1204, 16
        %v1397 = vshrl.u32 %v1205, 16
        %v1398 = vshrl.u32 %v1206, 16
        %v1399 = vshrl.u32 %v1207, 16
        %v1400 = vshrl.u32 %v1208, 16
        %v1401 = vshrl.u32 %v1209, 16
        %v1402 = vshrl.u32 %v1210, 16
        %v1403 = vshrl.u32 %v1211, 16
        %v1404 = vshrl.u32 %v1212, 16
        %v1405 = vshrl.u32 %v1213, 16
        %v1406 = vshrl.u32 %v1214, 16
        %v1407 = vshrl.u32 %v1215, 16
        %v1408 = vshrl.u32 %v1216, 16
        %v1409 = vshrl.u32 %v1217, 16
        %v1410 = vshrl.u32 %v1218, 16
        %v1411 = vshrl.u32 %v1219, 16
        %v1412 = vshrl.u32 %v1220, 16
        %v1413 = vshrl.u32 %v1221, 16
        %v1414 = vshrl.u32 %v1222, 16
        %v1415 = vshrl.u32 %v1223, 16
        %v1416 = vshrl.u32 %v1224, 16
        %v1417 = vshrl.u32 %v1225, 16
        %v1418 = vshrl.u32 %v1226, 16
        %v1419 = vshrl.u32 %v1227, 16
        %v1420 = vshrl.u32 %v1228, 16
        %v1421 = vshrl.u32 %v1229, 16
        %v1422 = vshrl.u32 %v1230, 16
        %v1423 = vshrl.u32 %v1231, 16
        %v1424 = vshrl.u32 %v1232, 16
        %v1425 = vshrl.u32 %v1233, 16
        %v1426 = vshrl.u32 %v1234, 16
        %v1427 = vshrl.u32 %v1235, 16
        %v1428 = vshrl.u32 %v1236, 16
        %v1429 = vshrl.u32 %v1237, 16
        %v1430 = vshrl.u32 %v1238, 16
        %v1431 = vshrl.u32 %v1239, 16
        %v1432 = vshrl.u32 %v1240, 16
        %v1433 = vshrl.u32 %v1241, 16
        %v1434 = vshrl.u32 %v1242, 16
        %v1435 = vshrl.u32 %v1243, 16
        %v1436 = vshrl.u32 %v1244, 16
        %v1437 = vshrl.u32 %v1245, 16
        %v1438 = vshrl.u32 %v1246, 16
        %v1439 = vshrl.u32 %v1247, 16
        %v1440 = vshrl.u32 %v1248, 16
        %v1441 = vshrl.u32 %v1249, 16
        %v1442 = vshrl.u32 %v1250, 16
        %v1443 = vshrl.u32 %v1251, 16
        %v1444 = vshrl.u32 %v1252, 16
        %v1445 = vshrl.u32 %v1253, 16
        %v1446 = vshrl.u32 %v1254, 16
        %v1447 = vshrl.u32 %v1255, 16
        %v1448 = vshrl.u32 %v1256, 16
        %v1449 = vshrl.u32 %v1257, 16
        %v1450 = vshrl.u32 %v1258, 16
        %v1451 = vshrl.u32 %v1259, 16
        %v1452 = vshrl.u32 %v1260, 16
        %v1453 = vshrl.u32 %v1261, 16
        %v1454 = vshrl.u32 %v1262, 16
        %v1455 = vshrl.u32 %v1263, 16
        %v1456 = vshrl.u32 %v1264, 16
        %v1457 = vshrl.u32 %v1265, 16
        %v1458 = vshrl.u32 %v1266, 16
        %v1459 = vshrl.u32 %v1267, 16
        %v1460 = vshrl.u32 %v1268, 16
        %v1461 = vshrl.u32 %v1269, 16
        %v1462 = vshrl.u32 %v1270, 16
        %v1463 = vshrl.u32 %v1271, 16
        %v1464 = vshrl.u32 %v1272, 16
        %v1465 = vshrl.u32 %v1273, 16
        %v1466 = vshrl.u32 %v1274, 16
        %v1467 = vshrl.u32 %v1275, 16
        %v1468 = vshrl.u32 %v1276, 16
        %v1469 = vshrl.u32 %v1277, 16
        %v1470 = vshrl.u32 %v1278, 16
        %v1471 = vshrl.u32 %v1279, 16
        %v1472 = vshrl.u32 %v1280, 16
        %v1473 = vshrl.u32 %v1281, 16
        %v1474 = vshrl.u32 %v1282, 16
        %v1475 = vshrl.u32 %v1283, 16
        %v1476 = vshrl.u32 %v1284, 16
        %v1477 = vshrl.u32 %v1285, 16
        %v1478 = vshrl.u32 %v1286, 16
        %v1479 = vshrl.u32 %v1287, 16
        %v1480 = vshrl.u32 %v1288, 16
        %v1481 = vshrl.u32 %v1289, 16
        %v1482 = vshrl.u32 %v1290, 16
        %v1483 = vshrl.u32 %v1291, 16
        %v1484 = vshrl.u32 %v1292, 16
        %v1485 = vshrl.u32 %v1293, 16
        %v1486 = vshrl.u32 %v1294, 16
        %v1487 = vshrl.u32 %v1295, 16
        %v1488 = vshrl.u32 %v1296, 16
        %v1489 = vshrl.u32 %v1297, 16
        %v1490 = vshrl.u32 %v1298, 16
        %v1491 = vshrl.u32 %v1299, 16
        %v1492 = vshrl.u32 %v1300, 16
        %v1493 = vshrl.u32 %v1301, 16
        %v1494 = vshrl.u32 %v1302, 16
        %v1495 = vshrl.u32 %v1303, 16
        %v1496 = vshrl.u32 %v1304, 16
        %v1497 = vshrl.u32 %v1305, 16
        %v1498 = vshrl.u32 %v1306, 16
        %v1499 = vshrl.u32 %v1307, 16
        %v1500 = vshrl.u32 %v1308, 16
        %v1501 = vshrl.u32 %v1309, 16
        %v1502 = vshrl.u32 %v1310, 16
        %v1503 = vshrl.u32 %v1311, 16
        %v1504 = vshrl.u32 %v1312, 16
        %v1505 = vshrl.u32 %v1313, 16
        %v1506 = vshrl.u32 %v1314, 16
        %v1507 = vshrl.u32 %v1315, 16
        %v1508 = vshrl.u32 %v1316, 16
        %v1509 = vshrl.u32 %v1317, 16
        %v1510 = vshrl.u32 %v1318, 16
        %v1511 = vxor.u32 %v1127, %v1319
        %v1512 = vxor.u32 %v1128, %v1320
        %v1513 = vxor.u32 %v1129, %v1321
        %v1514 = vxor.u32 %v1130, %v1322
        %v1515 = vxor.u32 %v1131, %v1323
        %v1516 = vxor.u32 %v1132, %v1324
        %v1517 = vxor.u32 %v1133, %v1325
        %v1518 = vxor.u32 %v1134, %v1326
        %v1519 = vxor.u32 %v1135, %v1327
        %v1520 = vxor.u32 %v1136, %v1328
        %v1521 = vxor.u32 %v1137, %v1329
        %v1522 = vxor.u32 %v1138, %v1330
        %v1523 = vxor.u32 %v1139, %v1331
        %v1524 = vxor.u32 %v1140, %v1332
        %v1525 = vxor.u32 %v1141, %v1333
        %v1526 = vxor.u32 %v1142, %v1334
        %v1527 = vxor.u32 %v1143, %v1335
        %v1528 = vxor.u32 %v1144, %v1336
        %v1529 = vxor.u32 %v1145, %v1337
        %v1530 = vxor.u32 %v1146, %v1338
        %v1531 = vxor.u32 %v1147, %v1339
        %v1532 = vxor.u32 %v1148, %v1340
        %v1533 = vxor.u32 %v1149, %v1341
        %v1534 = vxor.u32 %v1150, %v1342
        %v1535 = vxor.u32 %v1151, %v1343
        %v1536 = vxor.u32 %v1152, %v1344
        %v1537 = vxor.u32 %v1153, %v1345
        %v1538 = vxor.u32 %v1154, %v1346
        %v1539 = vxor.u32 %v1155, %v1347
        %v1540 = vxor.u32 %v1156, %v1348
        %v1541 = vxor.u32 %v1157, %v1349
        %v1542 = vxor.u32 %v1158, %v1350
        %v1543 = vxor.u32 %v1159, %v1351
        %v1544 = vxor.u32 %v1160, %v1352
        %v1545 = vxor.u32 %v1161, %v1353
        %v1546 = vxor.u32 %v1162, %v1354
        %v1547 = vxor.u32 %v1163, %v1355
        %v1548 = vxor.u32 %v1164, %v1356
        %v1549 = vxor.u32 %v1165, %v1357
        %v1550 = vxor.u32 %v1166, %v1358
        %v1551 = vxor.u32 %v1167, %v1359
        %v1552 = vxor.u32 %v1168, %v1360
        %v1553 = vxor.u32 %v1169, %v1361
        %v1554 = vxor.u32 %v1170, %v1362
        %v1555 = vxor.u32 %v1171, %v1363
        %v1556 = vxor.u32 %v1172, %v1364
        %v1557 = vxor.u32 %v1173, %v1365
        %v1558 = vxor.u32 %v1174, %v1366
        %v1559 = vxor.u32 %v1175, %v1367
        %v1560 = vxor.u32 %v1176, %v1368
        %v1561 = vxor.u32 %v1177, %v1369
        %v1562 = vxor.u32 %v1178, %v1370
        %v1563 = vxor.u32 %v1179, %v1371
        %v1564 = vxor.u32 %v1180, %v1372
        %v1565 = vxor.u32 %v1181, %v1373
        %v1566 = vxor.u32 %v1182, %v1374
        %v1567 = vxor.u32 %v1183, %v1375
        %v1568 = vxor.u32 %v1184, %v1376
        %v1569 = vxor.u32 %v1185, %v1377
        %v1570 = vxor.u32 %v1186, %v1378
        %v1571 = vxor.u32 %v1187, %v1379
        %v1572 = vxor.u32 %v1188, %v1380
        %v1573 = vxor.u32 %v1189, %v1381
        %v1574 = vxor.u32 %v1190, %v1382
        %v1575 = vxor.u32 %v1191, %v1383
        %v1576 = vxor.u32 %v1192, %v1384
        %v1577 = vxor.u32 %v1193, %v1385
        %v1578 = vxor.u32 %v1194, %v1386
        %v1579 = vxor.u32 %v1195, %v1387
        %v1580 = vxor.u32 %v1196, %v1388
        %v1581 = vxor.u32 %v1197, %v1389
        %v1582 = vxor.u32 %v1198, %v1390
        %v1583 = vxor.u32 %v1199, %v1391
        %v1584 = vxor.u32 %v1200, %v1392
        %v1585 = vxor.u32 %v1201, %v1393
        %v1586 = vxor.u32 %v1202, %v1394
        %v1587 = vxor.u32 %v1203, %v1395
        %v1588 = vxor.u32 %v1204, %v1396
        %v1589 = vxor.u32 %v1205, %v1397
        %v1590 = vxor.u32 %v1206, %v1398
        %v1591 = vxor.u32 %v1207, %v1399
        %v1592 = vxor.u32 %v1208, %v1400
        %v1593 = vxor.u32 %v1209, %v1401
        %v1594 = vxor.u32 %v1210, %v1402
        %v1595 = vxor.u32 %v1211, %v1403
        %v1596 = vxor.u32 %v1212, %v1404
        %v1597 = vxor.u32 %v1213, %v1405
        %v1598 = vxor.u32 %v1214, %v1406
        %v1599 = vxor.u32 %v1215, %v1407
        %v1600 = vxor.u32 %v1216, %v1408
        %v1601 = vxor.u32 %v1217, %v1409
        %v1602 = vxor.u32 %v1218, %v1410
        %v1603 = vxor.u32 %v1219, %v1411
        %v1604 = vxor.u32 %v1220, %v1412
        %v1605 = vxor.u32 %v1221, %v1413
        %v1606 = vxor.u32 %v1222, %v1414
        %v1607 = vxor.u32 %v1223, %v1415
        %v1608 = vxor.u32 %v1224, %v1416
        %v1609 = vxor.u32 %v1225, %v1417
        %v1610 = vxor.u32 %v1226, %v1418
        %v1611 = vxor.u32 %v1227, %v1419
        %v1612 = vxor.u32 %v1228, %v1420
        %v1613 = vxor.u32 %v1229, %v1421
        %v1614 = vxor.u32 %v1230, %v1422
        %v1615 = vxor.u32 %v1231, %v1423
        %v1616 = vxor.u32 %v1232, %v1424
        %v1617 = vxor.u32 %v1233, %v1425
        %v1618 = vxor.u32 %v1234, %v1426
        %v1619 = vxor.u32 %v1235, %v1427
        %v1620 = vxor.u32 %v1236, %v1428
        %v1621 = vxor.u32 %v1237, %v1429
        %v1622 = vxor.u32 %v1238, %v1430
        %v1623 = vxor.u32 %v1239, %v1431
        %v1624 = vxor.u32 %v1240, %v1432
        %v1625 = vxor.u32 %v1241, %v1433
        %v1626 = vxor.u32 %v1242, %v1434
        %v1627 = vxor.u32 %v1243, %v1435
        %v1628 = vxor.u32 %v1244, %v1436
        %v1629 = vxor.u32 %v1245, %v1437
        %v1630 = vxor.u32 %v1246, %v1438
        %v1631 = vxor.u32 %v1247, %v1439
        %v1632 = vxor.u32 %v1248, %v1440
        %v1633 = vxor.u32 %v1249, %v1441
        %v1634 = vxor.u32 %v1250, %v1442
        %v1635 = vxor.u32 %v1251, %v1443
        %v1636 = vxor.u32 %v1252, %v1444
        %v1637 = vxor.u32 %v1253, %v1445
        %v1638 = vxor.u32 %v1254, %v1446
        %v1639 = vxor.u32 %v1255, %v1447
        %v1640 = vxor.u32 %v1256, %v1448
        %v1641 = vxor.u32 %v1257, %v1449
        %v1642 = vxor.u32 %v1258, %v1450
        %v1643 = vxor.u32 %v1259, %v1451
        %v1644 = vxor.u32 %v1260, %v1452
        %v1645 = vxor.u32 %v1261, %v1453
        %v1646 = vxor.u32 %v1262, %v1454
        %v1647 = vxor.u32 %v1263, %v1455
        %v1648 = vxor.u32 %v1264, %v1456
        %v1649 = vxor.u32 %v1265, %v1457
        %v1650 = vxor.u32 %v1266, %v1458
        %v1651 = vxor.u32 %v1267, %v1459
        %v1652 = vxor.u32 %v1268, %v1460
        %v1653 = vxor.u32 %v1269, %v1461
        %v1654 = vxor.u32 %v1270, %v1462
        %v1655 = vxor.u32 %v1271, %v1463
        %v1656 = vxor.u32 %v1272, %v1464
        %v1657 = vxor.u32 %v1273, %v1465
        %v1658 = vxor.u32 %v1274, %v1466
        %v1659 = vxor.u32 %v1275, %v1467
        %v1660 = vxor.u32 %v1276, %v1468
        %v1661 = vxor.u32 %v1277, %v1469
        %v1662 = vxor.u32 %v1278, %v1470
        %v1663 = vxor.u32 %v1279, %v1471
        %v1664 = vxor.u32 %v1280, %v1472
        %v1665 = vxor.u32 %v1281, %v1473
        %v1666 = vxor.u32 %v1282, %v1474
        %v1667 = vxor.u32 %v1283, %v1475
        %v1668 = vxor.u32 %v1284, %v1476
        %v1669 = vxor.u32 %v1285, %v1477
        %v1670 = vxor.u32 %v1286, %v1478
        %v1671 = vxor.u32 %v1287, %v1479
        %v1672 = vxor.u32 %v1288, %v1480
        %v1673 = vxor.u32 %v1289, %v1481
        %v1674 = vxor.u32 %v1290, %v1482
        %v1675 = vxor.u32 %v1291, %v1483
        %v1676 = vxor.u32 %v1292, %v1484
        %v1677 = vxor.u32 %v1293, %v1485
        %v1678 = vxor.u32 %v1294, %v1486
        %v1679 = vxor.u32 %v1295, %v1487
        %v1680 = vxor.u32 %v1296, %v1488
        %v1681 = vxor.u32 %v1297, %v1489
        %v1682 = vxor.u32 %v1298, %v1490
        %v1683 = vxor.u32 %v1299, %v1491
        %v1684 = vxor.u32 %v1300, %v1492
        %v1685 = vxor.u32 %v1301, %v1493
        %v1686 = vxor.u32 %v1302, %v1494
        %v1687 = vxor.u32 %v1303, %v1495
        %v1688 = vxor.u32 %v1304, %v1496
        %v1689 = vxor.u32 %v1305, %v1497
        %v1690 = vxor.u32 %v1306, %v1498
        %v1691 = vxor.u32 %v1307, %v1499
        %v1692 = vxor.u32 %v1308, %v1500
        %v1693 = vxor.u32 %v1309, %v1501
        %v1694 = vxor.u32 %v1310, %v1502
        %v1695 = vxor.u32 %v1311, %v1503
        %v1696 = vxor.u32 %v1312, %v1504
        %v1697 = vxor.u32 %v1313, %v1505
        %v1698 = vxor.u32 %v1314, %v1506
        %v1699 = vxor.u32 %v1315, %v1507
        %v1700 = vxor.u32 %v1316, %v1508
        %v1701 = vxor.u32 %v1317, %v1509
        %v1702 = vxor.u32 %v1318, %v1510
        %v1703 = vmul.u32 %v1511, 2246822519
        %v1704 = vmul.u32 %v1512, 2246822519
        %v1705 = vmul.u32 %v1513, 2246822519
        %v1706 = vmul.u32 %v1514, 2246822519
        %v1707 = vmul.u32 %v1515, 2246822519
        %v1708 = vmul.u32 %v1516, 2246822519
        %v1709 = vmul.u32 %v1517, 2246822519
        %v1710 = vmul.u32 %v1518, 2246822519
        %v1711 = vmul.u32 %v1519, 2246822519
        %v1712 = vmul.u32 %v1520, 2246822519
        %v1713 = vmul.u32 %v1521, 2246822519
        %v1714 = vmul.u32 %v1522, 2246822519
        %v1715 = vmul.u32 %v1523, 2246822519
        %v1716 = vmul.u32 %v1524, 2246822519
        %v1717 = vmul.u32 %v1525, 2246822519
        %v1718 = vmul.u32 %v1526, 2246822519
        %v1719 = vmul.u32 %v1527, 2246822519
        %v1720 = vmul.u32 %v1528, 2246822519
        %v1721 = vmul.u32 %v1529, 2246822519
        %v1722 = vmul.u32 %v1530, 2246822519
        %v1723 = vmul.u32 %v1531, 2246822519
        %v1724 = vmul.u32 %v1532, 2246822519
        %v1725 = vmul.u32 %v1533, 2246822519
        %v1726 = vmul.u32 %v1534, 2246822519
        %v1727 = vmul.u32 %v1535, 2246822519
        %v1728 = vmul.u32 %v1536, 2246822519
        %v1729 = vmul.u32 %v1537, 2246822519
        %v1730 = vmul.u32 %v1538, 2246822519
        %v1731 = vmul.u32 %v1539, 2246822519
        %v1732 = vmul.u32 %v1540, 2246822519
        %v1733 = vmul.u32 %v1541, 2246822519
        %v1734 = vmul.u32 %v1542, 2246822519
        %v1735 = vmul.u32 %v1543, 2246822519
        %v1736 = vmul.u32 %v1544, 2246822519
        %v1737 = vmul.u32 %v1545, 2246822519
        %v1738 = vmul.u32 %v1546, 2246822519
        %v1739 = vmul.u32 %v1547, 2246822519
        %v1740 = vmul.u32 %v1548, 2246822519
        %v1741 = vmul.u32 %v1549, 2246822519
        %v1742 = vmul.u32 %v1550, 2246822519
        %v1743 = vmul.u32 %v1551, 2246822519
        %v1744 = vmul.u32 %v1552, 2246822519
        %v1745 = vmul.u32 %v1553, 2246822519
        %v1746 = vmul.u32 %v1554, 2246822519
        %v1747 = vmul.u32 %v1555, 2246822519
        %v1748 = vmul.u32 %v1556, 2246822519
        %v1749 = vmul.u32 %v1557, 2246822519
        %v1750 = vmul.u32 %v1558, 2246822519
        %v1751 = vmul.u32 %v1559, 2246822519
        %v1752 = vmul.u32 %v1560, 2246822519
        %v1753 = vmul.u32 %v1561, 2246822519
        %v1754 = vmul.u32 %v1562, 2246822519
        %v1755 = vmul.u32 %v1563, 2246822519
        %v1756 = vmul.u32 %v1564, 2246822519
        %v1757 = vmul.u32 %v1565, 2246822519
        %v1758 = vmul.u32 %v1566, 2246822519
        %v1759 = vmul.u32 %v1567, 2246822519
        %v1760 = vmul.u32 %v1568, 2246822519
        %v1761 = vmul.u32 %v1569, 2246822519
        %v1762 = vmul.u32 %v1570, 2246822519
        %v1763 = vmul.u32 %v1571, 2246822519
        %v1764 = vmul.u32 %v1572, 2246822519
        %v1765 = vmul.u32 %v1573, 2246822519
        %v1766 = vmul.u32 %v1574, 2246822519
        %v1767 = vmul.u32 %v1575, 2246822519
        %v1768 = vmul.u32 %v1576, 2246822519
        %v1769 = vmul.u32 %v1577, 2246822519
        %v1770 = vmul.u32 %v1578, 2246822519
        %v1771 = vmul.u32 %v1579, 2246822519
        %v1772 = vmul.u32 %v1580, 2246822519
        %v1773 = vmul.u32 %v1581, 2246822519
        %v1774 = vmul.u32 %v1582, 2246822519
        %v1775 = vmul.u32 %v1583, 2246822519
        %v1776 = vmul.u32 %v1584, 2246822519
        %v1777 = vmul.u32 %v1585, 2246822519
        %v1778 = vmul.u32 %v1586, 2246822519
        %v1779 = vmul.u32 %v1587, 2246822519
        %v1780 = vmul.u32 %v1588, 2246822519
        %v1781 = vmul.u32 %v1589, 2246822519
        %v1782 = vmul.u32 %v1590, 2246822519
        %v1783 = vmul.u32 %v1591, 2246822519
        %v1784 = vmul.u32 %v1592, 2246822519
        %v1785 = vmul.u32 %v1593, 2246822519
        %v1786 = vmul.u32 %v1594, 2246822519
        %v1787 = vmul.u32 %v1595, 2246822519
        %v1788 = vmul.u32 %v1596, 2246822519
        %v1789 = vmul.u32 %v1597, 2246822519
        %v1790 = vmul.u32 %v1598, 2246822519
        %v1791 = vmul.u32 %v1599, 2246822519
        %v1792 = vmul.u32 %v1600, 2246822519
        %v1793 = vmul.u32 %v1601, 2246822519
        %v1794 = vmul.u32 %v1602, 2246822519
        %v1795 = vmul.u32 %v1603, 2246822519
        %v1796 = vmul.u32 %v1604, 2246822519
        %v1797 = vmul.u32 %v1605, 2246822519
        %v1798 = vmul.u32 %v1606, 2246822519
        %v1799 = vmul.u32 %v1607, 2246822519
        %v1800 = vmul.u32 %v1608, 2246822519
        %v1801 = vmul.u32 %v1609, 2246822519
        %v1802 = vmul.u32 %v1610, 2246822519
        %v1803 = vmul.u32 %v1611, 2246822519
        %v1804 = vmul.u32 %v1612, 2246822519
        %v1805 = vmul.u32 %v1613, 2246822519
        %v1806 = vmul.u32 %v1614, 2246822519
        %v1807 = vmul.u32 %v1615, 2246822519
        %v1808 = vmul.u32 %v1616, 2246822519
        %v1809 = vmul.u32 %v1617, 2246822519
        %v1810 = vmul.u32 %v1618, 2246822519
        %v1811 = vmul.u32 %v1619, 2246822519
        %v1812 = vmul.u32 %v1620, 2246822519
        %v1813 = vmul.u32 %v1621, 2246822519
        %v1814 = vmul.u32 %v1622, 2246822519
        %v1815 = vmul.u32 %v1623, 2246822519
        %v1816 = vmul.u32 %v1624, 2246822519
        %v1817 = vmul.u32 %v1625, 2246822519
        %v1818 = vmul.u32 %v1626, 2246822519
        %v1819 = vmul.u32 %v1627, 2246822519
        %v1820 = vmul.u32 %v1628, 2246822519
        %v1821 = vmul.u32 %v1629, 2246822519
        %v1822 = vmul.u32 %v1630, 2246822519
        %v1823 = vmul.u32 %v1631, 2246822519
        %v1824 = vmul.u32 %v1632, 2246822519
        %v1825 = vmul.u32 %v1633, 2246822519
        %v1826 = vmul.u32 %v1634, 2246822519
        %v1827 = vmul.u32 %v1635, 2246822519
        %v1828 = vmul.u32 %v1636, 2246822519
        %v1829 = vmul.u32 %v1637, 2246822519
        %v1830 = vmul.u32 %v1638, 2246822519
        %v1831 = vmul.u32 %v1639, 2246822519
        %v1832 = vmul.u32 %v1640, 2246822519
        %v1833 = vmul.u32 %v1641, 2246822519
        %v1834 = vmul.u32 %v1642, 2246822519
        %v1835 = vmul.u32 %v1643, 2246822519
        %v1836 = vmul.u32 %v1644, 2246822519
        %v1837 = vmul.u32 %v1645, 2246822519
        %v1838 = vmul.u32 %v1646, 2246822519
        %v1839 = vmul.u32 %v1647, 2246822519
        %v1840 = vmul.u32 %v1648, 2246822519
        %v1841 = vmul.u32 %v1649, 2246822519
        %v1842 = vmul.u32 %v1650, 2246822519
        %v1843 = vmul.u32 %v1651, 2246822519
        %v1844 = vmul.u32 %v1652, 2246822519
        %v1845 = vmul.u32 %v1653, 2246822519
        %v1846 = vmul.u32 %v1654, 2246822519
        %v1847 = vmul.u32 %v1655, 2246822519
        %v1848 = vmul.u32 %v1656, 2246822519
        %v1849 = vmul.u32 %v1657, 2246822519
        %v1850 = vmul.u32 %v1658, 2246822519
        %v1851 = vmul.u32 %v1659, 2246822519
        %v1852 = vmul.u32 %v1660, 2246822519
        %v1853 = vmul.u32 %v1661, 2246822519
        %v1854 = vmul.u32 %v1662, 2246822519
        %v1855 = vmul.u32 %v1663, 2246822519
        %v1856 = vmul.u32 %v1664, 2246822519
        %v1857 = vmul.u32 %v1665, 2246822519
        %v1858 = vmul.u32 %v1666, 2246822519
        %v1859 = vmul.u32 %v1667, 2246822519
        %v1860 = vmul.u32 %v1668, 2246822519
        %v1861 = vmul.u32 %v1669, 2246822519
        %v1862 = vmul.u32 %v1670, 2246822519
        %v1863 = vmul.u32 %v1671, 2246822519
        %v1864 = vmul.u32 %v1672, 2246822519
        %v1865 = vmul.u32 %v1673, 2246822519
        %v1866 = vmul.u32 %v1674, 2246822519
        %v1867 = vmul.u32 %v1675, 2246822519
        %v1868 = vmul.u32 %v1676, 2246822519
        %v1869 = vmul.u32 %v1677, 2246822519
        %v1870 = vmul.u32 %v1678, 2246822519
        %v1871 = vmul.u32 %v1679, 2246822519
        %v1872 = vmul.u32 %v1680, 2246822519
        %v1873 = vmul.u32 %v1681, 2246822519
        %v1874 = vmul.u32 %v1682, 2246822519
        %v1875 = vmul.u32 %v1683, 2246822519
        %v1876 = vmul.u32 %v1684, 2246822519
        %v1877 = vmul.u32 %v1685, 2246822519
        %v1878 = vmul.u32 %v1686, 2246822519
        %v1879 = vmul.u32 %v1687, 2246822519
        %v1880 = vmul.u32 %v1688, 2246822519
        %v1881 = vmul.u32 %v1689, 2246822519
        %v1882 = vmul.u32 %v1690, 2246822519
        %v1883 = vmul.u32 %v1691, 2246822519
        %v1884 = vmul.u32 %v1692, 2246822519
        %v1885 = vmul.u32 %v1693, 2246822519
        %v1886 = vmul.u32 %v1694, 2246822519
        %v1887 = vmul.u32 %v1695, 2246822519
        %v1888 = vmul.u32 %v1696, 2246822519
        %v1889 = vmul.u32 %v1697, 2246822519
        %v1890 = vmul.u32 %v1698, 2246822519
        %v1891 = vmul.u32 %v1699, 2246822519
        %v1892 = vmul.u32 %v1700, 2246822519
        %v1893 = vmul.u32 %v1701, 2246822519
        %v1894 = vmul.u32 %v1702, 2246822519
        %v1895 = vshrl.u32 %v1703, 13
        %v1896 = vshrl.u32 %v1704, 13
        %v1897 = vshrl.u32 %v1705, 13
        %v1898 = vshrl.u32 %v1706, 13
        %v1899 = vshrl.u32 %v1707, 13
        %v1900 = vshrl.u32 %v1708, 13
        %v1901 = vshrl.u32 %v1709, 13
        %v1902 = vshrl.u32 %v1710, 13
        %v1903 = vshrl.u32 %v1711, 13
        %v1904 = vshrl.u32 %v1712, 13
        %v1905 = vshrl.u32 %v1713, 13
        %v1906 = vshrl.u32 %v1714, 13
        %v1907 = vshrl.u32 %v1715, 13
        %v1908 = vshrl.u32 %v1716, 13
        %v1909 = vshrl.u32 %v1717, 13
        %v1910 = vshrl.u32 %v1718, 13
        %v1911 = vshrl.u32 %v1719, 13
        %v1912 = vshrl.u32 %v1720, 13
        %v1913 = vshrl.u32 %v1721, 13
        %v1914 = vshrl.u32 %v1722, 13
        %v1915 = vshrl.u32 %v1723, 13
        %v1916 = vshrl.u32 %v1724, 13
        %v1917 = vshrl.u32 %v1725, 13
        %v1918 = vshrl.u32 %v1726, 13
        %v1919 = vshrl.u32 %v1727, 13
        %v1920 = vshrl.u32 %v1728, 13
        %v1921 = vshrl.u32 %v1729, 13
        %v1922 = vshrl.u32 %v1730, 13
        %v1923 = vshrl.u32 %v1731, 13
        %v1924 = vshrl.u32 %v1732, 13
        %v1925 = vshrl.u32 %v1733, 13
        %v1926 = vshrl.u32 %v1734, 13
        %v1927 = vshrl.u32 %v1735, 13
        %v1928 = vshrl.u32 %v1736, 13
        %v1929 = vshrl.u32 %v1737, 13
        %v1930 = vshrl.u32 %v1738, 13
        %v1931 = vshrl.u32 %v1739, 13
        %v1932 = vshrl.u32 %v1740, 13
        %v1933 = vshrl.u32 %v1741, 13
        %v1934 = vshrl.u32 %v1742, 13
        %v1935 = vshrl.u32 %v1743, 13
        %v1936 = vshrl.u32 %v1744, 13
        %v1937 = vshrl.u32 %v1745, 13
        %v1938 = vshrl.u32 %v1746, 13
        %v1939 = vshrl.u32 %v1747, 13
        %v1940 = vshrl.u32 %v1748, 13
        %v1941 = vshrl.u32 %v1749, 13
        %v1942 = vshrl.u32 %v1750, 13
        %v1943 = vshrl.u32 %v1751, 13
        %v1944 = vshrl.u32 %v1752, 13
        %v1945 = vshrl.u32 %v1753, 13
        %v1946 = vshrl.u32 %v1754, 13
        %v1947 = vshrl.u32 %v1755, 13
        %v1948 = vshrl.u32 %v1756, 13
        %v1949 = vshrl.u32 %v1757, 13
        %v1950 = vshrl.u32 %v1758, 13
        %v1951 = vshrl.u32 %v1759, 13
        %v1952 = vshrl.u32 %v1760, 13
        %v1953 = vshrl.u32 %v1761, 13
        %v1954 = vshrl.u32 %v1762, 13
        %v1955 = vshrl.u32 %v1763, 13
        %v1956 = vshrl.u32 %v1764, 13
        %v1957 = vshrl.u32 %v1765, 13
        %v1958 = vshrl.u32 %v1766, 13
        %v1959 = vshrl.u32 %v1767, 13
        %v1960 = vshrl.u32 %v1768, 13
        %v1961 = vshrl.u32 %v1769, 13
        %v1962 = vshrl.u32 %v1770, 13
        %v1963 = vshrl.u32 %v1771, 13
        %v1964 = vshrl.u32 %v1772, 13
        %v1965 = vshrl.u32 %v1773, 13
        %v1966 = vshrl.u32 %v1774, 13
        %v1967 = vshrl.u32 %v1775, 13
        %v1968 = vshrl.u32 %v1776, 13
        %v1969 = vshrl.u32 %v1777, 13
        %v1970 = vshrl.u32 %v1778, 13
        %v1971 = vshrl.u32 %v1779, 13
        %v1972 = vshrl.u32 %v1780, 13
        %v1973 = vshrl.u32 %v1781, 13
        %v1974 = vshrl.u32 %v1782, 13
        %v1975 = vshrl.u32 %v1783, 13
        %v1976 = vshrl.u32 %v1784, 13
        %v1977 = vshrl.u32 %v1785, 13
        %v1978 = vshrl.u32 %v1786, 13
        %v1979 = vshrl.u32 %v1787, 13
        %v1980 = vshrl.u32 %v1788, 13
        %v1981 = vshrl.u32 %v1789, 13
        %v1982 = vshrl.u32 %v1790, 13
        %v1983 = vshrl.u32 %v1791, 13
        %v1984 = vshrl.u32 %v1792, 13
        %v1985 = vshrl.u32 %v1793, 13
        %v1986 = vshrl.u32 %v1794, 13
        %v1987 = vshrl.u32 %v1795, 13
        %v1988 = vshrl.u32 %v1796, 13
        %v1989 = vshrl.u32 %v1797, 13
        %v1990 = vshrl.u32 %v1798, 13
        %v1991 = vshrl.u32 %v1799, 13
        %v1992 = vshrl.u32 %v1800, 13
        %v1993 = vshrl.u32 %v1801, 13
        %v1994 = vshrl.u32 %v1802, 13
        %v1995 = vshrl.u32 %v1803, 13
        %v1996 = vshrl.u32 %v1804, 13
        %v1997 = vshrl.u32 %v1805, 13
        %v1998 = vshrl.u32 %v1806, 13
        %v1999 = vshrl.u32 %v1807, 13
        %v2000 = vshrl.u32 %v1808, 13
        %v2001 = vshrl.u32 %v1809, 13
        %v2002 = vshrl.u32 %v1810, 13
        %v2003 = vshrl.u32 %v1811, 13
        %v2004 = vshrl.u32 %v1812, 13
        %v2005 = vshrl.u32 %v1813, 13
        %v2006 = vshrl.u32 %v1814, 13
        %v2007 = vshrl.u32 %v1815, 13
        %v2008 = vshrl.u32 %v1816, 13
        %v2009 = vshrl.u32 %v1817, 13
        %v2010 = vshrl.u32 %v1818, 13
        %v2011 = vshrl.u32 %v1819, 13
        %v2012 = vshrl.u32 %v1820, 13
        %v2013 = vshrl.u32 %v1821, 13
        %v2014 = vshrl.u32 %v1822, 13
        %v2015 = vshrl.u32 %v1823, 13
        %v2016 = vshrl.u32 %v1824, 13
        %v2017 = vshrl.u32 %v1825, 13
        %v2018 = vshrl.u32 %v1826, 13
        %v2019 = vshrl.u32 %v1827, 13
        %v2020 = vshrl.u32 %v1828, 13
        %v2021 = vshrl.u32 %v1829, 13
        %v2022 = vshrl.u32 %v1830, 13
        %v2023 = vshrl.u32 %v1831, 13
        %v2024 = vshrl.u32 %v1832, 13
        %v2025 = vshrl.u32 %v1833, 13
        %v2026 = vshrl.u32 %v1834, 13
        %v2027 = vshrl.u32 %v1835, 13
        %v2028 = vshrl.u32 %v1836, 13
        %v2029 = vshrl.u32 %v1837, 13
        %v2030 = vshrl.u32 %v1838, 13
        %v2031 = vshrl.u32 %v1839, 13
        %v2032 = vshrl.u32 %v1840, 13
        %v2033 = vshrl.u32 %v1841, 13
        %v2034 = vshrl.u32 %v1842, 13
        %v2035 = vshrl.u32 %v1843, 13
        %v2036 = vshrl.u32 %v1844, 13
        %v2037 = vshrl.u32 %v1845, 13
        %v2038 = vshrl.u32 %v1846, 13
        %v2039 = vshrl.u32 %v1847, 13
        %v2040 = vshrl.u32 %v1848, 13
        %v2041 = vshrl.u32 %v1849, 13
        %v2042 = vshrl.u32 %v1850, 13
        %v2043 = vshrl.u32 %v1851, 13
        %v2044 = vshrl.u32 %v1852, 13
        %v2045 = vshrl.u32 %v1853, 13
        %v2046 = vshrl.u32 %v1854, 13
        %v2047 = vshrl.u32 %v1855, 13
        %v2048 = vshrl.u32 %v1856, 13
        %v2049 = vshrl.u32 %v1857, 13
        %v2050 = vshrl.u32 %v1858, 13
        %v2051 = vshrl.u32 %v1859, 13
        %v2052 = vshrl.u32 %v1860, 13
        %v2053 = vshrl.u32 %v1861, 13
        %v2054 = vshrl.u32 %v1862, 13
        %v2055 = vshrl.u32 %v1863, 13
        %v2056 = vshrl.u32 %v1864, 13
        %v2057 = vshrl.u32 %v1865, 13
        %v2058 = vshrl.u32 %v1866, 13
        %v2059 = vshrl.u32 %v1867, 13
        %v2060 = vshrl.u32 %v1868, 13
        %v2061 = vshrl.u32 %v1869, 13
        %v2062 = vshrl.u32 %v1870, 13
        %v2063 = vshrl.u32 %v1871, 13
        %v2064 = vshrl.u32 %v1872, 13
        %v2065 = vshrl.u32 %v1873, 13
        %v2066 = vshrl.u32 %v1874, 13
        %v2067 = vshrl.u32 %v1875, 13
        %v2068 = vshrl.u32 %v1876, 13
        %v2069 = vshrl.u32 %v1877, 13
        %v2070 = vshrl.u32 %v1878, 13
        %v2071 = vshrl.u32 %v1879, 13
        %v2072 = vshrl.u32 %v1880, 13
        %v2073 = vshrl.u32 %v1881, 13
        %v2074 = vshrl.u32 %v1882, 13
        %v2075 = vshrl.u32 %v1883, 13
        %v2076 = vshrl.u32 %v1884, 13
        %v2077 = vshrl.u32 %v1885, 13
        %v2078 = vshrl.u32 %v1886, 13
        %v2079 = vshrl.u32 %v1887, 13
        %v2080 = vshrl.u32 %v1888, 13
        %v2081 = vshrl.u32 %v1889, 13
        %v2082 = vshrl.u32 %v1890, 13
        %v2083 = vshrl.u32 %v1891, 13
        %v2084 = vshrl.u32 %v1892, 13
        %v2085 = vshrl.u32 %v1893, 13
        %v2086 = vshrl.u32 %v1894, 13
        %v2087 = vxor.u32 %v1703, %v1895
        %v2088 = vxor.u32 %v1704, %v1896
        %v2089 = vxor.u32 %v1705, %v1897
        %v2090 = vxor.u32 %v1706, %v1898
        %v2091 = vxor.u32 %v1707, %v1899
        %v2092 = vxor.u32 %v1708, %v1900
        %v2093 = vxor.u32 %v1709, %v1901
        %v2094 = vxor.u32 %v1710, %v1902
        %v2095 = vxor.u32 %v1711, %v1903
        %v2096 = vxor.u32 %v1712, %v1904
        %v2097 = vxor.u32 %v1713, %v1905
        %v2098 = vxor.u32 %v1714, %v1906
        %v2099 = vxor.u32 %v1715, %v1907
        %v2100 = vxor.u32 %v1716, %v1908
        %v2101 = vxor.u32 %v1717, %v1909
        %v2102 = vxor.u32 %v1718, %v1910
        %v2103 = vxor.u32 %v1719, %v1911
        %v2104 = vxor.u32 %v1720, %v1912
        %v2105 = vxor.u32 %v1721, %v1913
        %v2106 = vxor.u32 %v1722, %v1914
        %v2107 = vxor.u32 %v1723, %v1915
        %v2108 = vxor.u32 %v1724, %v1916
        %v2109 = vxor.u32 %v1725, %v1917
        %v2110 = vxor.u32 %v1726, %v1918
        %v2111 = vxor.u32 %v1727, %v1919
        %v2112 = vxor.u32 %v1728, %v1920
        %v2113 = vxor.u32 %v1729, %v1921
        %v2114 = vxor.u32 %v1730, %v1922
        %v2115 = vxor.u32 %v1731, %v1923
        %v2116 = vxor.u32 %v1732, %v1924
        %v2117 = vxor.u32 %v1733, %v1925
        %v2118 = vxor.u32 %v1734, %v1926
        %v2119 = vxor.u32 %v1735, %v1927
        %v2120 = vxor.u32 %v1736, %v1928
        %v2121 = vxor.u32 %v1737, %v1929
        %v2122 = vxor.u32 %v1738, %v1930
        %v2123 = vxor.u32 %v1739, %v1931
        %v2124 = vxor.u32 %v1740, %v1932
        %v2125 = vxor.u32 %v1741, %v1933
        %v2126 = vxor.u32 %v1742, %v1934
        %v2127 = vxor.u32 %v1743, %v1935
        %v2128 = vxor.u32 %v1744, %v1936
        %v2129 = vxor.u32 %v1745, %v1937
        %v2130 = vxor.u32 %v1746, %v1938
        %v2131 = vxor.u32 %v1747, %v1939
        %v2132 = vxor.u32 %v1748, %v1940
        %v2133 = vxor.u32 %v1749, %v1941
        %v2134 = vxor.u32 %v1750, %v1942
        %v2135 = vxor.u32 %v1751, %v1943
        %v2136 = vxor.u32 %v1752, %v1944
        %v2137 = vxor.u32 %v1753, %v1945
        %v2138 = vxor.u32 %v1754, %v1946
        %v2139 = vxor.u32 %v1755, %v1947
        %v2140 = vxor.u32 %v1756, %v1948
        %v2141 = vxor.u32 %v1757, %v1949
        %v2142 = vxor.u32 %v1758, %v1950
        %v2143 = vxor.u32 %v1759, %v1951
        %v2144 = vxor.u32 %v1760, %v1952
        %v2145 = vxor.u32 %v1761, %v1953
        %v2146 = vxor.u32 %v1762, %v1954
        %v2147 = vxor.u32 %v1763, %v1955
        %v2148 = vxor.u32 %v1764, %v1956
        %v2149 = vxor.u32 %v1765, %v1957
        %v2150 = vxor.u32 %v1766, %v1958
        %v2151 = vxor.u32 %v1767, %v1959
        %v2152 = vxor.u32 %v1768, %v1960
        %v2153 = vxor.u32 %v1769, %v1961
        %v2154 = vxor.u32 %v1770, %v1962
        %v2155 = vxor.u32 %v1771, %v1963
        %v2156 = vxor.u32 %v1772, %v1964
        %v2157 = vxor.u32 %v1773, %v1965
        %v2158 = vxor.u32 %v1774, %v1966
        %v2159 = vxor.u32 %v1775, %v1967
        %v2160 = vxor.u32 %v1776, %v1968
        %v2161 = vxor.u32 %v1777, %v1969
        %v2162 = vxor.u32 %v1778, %v1970
        %v2163 = vxor.u32 %v1779, %v1971
        %v2164 = vxor.u32 %v1780, %v1972
        %v2165 = vxor.u32 %v1781, %v1973
        %v2166 = vxor.u32 %v1782, %v1974
        %v2167 = vxor.u32 %v1783, %v1975
        %v2168 = vxor.u32 %v1784, %v1976
        %v2169 = vxor.u32 %v1785, %v1977
        %v2170 = vxor.u32 %v1786, %v1978
        %v2171 = vxor.u32 %v1787, %v1979
        %v2172 = vxor.u32 %v1788, %v1980
        %v2173 = vxor.u32 %v1789, %v1981
        %v2174 = vxor.u32 %v1790, %v1982
        %v2175 = vxor.u32 %v1791, %v1983
        %v2176 = vxor.u32 %v1792, %v1984
        %v2177 = vxor.u32 %v1793, %v1985
        %v2178 = vxor.u32 %v1794, %v1986
        %v2179 = vxor.u32 %v1795, %v1987
        %v2180 = vxor.u32 %v1796, %v1988
        %v2181 = vxor.u32 %v1797, %v1989
        %v2182 = vxor.u32 %v1798, %v1990
        %v2183 = vxor.u32 %v1799, %v1991
        %v2184 = vxor.u32 %v1800, %v1992
        %v2185 = vxor.u32 %v1801, %v1993
        %v2186 = vxor.u32 %v1802, %v1994
        %v2187 = vxor.u32 %v1803, %v1995
        %v2188 = vxor.u32 %v1804, %v1996
        %v2189 = vxor.u32 %v1805, %v1997
        %v2190 = vxor.u32 %v1806, %v1998
        %v2191 = vxor.u32 %v1807, %v1999
        %v2192 = vxor.u32 %v1808, %v2000
        %v2193 = vxor.u32 %v1809, %v2001
        %v2194 = vxor.u32 %v1810, %v2002
        %v2195 = vxor.u32 %v1811, %v2003
        %v2196 = vxor.u32 %v1812, %v2004
        %v2197 = vxor.u32 %v1813, %v2005
        %v2198 = vxor.u32 %v1814, %v2006
        %v2199 = vxor.u32 %v1815, %v2007
        %v2200 = vxor.u32 %v1816, %v2008
        %v2201 = vxor.u32 %v1817, %v2009
        %v2202 = vxor.u32 %v1818, %v2010
        %v2203 = vxor.u32 %v1819, %v2011
        %v2204 = vxor.u32 %v1820, %v2012
        %v2205 = vxor.u32 %v1821, %v2013
        %v2206 = vxor.u32 %v1822, %v2014
        %v2207 = vxor.u32 %v1823, %v2015
        %v2208 = vxor.u32 %v1824, %v2016
        %v2209 = vxor.u32 %v1825, %v2017
        %v2210 = vxor.u32 %v1826, %v2018
        %v2211 = vxor.u32 %v1827, %v2019
        %v2212 = vxor.u32 %v1828, %v2020
        %v2213 = vxor.u32 %v1829, %v2021
        %v2214 = vxor.u32 %v1830, %v2022
        %v2215 = vxor.u32 %v1831, %v2023
        %v2216 = vxor.u32 %v1832, %v2024
        %v2217 = vxor.u32 %v1833, %v2025
        %v2218 = vxor.u32 %v1834, %v2026
        %v2219 = vxor.u32 %v1835, %v2027
        %v2220 = vxor.u32 %v1836, %v2028
        %v2221 = vxor.u32 %v1837, %v2029
        %v2222 = vxor.u32 %v1838, %v2030
        %v2223 = vxor.u32 %v1839, %v2031
        %v2224 = vxor.u32 %v1840, %v2032
        %v2225 = vxor.u32 %v1841, %v2033
        %v2226 = vxor.u32 %v1842, %v2034
        %v2227 = vxor.u32 %v1843, %v2035
        %v2228 = vxor.u32 %v1844, %v2036
        %v2229 = vxor.u32 %v1845, %v2037
        %v2230 = vxor.u32 %v1846, %v2038
        %v2231 = vxor.u32 %v1847, %v2039
        %v2232 = vxor.u32 %v1848, %v2040
        %v2233 = vxor.u32 %v1849, %v2041
        %v2234 = vxor.u32 %v1850, %v2042
        %v2235 = vxor.u32 %v1851, %v2043
        %v2236 = vxor.u32 %v1852, %v2044
        %v2237 = vxor.u32 %v1853, %v2045
        %v2238 = vxor.u32 %v1854, %v2046
        %v2239 = vxor.u32 %v1855, %v2047
        %v2240 = vxor.u32 %v1856, %v2048
        %v2241 = vxor.u32 %v1857, %v2049
        %v2242 = vxor.u32 %v1858, %v2050
        %v2243 = vxor.u32 %v1859, %v2051
        %v2244 = vxor.u32 %v1860, %v2052
        %v2245 = vxor.u32 %v1861, %v2053
        %v2246 = vxor.u32 %v1862, %v2054
        %v2247 = vxor.u32 %v1863, %v2055
        %v2248 = vxor.u32 %v1864, %v2056
        %v2249 = vxor.u32 %v1865, %v2057
        %v2250 = vxor.u32 %v1866, %v2058
        %v2251 = vxor.u32 %v1867, %v2059
        %v2252 = vxor.u32 %v1868, %v2060
        %v2253 = vxor.u32 %v1869, %v2061
        %v2254 = vxor.u32 %v1870, %v2062
        %v2255 = vxor.u32 %v1871, %v2063
        %v2256 = vxor.u32 %v1872, %v2064
        %v2257 = vxor.u32 %v1873, %v2065
        %v2258 = vxor.u32 %v1874, %v2066
        %v2259 = vxor.u32 %v1875, %v2067
        %v2260 = vxor.u32 %v1876, %v2068
        %v2261 = vxor.u32 %v1877, %v2069
        %v2262 = vxor.u32 %v1878, %v2070
        %v2263 = vxor.u32 %v1879, %v2071
        %v2264 = vxor.u32 %v1880, %v2072
        %v2265 = vxor.u32 %v1881, %v2073
        %v2266 = vxor.u32 %v1882, %v2074
        %v2267 = vxor.u32 %v1883, %v2075
        %v2268 = vxor.u32 %v1884, %v2076
        %v2269 = vxor.u32 %v1885, %v2077
        %v2270 = vxor.u32 %v1886, %v2078
        %v2271 = vxor.u32 %v1887, %v2079
        %v2272 = vxor.u32 %v1888, %v2080
        %v2273 = vxor.u32 %v1889, %v2081
        %v2274 = vxor.u32 %v1890, %v2082
        %v2275 = vxor.u32 %v1891, %v2083
        %v2276 = vxor.u32 %v1892, %v2084
        %v2277 = vxor.u32 %v1893, %v2085
        %v2278 = vxor.u32 %v1894, %v2086
        %vm2279 = vcmp.ge.u32.totalorder %v2087, 429496730
        %vm2280 = vcmp.ge.u32.totalorder %v2088, 429496730
        %vm2281 = vcmp.ge.u32.totalorder %v2089, 429496730
        %vm2282 = vcmp.ge.u32.totalorder %v2090, 429496730
        %vm2283 = vcmp.ge.u32.totalorder %v2091, 429496730
        %vm2284 = vcmp.ge.u32.totalorder %v2092, 429496730
        %vm2285 = vcmp.ge.u32.totalorder %v2093, 429496730
        %vm2286 = vcmp.ge.u32.totalorder %v2094, 429496730
        %vm2287 = vcmp.ge.u32.totalorder %v2095, 429496730
        %vm2288 = vcmp.ge.u32.totalorder %v2096, 429496730
        %vm2289 = vcmp.ge.u32.totalorder %v2097, 429496730
        %vm2290 = vcmp.ge.u32.totalorder %v2098, 429496730
        %vm2291 = vcmp.ge.u32.totalorder %v2099, 429496730
        %vm2292 = vcmp.ge.u32.totalorder %v2100, 429496730
        %vm2293 = vcmp.ge.u32.totalorder %v2101, 429496730
        %vm2294 = vcmp.ge.u32.totalorder %v2102, 429496730
        %vm2295 = vcmp.ge.u32.totalorder %v2103, 429496730
        %vm2296 = vcmp.ge.u32.totalorder %v2104, 429496730
        %vm2297 = vcmp.ge.u32.totalorder %v2105, 429496730
        %vm2298 = vcmp.ge.u32.totalorder %v2106, 429496730
        %vm2299 = vcmp.ge.u32.totalorder %v2107, 429496730
        %vm2300 = vcmp.ge.u32.totalorder %v2108, 429496730
        %vm2301 = vcmp.ge.u32.totalorder %v2109, 429496730
        %vm2302 = vcmp.ge.u32.totalorder %v2110, 429496730
        %vm2303 = vcmp.ge.u32.totalorder %v2111, 429496730
        %vm2304 = vcmp.ge.u32.totalorder %v2112, 429496730
        %vm2305 = vcmp.ge.u32.totalorder %v2113, 429496730
        %vm2306 = vcmp.ge.u32.totalorder %v2114, 429496730
        %vm2307 = vcmp.ge.u32.totalorder %v2115, 429496730
        %vm2308 = vcmp.ge.u32.totalorder %v2116, 429496730
        %vm2309 = vcmp.ge.u32.totalorder %v2117, 429496730
        %vm2310 = vcmp.ge.u32.totalorder %v2118, 429496730
        %vm2311 = vcmp.ge.u32.totalorder %v2119, 429496730
        %vm2312 = vcmp.ge.u32.totalorder %v2120, 429496730
        %vm2313 = vcmp.ge.u32.totalorder %v2121, 429496730
        %vm2314 = vcmp.ge.u32.totalorder %v2122, 429496730
        %vm2315 = vcmp.ge.u32.totalorder %v2123, 429496730
        %vm2316 = vcmp.ge.u32.totalorder %v2124, 429496730
        %vm2317 = vcmp.ge.u32.totalorder %v2125, 429496730
        %vm2318 = vcmp.ge.u32.totalorder %v2126, 429496730
        %vm2319 = vcmp.ge.u32.totalorder %v2127, 429496730
        %vm2320 = vcmp.ge.u32.totalorder %v2128, 429496730
        %vm2321 = vcmp.ge.u32.totalorder %v2129, 429496730
        %vm2322 = vcmp.ge.u32.totalorder %v2130, 429496730
        %vm2323 = vcmp.ge.u32.totalorder %v2131, 429496730
        %vm2324 = vcmp.ge.u32.totalorder %v2132, 429496730
        %vm2325 = vcmp.ge.u32.totalorder %v2133, 429496730
        %vm2326 = vcmp.ge.u32.totalorder %v2134, 429496730
        %vm2327 = vcmp.ge.u32.totalorder %v2135, 429496730
        %vm2328 = vcmp.ge.u32.totalorder %v2136, 429496730
        %vm2329 = vcmp.ge.u32.totalorder %v2137, 429496730
        %vm2330 = vcmp.ge.u32.totalorder %v2138, 429496730
        %vm2331 = vcmp.ge.u32.totalorder %v2139, 429496730
        %vm2332 = vcmp.ge.u32.totalorder %v2140, 429496730
        %vm2333 = vcmp.ge.u32.totalorder %v2141, 429496730
        %vm2334 = vcmp.ge.u32.totalorder %v2142, 429496730
        %vm2335 = vcmp.ge.u32.totalorder %v2143, 429496730
        %vm2336 = vcmp.ge.u32.totalorder %v2144, 429496730
        %vm2337 = vcmp.ge.u32.totalorder %v2145, 429496730
        %vm2338 = vcmp.ge.u32.totalorder %v2146, 429496730
        %vm2339 = vcmp.ge.u32.totalorder %v2147, 429496730
        %vm2340 = vcmp.ge.u32.totalorder %v2148, 429496730
        %vm2341 = vcmp.ge.u32.totalorder %v2149, 429496730
        %vm2342 = vcmp.ge.u32.totalorder %v2150, 429496730
        %vm2343 = vcmp.ge.u32.totalorder %v2151, 429496730
        %vm2344 = vcmp.ge.u32.totalorder %v2152, 429496730
        %vm2345 = vcmp.ge.u32.totalorder %v2153, 429496730
        %vm2346 = vcmp.ge.u32.totalorder %v2154, 429496730
        %vm2347 = vcmp.ge.u32.totalorder %v2155, 429496730
        %vm2348 = vcmp.ge.u32.totalorder %v2156, 429496730
        %vm2349 = vcmp.ge.u32.totalorder %v2157, 429496730
        %vm2350 = vcmp.ge.u32.totalorder %v2158, 429496730
        %vm2351 = vcmp.ge.u32.totalorder %v2159, 429496730
        %vm2352 = vcmp.ge.u32.totalorder %v2160, 429496730
        %vm2353 = vcmp.ge.u32.totalorder %v2161, 429496730
        %vm2354 = vcmp.ge.u32.totalorder %v2162, 429496730
        %vm2355 = vcmp.ge.u32.totalorder %v2163, 429496730
        %vm2356 = vcmp.ge.u32.totalorder %v2164, 429496730
        %vm2357 = vcmp.ge.u32.totalorder %v2165, 429496730
        %vm2358 = vcmp.ge.u32.totalorder %v2166, 429496730
        %vm2359 = vcmp.ge.u32.totalorder %v2167, 429496730
        %vm2360 = vcmp.ge.u32.totalorder %v2168, 429496730
        %vm2361 = vcmp.ge.u32.totalorder %v2169, 429496730
        %vm2362 = vcmp.ge.u32.totalorder %v2170, 429496730
        %vm2363 = vcmp.ge.u32.totalorder %v2171, 429496730
        %vm2364 = vcmp.ge.u32.totalorder %v2172, 429496730
        %vm2365 = vcmp.ge.u32.totalorder %v2173, 429496730
        %vm2366 = vcmp.ge.u32.totalorder %v2174, 429496730
        %vm2367 = vcmp.ge.u32.totalorder %v2175, 429496730
        %vm2368 = vcmp.ge.u32.totalorder %v2176, 429496730
        %vm2369 = vcmp.ge.u32.totalorder %v2177, 429496730
        %vm2370 = vcmp.ge.u32.totalorder %v2178, 429496730
        %vm2371 = vcmp.ge.u32.totalorder %v2179, 429496730
        %vm2372 = vcmp.ge.u32.totalorder %v2180, 429496730
        %vm2373 = vcmp.ge.u32.totalorder %v2181, 429496730
        %vm2374 = vcmp.ge.u32.totalorder %v2182, 429496730
        %vm2375 = vcmp.ge.u32.totalorder %v2183, 429496730
        %vm2376 = vcmp.ge.u32.totalorder %v2184, 429496730
        %vm2377 = vcmp.ge.u32.totalorder %v2185, 429496730
        %vm2378 = vcmp.ge.u32.totalorder %v2186, 429496730
        %vm2379 = vcmp.ge.u32.totalorder %v2187, 429496730
        %vm2380 = vcmp.ge.u32.totalorder %v2188, 429496730
        %vm2381 = vcmp.ge.u32.totalorder %v2189, 429496730
        %vm2382 = vcmp.ge.u32.totalorder %v2190, 429496730
        %vm2383 = vcmp.ge.u32.totalorder %v2191, 429496730
        %vm2384 = vcmp.ge.u32.totalorder %v2192, 429496730
        %vm2385 = vcmp.ge.u32.totalorder %v2193, 429496730
        %vm2386 = vcmp.ge.u32.totalorder %v2194, 429496730
        %vm2387 = vcmp.ge.u32.totalorder %v2195, 429496730
        %vm2388 = vcmp.ge.u32.totalorder %v2196, 429496730
        %vm2389 = vcmp.ge.u32.totalorder %v2197, 429496730
        %vm2390 = vcmp.ge.u32.totalorder %v2198, 429496730
        %vm2391 = vcmp.ge.u32.totalorder %v2199, 429496730
        %vm2392 = vcmp.ge.u32.totalorder %v2200, 429496730
        %vm2393 = vcmp.ge.u32.totalorder %v2201, 429496730
        %vm2394 = vcmp.ge.u32.totalorder %v2202, 429496730
        %vm2395 = vcmp.ge.u32.totalorder %v2203, 429496730
        %vm2396 = vcmp.ge.u32.totalorder %v2204, 429496730
        %vm2397 = vcmp.ge.u32.totalorder %v2205, 429496730
        %vm2398 = vcmp.ge.u32.totalorder %v2206, 429496730
        %vm2399 = vcmp.ge.u32.totalorder %v2207, 429496730
        %vm2400 = vcmp.ge.u32.totalorder %v2208, 429496730
        %vm2401 = vcmp.ge.u32.totalorder %v2209, 429496730
        %vm2402 = vcmp.ge.u32.totalorder %v2210, 429496730
        %vm2403 = vcmp.ge.u32.totalorder %v2211, 429496730
        %vm2404 = vcmp.ge.u32.totalorder %v2212, 429496730
        %vm2405 = vcmp.ge.u32.totalorder %v2213, 429496730
        %vm2406 = vcmp.ge.u32.totalorder %v2214, 429496730
        %vm2407 = vcmp.ge.u32.totalorder %v2215, 429496730
        %vm2408 = vcmp.ge.u32.totalorder %v2216, 429496730
        %vm2409 = vcmp.ge.u32.totalorder %v2217, 429496730
        %vm2410 = vcmp.ge.u32.totalorder %v2218, 429496730
        %vm2411 = vcmp.ge.u32.totalorder %v2219, 429496730
        %vm2412 = vcmp.ge.u32.totalorder %v2220, 429496730
        %vm2413 = vcmp.ge.u32.totalorder %v2221, 429496730
        %vm2414 = vcmp.ge.u32.totalorder %v2222, 429496730
        %vm2415 = vcmp.ge.u32.totalorder %v2223, 429496730
        %vm2416 = vcmp.ge.u32.totalorder %v2224, 429496730
        %vm2417 = vcmp.ge.u32.totalorder %v2225, 429496730
        %vm2418 = vcmp.ge.u32.totalorder %v2226, 429496730
        %vm2419 = vcmp.ge.u32.totalorder %v2227, 429496730
        %vm2420 = vcmp.ge.u32.totalorder %v2228, 429496730
        %vm2421 = vcmp.ge.u32.totalorder %v2229, 429496730
        %vm2422 = vcmp.ge.u32.totalorder %v2230, 429496730
        %vm2423 = vcmp.ge.u32.totalorder %v2231, 429496730
        %vm2424 = vcmp.ge.u32.totalorder %v2232, 429496730
        %vm2425 = vcmp.ge.u32.totalorder %v2233, 429496730
        %vm2426 = vcmp.ge.u32.totalorder %v2234, 429496730
        %vm2427 = vcmp.ge.u32.totalorder %v2235, 429496730
        %vm2428 = vcmp.ge.u32.totalorder %v2236, 429496730
        %vm2429 = vcmp.ge.u32.totalorder %v2237, 429496730
        %vm2430 = vcmp.ge.u32.totalorder %v2238, 429496730
        %vm2431 = vcmp.ge.u32.totalorder %v2239, 429496730
        %vm2432 = vcmp.ge.u32.totalorder %v2240, 429496730
        %vm2433 = vcmp.ge.u32.totalorder %v2241, 429496730
        %vm2434 = vcmp.ge.u32.totalorder %v2242, 429496730
        %vm2435 = vcmp.ge.u32.totalorder %v2243, 429496730
        %vm2436 = vcmp.ge.u32.totalorder %v2244, 429496730
        %vm2437 = vcmp.ge.u32.totalorder %v2245, 429496730
        %vm2438 = vcmp.ge.u32.totalorder %v2246, 429496730
        %vm2439 = vcmp.ge.u32.totalorder %v2247, 429496730
        %vm2440 = vcmp.ge.u32.totalorder %v2248, 429496730
        %vm2441 = vcmp.ge.u32.totalorder %v2249, 429496730
        %vm2442 = vcmp.ge.u32.totalorder %v2250, 429496730
        %vm2443 = vcmp.ge.u32.totalorder %v2251, 429496730
        %vm2444 = vcmp.ge.u32.totalorder %v2252, 429496730
        %vm2445 = vcmp.ge.u32.totalorder %v2253, 429496730
        %vm2446 = vcmp.ge.u32.totalorder %v2254, 429496730
        %vm2447 = vcmp.ge.u32.totalorder %v2255, 429496730
        %vm2448 = vcmp.ge.u32.totalorder %v2256, 429496730
        %vm2449 = vcmp.ge.u32.totalorder %v2257, 429496730
        %vm2450 = vcmp.ge.u32.totalorder %v2258, 429496730
        %vm2451 = vcmp.ge.u32.totalorder %v2259, 429496730
        %vm2452 = vcmp.ge.u32.totalorder %v2260, 429496730
        %vm2453 = vcmp.ge.u32.totalorder %v2261, 429496730
        %vm2454 = vcmp.ge.u32.totalorder %v2262, 429496730
        %vm2455 = vcmp.ge.u32.totalorder %v2263, 429496730
        %vm2456 = vcmp.ge.u32.totalorder %v2264, 429496730
        %vm2457 = vcmp.ge.u32.totalorder %v2265, 429496730
        %vm2458 = vcmp.ge.u32.totalorder %v2266, 429496730
        %vm2459 = vcmp.ge.u32.totalorder %v2267, 429496730
        %vm2460 = vcmp.ge.u32.totalorder %v2268, 429496730
        %vm2461 = vcmp.ge.u32.totalorder %v2269, 429496730
        %vm2462 = vcmp.ge.u32.totalorder %v2270, 429496730
        %vm2463 = vcmp.ge.u32.totalorder %v2271, 429496730
        %vm2464 = vcmp.ge.u32.totalorder %v2272, 429496730
        %vm2465 = vcmp.ge.u32.totalorder %v2273, 429496730
        %vm2466 = vcmp.ge.u32.totalorder %v2274, 429496730
        %vm2467 = vcmp.ge.u32.totalorder %v2275, 429496730
        %vm2468 = vcmp.ge.u32.totalorder %v2276, 429496730
        %vm2469 = vcmp.ge.u32.totalorder %v2277, 429496730
        %vm2470 = vcmp.ge.u32.totalorder %v2278, 429496730
        %v2471 = vmul.f32 %v502, 1.1111112
        %v2472 = vmul.f32 %v503, 1.1111112
        %v2473 = vmul.f32 %v504, 1.1111112
        %v2474 = vmul.f32 %v505, 1.1111112
        %v2475 = vmul.f32 %v506, 1.1111112
        %v2476 = vmul.f32 %v507, 1.1111112
        %v2477 = vmul.f32 %v508, 1.1111112
        %v2478 = vmul.f32 %v509, 1.1111112
        %v2479 = vmul.f32 %v510, 1.1111112
        %v2480 = vmul.f32 %v511, 1.1111112
        %v2481 = vmul.f32 %v512, 1.1111112
        %v2482 = vmul.f32 %v513, 1.1111112
        %v2483 = vmul.f32 %v514, 1.1111112
        %v2484 = vmul.f32 %v515, 1.1111112
        %v2485 = vmul.f32 %v516, 1.1111112
        %v2486 = vmul.f32 %v517, 1.1111112
        %v2487 = vmul.f32 %v518, 1.1111112
        %v2488 = vmul.f32 %v519, 1.1111112
        %v2489 = vmul.f32 %v520, 1.1111112
        %v2490 = vmul.f32 %v521, 1.1111112
        %v2491 = vmul.f32 %v522, 1.1111112
        %v2492 = vmul.f32 %v523, 1.1111112
        %v2493 = vmul.f32 %v524, 1.1111112
        %v2494 = vmul.f32 %v525, 1.1111112
        %v2495 = vmul.f32 %v526, 1.1111112
        %v2496 = vmul.f32 %v527, 1.1111112
        %v2497 = vmul.f32 %v528, 1.1111112
        %v2498 = vmul.f32 %v529, 1.1111112
        %v2499 = vmul.f32 %v530, 1.1111112
        %v2500 = vmul.f32 %v531, 1.1111112
        %v2501 = vmul.f32 %v532, 1.1111112
        %v2502 = vmul.f32 %v533, 1.1111112
        %v2503 = vmul.f32 %v534, 1.1111112
        %v2504 = vmul.f32 %v535, 1.1111112
        %v2505 = vmul.f32 %v536, 1.1111112
        %v2506 = vmul.f32 %v537, 1.1111112
        %v2507 = vmul.f32 %v538, 1.1111112
        %v2508 = vmul.f32 %v539, 1.1111112
        %v2509 = vmul.f32 %v540, 1.1111112
        %v2510 = vmul.f32 %v541, 1.1111112
        %v2511 = vmul.f32 %v542, 1.1111112
        %v2512 = vmul.f32 %v543, 1.1111112
        %v2513 = vmul.f32 %v544, 1.1111112
        %v2514 = vmul.f32 %v545, 1.1111112
        %v2515 = vmul.f32 %v546, 1.1111112
        %v2516 = vmul.f32 %v547, 1.1111112
        %v2517 = vmul.f32 %v548, 1.1111112
        %v2518 = vmul.f32 %v549, 1.1111112
        %v2519 = vmul.f32 %v550, 1.1111112
        %v2520 = vmul.f32 %v551, 1.1111112
        %v2521 = vmul.f32 %v552, 1.1111112
        %v2522 = vmul.f32 %v553, 1.1111112
        %v2523 = vmul.f32 %v554, 1.1111112
        %v2524 = vmul.f32 %v555, 1.1111112
        %v2525 = vmul.f32 %v556, 1.1111112
        %v2526 = vmul.f32 %v557, 1.1111112
        %v2527 = vmul.f32 %v558, 1.1111112
        %v2528 = vmul.f32 %v559, 1.1111112
        %v2529 = vmul.f32 %v560, 1.1111112
        %v2530 = vmul.f32 %v561, 1.1111112
        %v2531 = vmul.f32 %v562, 1.1111112
        %v2532 = vmul.f32 %v563, 1.1111112
        %v2533 = vmul.f32 %v564, 1.1111112
        %v2534 = vmul.f32 %v565, 1.1111112
        %v2535 = vmul.f32 %v566, 1.1111112
        %v2536 = vmul.f32 %v567, 1.1111112
        %v2537 = vmul.f32 %v568, 1.1111112
        %v2538 = vmul.f32 %v569, 1.1111112
        %v2539 = vmul.f32 %v570, 1.1111112
        %v2540 = vmul.f32 %v571, 1.1111112
        %v2541 = vmul.f32 %v572, 1.1111112
        %v2542 = vmul.f32 %v573, 1.1111112
        %v2543 = vmul.f32 %v574, 1.1111112
        %v2544 = vmul.f32 %v575, 1.1111112
        %v2545 = vmul.f32 %v576, 1.1111112
        %v2546 = vmul.f32 %v577, 1.1111112
        %v2547 = vmul.f32 %v578, 1.1111112
        %v2548 = vmul.f32 %v579, 1.1111112
        %v2549 = vmul.f32 %v580, 1.1111112
        %v2550 = vmul.f32 %v581, 1.1111112
        %v2551 = vmul.f32 %v582, 1.1111112
        %v2552 = vmul.f32 %v583, 1.1111112
        %v2553 = vmul.f32 %v584, 1.1111112
        %v2554 = vmul.f32 %v585, 1.1111112
        %v2555 = vmul.f32 %v586, 1.1111112
        %v2556 = vmul.f32 %v587, 1.1111112
        %v2557 = vmul.f32 %v588, 1.1111112
        %v2558 = vmul.f32 %v589, 1.1111112
        %v2559 = vmul.f32 %v590, 1.1111112
        %v2560 = vmul.f32 %v591, 1.1111112
        %v2561 = vmul.f32 %v592, 1.1111112
        %v2562 = vmul.f32 %v593, 1.1111112
        %v2563 = vmul.f32 %v594, 1.1111112
        %v2564 = vmul.f32 %v595, 1.1111112
        %v2565 = vmul.f32 %v596, 1.1111112
        %v2566 = vmul.f32 %v597, 1.1111112
        %v2567 = vmul.f32 %v598, 1.1111112
        %v2568 = vmul.f32 %v599, 1.1111112
        %v2569 = vmul.f32 %v600, 1.1111112
        %v2570 = vmul.f32 %v601, 1.1111112
        %v2571 = vmul.f32 %v602, 1.1111112
        %v2572 = vmul.f32 %v603, 1.1111112
        %v2573 = vmul.f32 %v604, 1.1111112
        %v2574 = vmul.f32 %v605, 1.1111112
        %v2575 = vmul.f32 %v606, 1.1111112
        %v2576 = vmul.f32 %v607, 1.1111112
        %v2577 = vmul.f32 %v608, 1.1111112
        %v2578 = vmul.f32 %v609, 1.1111112
        %v2579 = vmul.f32 %v610, 1.1111112
        %v2580 = vmul.f32 %v611, 1.1111112
        %v2581 = vmul.f32 %v612, 1.1111112
        %v2582 = vmul.f32 %v613, 1.1111112
        %v2583 = vmul.f32 %v614, 1.1111112
        %v2584 = vmul.f32 %v615, 1.1111112
        %v2585 = vmul.f32 %v616, 1.1111112
        %v2586 = vmul.f32 %v617, 1.1111112
        %v2587 = vmul.f32 %v618, 1.1111112
        %v2588 = vmul.f32 %v619, 1.1111112
        %v2589 = vmul.f32 %v620, 1.1111112
        %v2590 = vmul.f32 %v621, 1.1111112
        %v2591 = vmul.f32 %v622, 1.1111112
        %v2592 = vmul.f32 %v623, 1.1111112
        %v2593 = vmul.f32 %v624, 1.1111112
        %v2594 = vmul.f32 %v625, 1.1111112
        %v2595 = vmul.f32 %v626, 1.1111112
        %v2596 = vmul.f32 %v627, 1.1111112
        %v2597 = vmul.f32 %v628, 1.1111112
        %v2598 = vmul.f32 %v629, 1.1111112
        %v2599 = vmul.f32 %v630, 1.1111112
        %v2600 = vmul.f32 %v631, 1.1111112
        %v2601 = vmul.f32 %v632, 1.1111112
        %v2602 = vmul.f32 %v633, 1.1111112
        %v2603 = vmul.f32 %v634, 1.1111112
        %v2604 = vmul.f32 %v635, 1.1111112
        %v2605 = vmul.f32 %v636, 1.1111112
        %v2606 = vmul.f32 %v637, 1.1111112
        %v2607 = vmul.f32 %v638, 1.1111112
        %v2608 = vmul.f32 %v639, 1.1111112
        %v2609 = vmul.f32 %v640, 1.1111112
        %v2610 = vmul.f32 %v641, 1.1111112
        %v2611 = vmul.f32 %v642, 1.1111112
        %v2612 = vmul.f32 %v643, 1.1111112
        %v2613 = vmul.f32 %v644, 1.1111112
        %v2614 = vmul.f32 %v645, 1.1111112
        %v2615 = vmul.f32 %v646, 1.1111112
        %v2616 = vmul.f32 %v647, 1.1111112
        %v2617 = vmul.f32 %v648, 1.1111112
        %v2618 = vmul.f32 %v649, 1.1111112
        %v2619 = vmul.f32 %v650, 1.1111112
        %v2620 = vmul.f32 %v651, 1.1111112
        %v2621 = vmul.f32 %v652, 1.1111112
        %v2622 = vmul.f32 %v653, 1.1111112
        %v2623 = vmul.f32 %v654, 1.1111112
        %v2624 = vmul.f32 %v655, 1.1111112
        %v2625 = vmul.f32 %v656, 1.1111112
        %v2626 = vmul.f32 %v657, 1.1111112
        %v2627 = vmul.f32 %v658, 1.1111112
        %v2628 = vmul.f32 %v659, 1.1111112
        %v2629 = vmul.f32 %v660, 1.1111112
        %v2630 = vmul.f32 %v661, 1.1111112
        %v2631 = vmul.f32 %v662, 1.1111112
        %v2632 = vmul.f32 %v663, 1.1111112
        %v2633 = vmul.f32 %v664, 1.1111112
        %v2634 = vmul.f32 %v665, 1.1111112
        %v2635 = vmul.f32 %v666, 1.1111112
        %v2636 = vmul.f32 %v667, 1.1111112
        %v2637 = vmul.f32 %v668, 1.1111112
        %v2638 = vmul.f32 %v669, 1.1111112
        %v2639 = vmul.f32 %v670, 1.1111112
        %v2640 = vmul.f32 %v671, 1.1111112
        %v2641 = vmul.f32 %v672, 1.1111112
        %v2642 = vmul.f32 %v673, 1.1111112
        %v2643 = vmul.f32 %v674, 1.1111112
        %v2644 = vmul.f32 %v675, 1.1111112
        %v2645 = vmul.f32 %v676, 1.1111112
        %v2646 = vmul.f32 %v677, 1.1111112
        %v2647 = vmul.f32 %v678, 1.1111112
        %v2648 = vmul.f32 %v679, 1.1111112
        %v2649 = vmul.f32 %v680, 1.1111112
        %v2650 = vmul.f32 %v681, 1.1111112
        %v2651 = vmul.f32 %v682, 1.1111112
        %v2652 = vmul.f32 %v683, 1.1111112
        %v2653 = vmul.f32 %v684, 1.1111112
        %v2654 = vmul.f32 %v685, 1.1111112
        %v2655 = vmul.f32 %v686, 1.1111112
        %v2656 = vmul.f32 %v687, 1.1111112
        %v2657 = vmul.f32 %v688, 1.1111112
        %v2658 = vmul.f32 %v689, 1.1111112
        %v2659 = vmul.f32 %v690, 1.1111112
        %v2660 = vmul.f32 %v691, 1.1111112
        %v2661 = vmul.f32 %v692, 1.1111112
        %v2662 = vmul.f32 %v693, 1.1111112
        %v2663 = vsel %vm2279, %v2471, 0.0
        %v2664 = vsel %vm2280, %v2472, 0.0
        %v2665 = vsel %vm2281, %v2473, 0.0
        %v2666 = vsel %vm2282, %v2474, 0.0
        %v2667 = vsel %vm2283, %v2475, 0.0
        %v2668 = vsel %vm2284, %v2476, 0.0
        %v2669 = vsel %vm2285, %v2477, 0.0
        %v2670 = vsel %vm2286, %v2478, 0.0
        %v2671 = vsel %vm2287, %v2479, 0.0
        %v2672 = vsel %vm2288, %v2480, 0.0
        %v2673 = vsel %vm2289, %v2481, 0.0
        %v2674 = vsel %vm2290, %v2482, 0.0
        %v2675 = vsel %vm2291, %v2483, 0.0
        %v2676 = vsel %vm2292, %v2484, 0.0
        %v2677 = vsel %vm2293, %v2485, 0.0
        %v2678 = vsel %vm2294, %v2486, 0.0
        %v2679 = vsel %vm2295, %v2487, 0.0
        %v2680 = vsel %vm2296, %v2488, 0.0
        %v2681 = vsel %vm2297, %v2489, 0.0
        %v2682 = vsel %vm2298, %v2490, 0.0
        %v2683 = vsel %vm2299, %v2491, 0.0
        %v2684 = vsel %vm2300, %v2492, 0.0
        %v2685 = vsel %vm2301, %v2493, 0.0
        %v2686 = vsel %vm2302, %v2494, 0.0
        %v2687 = vsel %vm2303, %v2495, 0.0
        %v2688 = vsel %vm2304, %v2496, 0.0
        %v2689 = vsel %vm2305, %v2497, 0.0
        %v2690 = vsel %vm2306, %v2498, 0.0
        %v2691 = vsel %vm2307, %v2499, 0.0
        %v2692 = vsel %vm2308, %v2500, 0.0
        %v2693 = vsel %vm2309, %v2501, 0.0
        %v2694 = vsel %vm2310, %v2502, 0.0
        %v2695 = vsel %vm2311, %v2503, 0.0
        %v2696 = vsel %vm2312, %v2504, 0.0
        %v2697 = vsel %vm2313, %v2505, 0.0
        %v2698 = vsel %vm2314, %v2506, 0.0
        %v2699 = vsel %vm2315, %v2507, 0.0
        %v2700 = vsel %vm2316, %v2508, 0.0
        %v2701 = vsel %vm2317, %v2509, 0.0
        %v2702 = vsel %vm2318, %v2510, 0.0
        %v2703 = vsel %vm2319, %v2511, 0.0
        %v2704 = vsel %vm2320, %v2512, 0.0
        %v2705 = vsel %vm2321, %v2513, 0.0
        %v2706 = vsel %vm2322, %v2514, 0.0
        %v2707 = vsel %vm2323, %v2515, 0.0
        %v2708 = vsel %vm2324, %v2516, 0.0
        %v2709 = vsel %vm2325, %v2517, 0.0
        %v2710 = vsel %vm2326, %v2518, 0.0
        %v2711 = vsel %vm2327, %v2519, 0.0
        %v2712 = vsel %vm2328, %v2520, 0.0
        %v2713 = vsel %vm2329, %v2521, 0.0
        %v2714 = vsel %vm2330, %v2522, 0.0
        %v2715 = vsel %vm2331, %v2523, 0.0
        %v2716 = vsel %vm2332, %v2524, 0.0
        %v2717 = vsel %vm2333, %v2525, 0.0
        %v2718 = vsel %vm2334, %v2526, 0.0
        %v2719 = vsel %vm2335, %v2527, 0.0
        %v2720 = vsel %vm2336, %v2528, 0.0
        %v2721 = vsel %vm2337, %v2529, 0.0
        %v2722 = vsel %vm2338, %v2530, 0.0
        %v2723 = vsel %vm2339, %v2531, 0.0
        %v2724 = vsel %vm2340, %v2532, 0.0
        %v2725 = vsel %vm2341, %v2533, 0.0
        %v2726 = vsel %vm2342, %v2534, 0.0
        %v2727 = vsel %vm2343, %v2535, 0.0
        %v2728 = vsel %vm2344, %v2536, 0.0
        %v2729 = vsel %vm2345, %v2537, 0.0
        %v2730 = vsel %vm2346, %v2538, 0.0
        %v2731 = vsel %vm2347, %v2539, 0.0
        %v2732 = vsel %vm2348, %v2540, 0.0
        %v2733 = vsel %vm2349, %v2541, 0.0
        %v2734 = vsel %vm2350, %v2542, 0.0
        %v2735 = vsel %vm2351, %v2543, 0.0
        %v2736 = vsel %vm2352, %v2544, 0.0
        %v2737 = vsel %vm2353, %v2545, 0.0
        %v2738 = vsel %vm2354, %v2546, 0.0
        %v2739 = vsel %vm2355, %v2547, 0.0
        %v2740 = vsel %vm2356, %v2548, 0.0
        %v2741 = vsel %vm2357, %v2549, 0.0
        %v2742 = vsel %vm2358, %v2550, 0.0
        %v2743 = vsel %vm2359, %v2551, 0.0
        %v2744 = vsel %vm2360, %v2552, 0.0
        %v2745 = vsel %vm2361, %v2553, 0.0
        %v2746 = vsel %vm2362, %v2554, 0.0
        %v2747 = vsel %vm2363, %v2555, 0.0
        %v2748 = vsel %vm2364, %v2556, 0.0
        %v2749 = vsel %vm2365, %v2557, 0.0
        %v2750 = vsel %vm2366, %v2558, 0.0
        %v2751 = vsel %vm2367, %v2559, 0.0
        %v2752 = vsel %vm2368, %v2560, 0.0
        %v2753 = vsel %vm2369, %v2561, 0.0
        %v2754 = vsel %vm2370, %v2562, 0.0
        %v2755 = vsel %vm2371, %v2563, 0.0
        %v2756 = vsel %vm2372, %v2564, 0.0
        %v2757 = vsel %vm2373, %v2565, 0.0
        %v2758 = vsel %vm2374, %v2566, 0.0
        %v2759 = vsel %vm2375, %v2567, 0.0
        %v2760 = vsel %vm2376, %v2568, 0.0
        %v2761 = vsel %vm2377, %v2569, 0.0
        %v2762 = vsel %vm2378, %v2570, 0.0
        %v2763 = vsel %vm2379, %v2571, 0.0
        %v2764 = vsel %vm2380, %v2572, 0.0
        %v2765 = vsel %vm2381, %v2573, 0.0
        %v2766 = vsel %vm2382, %v2574, 0.0
        %v2767 = vsel %vm2383, %v2575, 0.0
        %v2768 = vsel %vm2384, %v2576, 0.0
        %v2769 = vsel %vm2385, %v2577, 0.0
        %v2770 = vsel %vm2386, %v2578, 0.0
        %v2771 = vsel %vm2387, %v2579, 0.0
        %v2772 = vsel %vm2388, %v2580, 0.0
        %v2773 = vsel %vm2389, %v2581, 0.0
        %v2774 = vsel %vm2390, %v2582, 0.0
        %v2775 = vsel %vm2391, %v2583, 0.0
        %v2776 = vsel %vm2392, %v2584, 0.0
        %v2777 = vsel %vm2393, %v2585, 0.0
        %v2778 = vsel %vm2394, %v2586, 0.0
        %v2779 = vsel %vm2395, %v2587, 0.0
        %v2780 = vsel %vm2396, %v2588, 0.0
        %v2781 = vsel %vm2397, %v2589, 0.0
        %v2782 = vsel %vm2398, %v2590, 0.0
        %v2783 = vsel %vm2399, %v2591, 0.0
        %v2784 = vsel %vm2400, %v2592, 0.0
        %v2785 = vsel %vm2401, %v2593, 0.0
        %v2786 = vsel %vm2402, %v2594, 0.0
        %v2787 = vsel %vm2403, %v2595, 0.0
        %v2788 = vsel %vm2404, %v2596, 0.0
        %v2789 = vsel %vm2405, %v2597, 0.0
        %v2790 = vsel %vm2406, %v2598, 0.0
        %v2791 = vsel %vm2407, %v2599, 0.0
        %v2792 = vsel %vm2408, %v2600, 0.0
        %v2793 = vsel %vm2409, %v2601, 0.0
        %v2794 = vsel %vm2410, %v2602, 0.0
        %v2795 = vsel %vm2411, %v2603, 0.0
        %v2796 = vsel %vm2412, %v2604, 0.0
        %v2797 = vsel %vm2413, %v2605, 0.0
        %v2798 = vsel %vm2414, %v2606, 0.0
        %v2799 = vsel %vm2415, %v2607, 0.0
        %v2800 = vsel %vm2416, %v2608, 0.0
        %v2801 = vsel %vm2417, %v2609, 0.0
        %v2802 = vsel %vm2418, %v2610, 0.0
        %v2803 = vsel %vm2419, %v2611, 0.0
        %v2804 = vsel %vm2420, %v2612, 0.0
        %v2805 = vsel %vm2421, %v2613, 0.0
        %v2806 = vsel %vm2422, %v2614, 0.0
        %v2807 = vsel %vm2423, %v2615, 0.0
        %v2808 = vsel %vm2424, %v2616, 0.0
        %v2809 = vsel %vm2425, %v2617, 0.0
        %v2810 = vsel %vm2426, %v2618, 0.0
        %v2811 = vsel %vm2427, %v2619, 0.0
        %v2812 = vsel %vm2428, %v2620, 0.0
        %v2813 = vsel %vm2429, %v2621, 0.0
        %v2814 = vsel %vm2430, %v2622, 0.0
        %v2815 = vsel %vm2431, %v2623, 0.0
        %v2816 = vsel %vm2432, %v2624, 0.0
        %v2817 = vsel %vm2433, %v2625, 0.0
        %v2818 = vsel %vm2434, %v2626, 0.0
        %v2819 = vsel %vm2435, %v2627, 0.0
        %v2820 = vsel %vm2436, %v2628, 0.0
        %v2821 = vsel %vm2437, %v2629, 0.0
        %v2822 = vsel %vm2438, %v2630, 0.0
        %v2823 = vsel %vm2439, %v2631, 0.0
        %v2824 = vsel %vm2440, %v2632, 0.0
        %v2825 = vsel %vm2441, %v2633, 0.0
        %v2826 = vsel %vm2442, %v2634, 0.0
        %v2827 = vsel %vm2443, %v2635, 0.0
        %v2828 = vsel %vm2444, %v2636, 0.0
        %v2829 = vsel %vm2445, %v2637, 0.0
        %v2830 = vsel %vm2446, %v2638, 0.0
        %v2831 = vsel %vm2447, %v2639, 0.0
        %v2832 = vsel %vm2448, %v2640, 0.0
        %v2833 = vsel %vm2449, %v2641, 0.0
        %v2834 = vsel %vm2450, %v2642, 0.0
        %v2835 = vsel %vm2451, %v2643, 0.0
        %v2836 = vsel %vm2452, %v2644, 0.0
        %v2837 = vsel %vm2453, %v2645, 0.0
        %v2838 = vsel %vm2454, %v2646, 0.0
        %v2839 = vsel %vm2455, %v2647, 0.0
        %v2840 = vsel %vm2456, %v2648, 0.0
        %v2841 = vsel %vm2457, %v2649, 0.0
        %v2842 = vsel %vm2458, %v2650, 0.0
        %v2843 = vsel %vm2459, %v2651, 0.0
        %v2844 = vsel %vm2460, %v2652, 0.0
        %v2845 = vsel %vm2461, %v2653, 0.0
        %v2846 = vsel %vm2462, %v2654, 0.0
        %v2847 = vsel %vm2463, %v2655, 0.0
        %v2848 = vsel %vm2464, %v2656, 0.0
        %v2849 = vsel %vm2465, %v2657, 0.0
        %v2850 = vsel %vm2466, %v2658, 0.0
        %v2851 = vsel %vm2467, %v2659, 0.0
        %v2852 = vsel %vm2468, %v2660, 0.0
        %v2853 = vsel %vm2469, %v2661, 0.0
        %v2854 = vsel %vm2470, %v2662, 0.0
        %2855 = vst [vmem:[%s220] sm:$0xff] %v2663
        %2856 = vst [vmem:[%s220 + $0x8] sm:$0xff] %v2664
        %2857 = vst [vmem:[%s220 + $0x10] sm:$0xff] %v2665
        %2858 = vst [vmem:[%s220 + $0x18] sm:$0xff] %v2666
        %2859 = vst [vmem:[%s220 + $0x20] sm:$0xff] %v2667
        %2860 = vst [vmem:[%s220 + $0x28] sm:$0xff] %v2668
        %2861 = vst [vmem:[%s220 + $0x30] sm:$0xff] %v2669
        %2862 = vst [vmem:[%s220 + $0x38] sm:$0xff] %v2670
        %2863 = vst [vmem:[%s220 + $0x40] sm:$0xff] %v2671
        %2864 = vst [vmem:[%s220 + $0x48] sm:$0xff] %v2672
        %2865 = vst [vmem:[%s220 + $0x50] sm:$0xff] %v2673
        %2866 = vst [vmem:[%s220 + $0x58] sm:$0xff] %v2674
        %2867 = vst [vmem:[%s220 + $0x60] sm:$0xff] %v2675
        %2868 = vst [vmem:[%s220 + $0x68] sm:$0xff] %v2676
        %2869 = vst [vmem:[%s220 + $0x70] sm:$0xff] %v2677
        %2870 = vst [vmem:[%s220 + $0x78] sm:$0xff] %v2678
        %2871 = vst [vmem:[%s220 + $0x80] sm:$0xff] %v2679
        %2872 = vst [vmem:[%s220 + $0x88] sm:$0xff] %v2680
        %2873 = vst [vmem:[%s220 + $0x90] sm:$0xff] %v2681
        %2874 = vst [vmem:[%s220 + $0x98] sm:$0xff] %v2682
        %2875 = vst [vmem:[%s220 + $0xa0] sm:$0xff] %v2683
        %2876 = vst [vmem:[%s220 + $0xa8] sm:$0xff] %v2684
        %2877 = vst [vmem:[%s220 + $0xb0] sm:$0xff] %v2685
        %2878 = vst [vmem:[%s220 + $0xb8] sm:$0xff] %v2686
        %2879 = vst [vmem:[%s220 + $0xc0] sm:$0xff] %v2687
        %2880 = vst [vmem:[%s220 + $0xc8] sm:$0xff] %v2688
        %2881 = vst [vmem:[%s220 + $0xd0] sm:$0xff] %v2689
        %2882 = vst [vmem:[%s220 + $0xd8] sm:$0xff] %v2690
        %2883 = vst [vmem:[%s220 + $0xe0] sm:$0xff] %v2691
        %2884 = vst [vmem:[%s220 + $0xe8] sm:$0xff] %v2692
        %2885 = vst [vmem:[%s220 + $0xf0] sm:$0xff] %v2693
        %2886 = vst [vmem:[%s220 + $0xf8] sm:$0xff] %v2694
        %2887 = vst [vmem:[%s220 + $0x100] sm:$0xff] %v2695
        %2888 = vst [vmem:[%s220 + $0x108] sm:$0xff] %v2696
        %2889 = vst [vmem:[%s220 + $0x110] sm:$0xff] %v2697
        %2890 = vst [vmem:[%s220 + $0x118] sm:$0xff] %v2698
        %2891 = vst [vmem:[%s220 + $0x120] sm:$0xff] %v2699
        %2892 = vst [vmem:[%s220 + $0x128] sm:$0xff] %v2700
        %2893 = vst [vmem:[%s220 + $0x130] sm:$0xff] %v2701
        %2894 = vst [vmem:[%s220 + $0x138] sm:$0xff] %v2702
        %2895 = vst [vmem:[%s220 + $0x140] sm:$0xff] %v2703
        %2896 = vst [vmem:[%s220 + $0x148] sm:$0xff] %v2704
        %2897 = vst [vmem:[%s220 + $0x150] sm:$0xff] %v2705
        %2898 = vst [vmem:[%s220 + $0x158] sm:$0xff] %v2706
        %2899 = vst [vmem:[%s220 + $0x160] sm:$0xff] %v2707
        %2900 = vst [vmem:[%s220 + $0x168] sm:$0xff] %v2708
        %2901 = vst [vmem:[%s220 + $0x170] sm:$0xff] %v2709
        %2902 = vst [vmem:[%s220 + $0x178] sm:$0xff] %v2710
        %2903 = vst [vmem:[%s220 + $0x180] sm:$0xff] %v2711
        %2904 = vst [vmem:[%s220 + $0x188] sm:$0xff] %v2712
        %2905 = vst [vmem:[%s220 + $0x190] sm:$0xff] %v2713
        %2906 = vst [vmem:[%s220 + $0x198] sm:$0xff] %v2714
        %2907 = vst [vmem:[%s220 + $0x1a0] sm:$0xff] %v2715
        %2908 = vst [vmem:[%s220 + $0x1a8] sm:$0xff] %v2716
        %2909 = vst [vmem:[%s220 + $0x1b0] sm:$0xff] %v2717
        %2910 = vst [vmem:[%s220 + $0x1b8] sm:$0xff] %v2718
        %2911 = vst [vmem:[%s220 + $0x1c0] sm:$0xff] %v2719
        %2912 = vst [vmem:[%s220 + $0x1c8] sm:$0xff] %v2720
        %2913 = vst [vmem:[%s220 + $0x1d0] sm:$0xff] %v2721
        %2914 = vst [vmem:[%s220 + $0x1d8] sm:$0xff] %v2722
        %2915 = vst [vmem:[%s220 + $0x1e0] sm:$0xff] %v2723
        %2916 = vst [vmem:[%s220 + $0x1e8] sm:$0xff] %v2724
        %2917 = vst [vmem:[%s220 + $0x1f0] sm:$0xff] %v2725
        %2918 = vst [vmem:[%s220 + $0x1f8] sm:$0xff] %v2726
        %2919 = vst [vmem:[%s220 + $0x200] sm:$0xff] %v2727
        %2920 = vst [vmem:[%s220 + $0x208] sm:$0xff] %v2728
        %2921 = vst [vmem:[%s220 + $0x210] sm:$0xff] %v2729
        %2922 = vst [vmem:[%s220 + $0x218] sm:$0xff] %v2730
        %2923 = vst [vmem:[%s220 + $0x220] sm:$0xff] %v2731
        %2924 = vst [vmem:[%s220 + $0x228] sm:$0xff] %v2732
        %2925 = vst [vmem:[%s220 + $0x230] sm:$0xff] %v2733
        %2926 = vst [vmem:[%s220 + $0x238] sm:$0xff] %v2734
        %2927 = vst [vmem:[%s220 + $0x240] sm:$0xff] %v2735
        %2928 = vst [vmem:[%s220 + $0x248] sm:$0xff] %v2736
        %2929 = vst [vmem:[%s220 + $0x250] sm:$0xff] %v2737
        %2930 = vst [vmem:[%s220 + $0x258] sm:$0xff] %v2738
        %2931 = vst [vmem:[%s220 + $0x260] sm:$0xff] %v2739
        %2932 = vst [vmem:[%s220 + $0x268] sm:$0xff] %v2740
        %2933 = vst [vmem:[%s220 + $0x270] sm:$0xff] %v2741
        %2934 = vst [vmem:[%s220 + $0x278] sm:$0xff] %v2742
        %2935 = vst [vmem:[%s220 + $0x280] sm:$0xff] %v2743
        %2936 = vst [vmem:[%s220 + $0x288] sm:$0xff] %v2744
        %2937 = vst [vmem:[%s220 + $0x290] sm:$0xff] %v2745
        %2938 = vst [vmem:[%s220 + $0x298] sm:$0xff] %v2746
        %2939 = vst [vmem:[%s220 + $0x2a0] sm:$0xff] %v2747
        %2940 = vst [vmem:[%s220 + $0x2a8] sm:$0xff] %v2748
        %2941 = vst [vmem:[%s220 + $0x2b0] sm:$0xff] %v2749
        %2942 = vst [vmem:[%s220 + $0x2b8] sm:$0xff] %v2750
        %2943 = vst [vmem:[%s220 + $0x2c0] sm:$0xff] %v2751
        %2944 = vst [vmem:[%s220 + $0x2c8] sm:$0xff] %v2752
        %2945 = vst [vmem:[%s220 + $0x2d0] sm:$0xff] %v2753
        %2946 = vst [vmem:[%s220 + $0x2d8] sm:$0xff] %v2754
        %2947 = vst [vmem:[%s220 + $0x2e0] sm:$0xff] %v2755
        %2948 = vst [vmem:[%s220 + $0x2e8] sm:$0xff] %v2756
        %2949 = vst [vmem:[%s220 + $0x2f0] sm:$0xff] %v2757
        %2950 = vst [vmem:[%s220 + $0x2f8] sm:$0xff] %v2758
        %2951 = vst [vmem:[%s220 + $0x300] sm:$0xff] %v2759
        %2952 = vst [vmem:[%s220 + $0x308] sm:$0xff] %v2760
        %2953 = vst [vmem:[%s220 + $0x310] sm:$0xff] %v2761
        %2954 = vst [vmem:[%s220 + $0x318] sm:$0xff] %v2762
        %2955 = vst [vmem:[%s220 + $0x320] sm:$0xff] %v2763
        %2956 = vst [vmem:[%s220 + $0x328] sm:$0xff] %v2764
        %2957 = vst [vmem:[%s220 + $0x330] sm:$0xff] %v2765
        %2958 = vst [vmem:[%s220 + $0x338] sm:$0xff] %v2766
        %2959 = vst [vmem:[%s220 + $0x340] sm:$0xff] %v2767
        %2960 = vst [vmem:[%s220 + $0x348] sm:$0xff] %v2768
        %2961 = vst [vmem:[%s220 + $0x350] sm:$0xff] %v2769
        %2962 = vst [vmem:[%s220 + $0x358] sm:$0xff] %v2770
        %2963 = vst [vmem:[%s220 + $0x360] sm:$0xff] %v2771
        %2964 = vst [vmem:[%s220 + $0x368] sm:$0xff] %v2772
        %2965 = vst [vmem:[%s220 + $0x370] sm:$0xff] %v2773
        %2966 = vst [vmem:[%s220 + $0x378] sm:$0xff] %v2774
        %2967 = vst [vmem:[%s220 + $0x380] sm:$0xff] %v2775
        %2968 = vst [vmem:[%s220 + $0x388] sm:$0xff] %v2776
        %2969 = vst [vmem:[%s220 + $0x390] sm:$0xff] %v2777
        %2970 = vst [vmem:[%s220 + $0x398] sm:$0xff] %v2778
        %2971 = vst [vmem:[%s220 + $0x3a0] sm:$0xff] %v2779
        %2972 = vst [vmem:[%s220 + $0x3a8] sm:$0xff] %v2780
        %2973 = vst [vmem:[%s220 + $0x3b0] sm:$0xff] %v2781
        %2974 = vst [vmem:[%s220 + $0x3b8] sm:$0xff] %v2782
        %2975 = vst [vmem:[%s220 + $0x3c0] sm:$0xff] %v2783
        %2976 = vst [vmem:[%s220 + $0x3c8] sm:$0xff] %v2784
        %2977 = vst [vmem:[%s220 + $0x3d0] sm:$0xff] %v2785
        %2978 = vst [vmem:[%s220 + $0x3d8] sm:$0xff] %v2786
        %2979 = vst [vmem:[%s220 + $0x3e0] sm:$0xff] %v2787
        %2980 = vst [vmem:[%s220 + $0x3e8] sm:$0xff] %v2788
        %2981 = vst [vmem:[%s220 + $0x3f0] sm:$0xff] %v2789
        %2982 = vst [vmem:[%s220 + $0x3f8] sm:$0xff] %v2790
        %2983 = vst [vmem:[%s220 + $0x400] sm:$0xff] %v2791
        %2984 = vst [vmem:[%s220 + $0x408] sm:$0xff] %v2792
        %2985 = vst [vmem:[%s220 + $0x410] sm:$0xff] %v2793
        %2986 = vst [vmem:[%s220 + $0x418] sm:$0xff] %v2794
        %2987 = vst [vmem:[%s220 + $0x420] sm:$0xff] %v2795
        %2988 = vst [vmem:[%s220 + $0x428] sm:$0xff] %v2796
        %2989 = vst [vmem:[%s220 + $0x430] sm:$0xff] %v2797
        %2990 = vst [vmem:[%s220 + $0x438] sm:$0xff] %v2798
        %2991 = vst [vmem:[%s220 + $0x440] sm:$0xff] %v2799
        %2992 = vst [vmem:[%s220 + $0x448] sm:$0xff] %v2800
        %2993 = vst [vmem:[%s220 + $0x450] sm:$0xff] %v2801
        %2994 = vst [vmem:[%s220 + $0x458] sm:$0xff] %v2802
        %2995 = vst [vmem:[%s220 + $0x460] sm:$0xff] %v2803
        %2996 = vst [vmem:[%s220 + $0x468] sm:$0xff] %v2804
        %2997 = vst [vmem:[%s220 + $0x470] sm:$0xff] %v2805
        %2998 = vst [vmem:[%s220 + $0x478] sm:$0xff] %v2806
        %2999 = vst [vmem:[%s220 + $0x480] sm:$0xff] %v2807
        %3000 = vst [vmem:[%s220 + $0x488] sm:$0xff] %v2808
        %3001 = vst [vmem:[%s220 + $0x490] sm:$0xff] %v2809
        %3002 = vst [vmem:[%s220 + $0x498] sm:$0xff] %v2810
        %3003 = vst [vmem:[%s220 + $0x4a0] sm:$0xff] %v2811
        %3004 = vst [vmem:[%s220 + $0x4a8] sm:$0xff] %v2812
        %3005 = vst [vmem:[%s220 + $0x4b0] sm:$0xff] %v2813
        %3006 = vst [vmem:[%s220 + $0x4b8] sm:$0xff] %v2814
        %3007 = vst [vmem:[%s220 + $0x4c0] sm:$0xff] %v2815
        %3008 = vst [vmem:[%s220 + $0x4c8] sm:$0xff] %v2816
        %3009 = vst [vmem:[%s220 + $0x4d0] sm:$0xff] %v2817
        %3010 = vst [vmem:[%s220 + $0x4d8] sm:$0xff] %v2818
        %3011 = vst [vmem:[%s220 + $0x4e0] sm:$0xff] %v2819
        %3012 = vst [vmem:[%s220 + $0x4e8] sm:$0xff] %v2820
        %3013 = vst [vmem:[%s220 + $0x4f0] sm:$0xff] %v2821
        %3014 = vst [vmem:[%s220 + $0x4f8] sm:$0xff] %v2822
        %3015 = vst [vmem:[%s220 + $0x500] sm:$0xff] %v2823
        %3016 = vst [vmem:[%s220 + $0x508] sm:$0xff] %v2824
        %3017 = vst [vmem:[%s220 + $0x510] sm:$0xff] %v2825
        %3018 = vst [vmem:[%s220 + $0x518] sm:$0xff] %v2826
        %3019 = vst [vmem:[%s220 + $0x520] sm:$0xff] %v2827
        %3020 = vst [vmem:[%s220 + $0x528] sm:$0xff] %v2828
        %3021 = vst [vmem:[%s220 + $0x530] sm:$0xff] %v2829
        %3022 = vst [vmem:[%s220 + $0x538] sm:$0xff] %v2830
        %3023 = vst [vmem:[%s220 + $0x540] sm:$0xff] %v2831
        %3024 = vst [vmem:[%s220 + $0x548] sm:$0xff] %v2832
        %3025 = vst [vmem:[%s220 + $0x550] sm:$0xff] %v2833
        %3026 = vst [vmem:[%s220 + $0x558] sm:$0xff] %v2834
        %3027 = vst [vmem:[%s220 + $0x560] sm:$0xff] %v2835
        %3028 = vst [vmem:[%s220 + $0x568] sm:$0xff] %v2836
        %3029 = vst [vmem:[%s220 + $0x570] sm:$0xff] %v2837
        %3030 = vst [vmem:[%s220 + $0x578] sm:$0xff] %v2838
        %3031 = vst [vmem:[%s220 + $0x580] sm:$0xff] %v2839
        %3032 = vst [vmem:[%s220 + $0x588] sm:$0xff] %v2840
        %3033 = vst [vmem:[%s220 + $0x590] sm:$0xff] %v2841
        %3034 = vst [vmem:[%s220 + $0x598] sm:$0xff] %v2842
        %3035 = vst [vmem:[%s220 + $0x5a0] sm:$0xff] %v2843
        %3036 = vst [vmem:[%s220 + $0x5a8] sm:$0xff] %v2844
        %3037 = vst [vmem:[%s220 + $0x5b0] sm:$0xff] %v2845
        %3038 = vst [vmem:[%s220 + $0x5b8] sm:$0xff] %v2846
        %3039 = vst [vmem:[%s220 + $0x5c0] sm:$0xff] %v2847
        %3040 = vst [vmem:[%s220 + $0x5c8] sm:$0xff] %v2848
        %3041 = vst [vmem:[%s220 + $0x5d0] sm:$0xff] %v2849
        %3042 = vst [vmem:[%s220 + $0x5d8] sm:$0xff] %v2850
        %3043 = vst [vmem:[%s220 + $0x5e0] sm:$0xff] %v2851
        %3044 = vst [vmem:[%s220 + $0x5e8] sm:$0xff] %v2852
        %3045 = vst [vmem:[%s220 + $0x5f0] sm:$0xff] %v2853
        %3046 = vst [vmem:[%s220 + $0x5f8] sm:$0xff] %v2854
        %s3047 = sand.u32 %s100, 1
        %s3048 = scalar_lea.sflag [#allocation6], %s3047
        %s3049 = sand.u32 %s100, 1
        %s3050 = smul.addr %s3049, 1536
        %s3051 = scalar_lea.vmem [#allocation9], %s3050
        // Predicated region
        $region37: #{tpu_custom_call.1} parent=27 // pred_check
          %p3052 = pneg %p110
        $region38: #{tpu_custom_call.1} parent=27 // pred_check_branch
          %3054 = sbr.rel (%p3052) target = $region40
        $region39: #{tpu_custom_call.1} parent=27 // pred_region
          %s3055 = smul.u32 12, %s28
          %s3056 = smul.u32 16, %s29
          %s3058 = ssub.s32 24576, 24576
          %3059 = vsyncadd %s3048, %s3058
          %s3060 = smul.addr %s3055, 32
          %s3061 = sadd.s32 %s3056, %s3060
          %s3062 = smul.addr %s3061, 128
          %s3063 = scalar_lea.hbm %s3, %s3062
          %s3064 = sshll.u32 %s3051, 4
          %s3065 = int_to_ptr.vmem [resolvable:$true] %s3064
          %3070 = dma.vmem_to_hbm [thread:$0]  %s3065, 24576, %s3063, %s3048, 2048, 4096, 128
        $region40: #{tpu_custom_call.1} parent=27 // pred_fallthru
          _
      $region28: #{tpu_custom_call.1} parent=5 // pred_fallthru
        _
      %p3071 = scmp.le.s32.totalorder 2, %s19
      // Predicated region
      $region41: #{tpu_custom_call.1} parent=5 // pred_check
        %p3072 = pneg %p3071
      $region42: #{tpu_custom_call.1} parent=5 // pred_check_branch
        %3074 = sbr.rel (%p3072) target = $region44
      $region43: #{tpu_custom_call.1} parent=5 // pred_region
        %s3075 = ssub.s32 %s19, 2
        // Predicated region
        $region45: #{tpu_custom_call.1} parent=43 // pred_check
          %p3076 = pneg %p116
        $region46: #{tpu_custom_call.1} parent=43 // pred_check_branch
          %3078 = sbr.rel (%p3076) target = $region48
        $region47: #{tpu_custom_call.1} parent=43 // pred_region
          %s3079 = sand.u32 %s101, 1
          %s3080 = scalar_lea.sflag [#allocation6], %s3079
          %s3081 = sand.u32 %s101, 1
          %s3082 = smul.addr %s3081, 1536
          %s3083 = scalar_lea.vmem [#allocation9], %s3082
          %3084 = dma.done %s3080, 24576
        $region48: #{tpu_custom_call.1} parent=43 // pred_fallthru
          _
      $region44: #{tpu_custom_call.1} parent=5 // pred_fallthru
        _
    $region6: #{tpu_custom_call.1} parent=1 // loop_footer
      %s23 = sadd.s32 1, %s19
    $region7: #{tpu_custom_call.1} parent=1 // loop_footer_branch
      %18 = sbr.rel target = $region3
    $region8: #{tpu_custom_call.1} parent=1 // loop_exit
      _
    %3085 = vsyncpa [#allocation5], 1
    %s3086 = scalar_lea.sflag [#allocation5], 1
    %3087 = vsyncpa %s3086, 1
    %3088 = vsyncpa [#allocation8], 1
    %s3089 = scalar_lea.sflag [#allocation8], 1
    %3090 = vsyncpa %s3089, 1
    %3091 = vsyncpa [#allocation6], 1
    %s3092 = scalar_lea.sflag [#allocation6], 1
    %3093 = vsyncpa %s3092, 1

</llo_original>
